<compile_context>
chip_gen: v7x
topology: tpu7x:2x2x1
jax: 0.10.0
libtpu: 0.0.40
codegen_flags: <defaults>
</compile_context>

<pallas_src>
import functools

import jax
import jax.numpy as jnp
from jax import lax
from jax.experimental import pallas as pl
from jax.experimental.pallas import tpu as pltpu


def _pblstm_kernel(
    x_f_ref, x_b_ref,                     # [bb, chunk, 2F]  (fwd-time / bwd-time block)
    wx_f_ref, wh_f_ref, b_f_ref,          # [2F, 4H], [H, 4H], [1, 4H]
    wx_b_ref, wh_b_ref, b_b_ref,
    out_f_ref, out_b_ref,                 # [bb, chunk, H]
    cn_f_ref, cn_b_ref,                   # [bb, H] final cell states
    h_f, c_f, h_b, c_b,                   # f32 VMEM scratch carries, [bb, H]
    *, hidden_dim, time_chunk):
    H = hidden_dim
    C = time_chunk
    bb = h_f.shape[0]
    twoF = x_f_ref.shape[-1]

    @pl.when(pl.program_id(1) == 0)
    def _init_carries():
        h_f[...] = jnp.zeros_like(h_f)
        c_f[...] = jnp.zeros_like(c_f)
        h_b[...] = jnp.zeros_like(h_b)
        c_b[...] = jnp.zeros_like(c_b)

    # ---- Hoisted input projection: one fat matmul per direction per grid
    # step, bias folded in, f32 accumulation on the MXU.  Operands stay in the
    # wrapper-chosen compute dtype (bf16) — no in-kernel upcast copies. -------
    def input_proj(x_ref, wx_ref, b_ref):
        x2d = x_ref[...].reshape(bb * C, twoF)            # layout-preserving when C%8==0
        xg = jnp.dot(x2d, wx_ref[...], preferred_element_type=jnp.float32)
        xg = xg + b_ref[...].astype(jnp.float32)          # bias added once per chunk
        return xg.reshape(bb, C, 4 * H)

    xg_f = input_proj(x_f_ref, wx_f_ref, b_f_ref)
    xg_b = input_proj(x_b_ref, wx_b_ref, b_b_ref)

    wh_f = wh_f_ref[...]
    wh_b = wh_b_ref[...]

    def sigmoid(v):
        # tanh identity: one EUP op per gate (instead of exp + reciprocal),
        # and no overflow for large-magnitude pre-activations.
        return 0.5 * jnp.tanh(0.5 * v) + 0.5

    def cell(xg_t, h_prev, c_prev, wh):
        # PyTorch gate order: i, f, g, o.  Only this small recurrent matmul is
        # on the serial critical path; h cast to the weight dtype (bf16), f32 acc.
        gates = xg_t + jnp.dot(h_prev.astype(wh.dtype), wh,
                               preferred_element_type=jnp.float32)
        i_g = sigmoid(gates[:, 0 * H:1 * H])
        f_g = sigmoid(gates[:, 1 * H:2 * H])
        g_g = jnp.tanh(gates[:, 2 * H:3 * H])
        o_g = sigmoid(gates[:, 3 * H:4 * H])
        c_new = f_g * c_prev + i_g * g_g
        h_new = o_g * jnp.tanh(c_new)
        return h_new, c_new

    # Fully unrolled chunk loop (C is small and static); both directions per step.
    for tt in range(C):
        # forward direction: local time tt (global time increases)
        h_new, c_new = cell(xg_f[:, tt, :], h_f[...], c_f[...], wh_f)
        h_f[...] = h_new
        c_f[...] = c_new
        out_f_ref[:, tt, :] = h_new.astype(out_f_ref.dtype)

        # backward direction: local time reversed (global time decreases)
        tb = C - 1 - tt
        h_nb, c_nb = cell(xg_b[:, tb, :], h_b[...], c_b[...], wh_b)
        h_b[...] = h_nb
        c_b[...] = c_nb
        out_b_ref[:, tb, :] = h_nb.astype(out_b_ref.dtype)

    # Final cell states: constant output block index along the time axis ->
    # VMEM-resident, written back to HBM after this batch block's last step.
    cn_f_ref[...] = c_f[...].astype(cn_f_ref.dtype)
    cn_b_ref[...] = c_b[...].astype(cn_b_ref.dtype)


def _pick_time_chunk(nt, max_chunk=16):
    """Largest time block <= max_chunk; prefers multiples of 8 so the in-kernel
    (bb, C, 2F) -> (bb*C, 2F) reshape stays layout-preserving."""
    if nt <= max_chunk:
        return nt
    for c in range(max_chunk - max_chunk % 8, 0, -8):   # multiple-of-8 divisors first
        if c > 0 and nt % c == 0:
            return c
    for c in range(max_chunk, 0, -1):
        if nt % c == 0:
            return c
    return 1


def _pick_batch_block(B, max_bb=128):
    """Rows per batch block.  Keeps bb % 8 == 0 (or bb == B) for aligned tiles
    and, when B allows, nb >= 2 so the 'parallel' axis can use both v7x TCs."""
    if B <= max_bb:
        if B >= 16 and B % 16 == 0:
            return B // 2            # nb == 2, still a multiple of 8
        return B
    for bb in range(max_bb, 7, -1):
        if B % bb == 0 and bb % 8 == 0:
            return bb
    return B


def pblstm_forward(x, params, hidden_dim, *, compute_dtype=jnp.bfloat16,
                   max_chunk=16, max_bb=128):
    """Pallas pBLSTM layer: returns (output [B, T//2, 2H], (h_n, c_n) each [2, B, H])."""
    B, T, F = x.shape
    assert T % 2 == 0, "pBLSTM requires an even number of timesteps"
    nt = T // 2
    twoF = 2 * F
    H = hidden_dim
    out_dtype = x.dtype

    # Pyramidal reshape (== torch .view) is a free view; stay batch-major
    # end-to-end (no wrapper transposes).  Cast once to the MXU compute dtype.
    x2 = x.reshape(B, nt, twoF).astype(compute_dtype)

    # Weights transposed to (in, 4H) so the kernel does x @ W; biases folded
    # (b_ih + b_hh) and kept in f32 (added to the f32 gate accumulator).
    wx_f = params["w_ih_fwd"].T.astype(compute_dtype)
    wh_f = params["w_hh_fwd"].T.astype(compute_dtype)
    b_f = (params["b_ih_fwd"] + params["b_hh_fwd"]).reshape(1, 4 * H).astype(jnp.float32)
    wx_b = params["w_ih_bwd"].T.astype(compute_dtype)
    wh_b = params["w_hh_bwd"].T.astype(compute_dtype)
    b_b = (params["b_ih_bwd"] + params["b_hh_bwd"]).reshape(1, 4 * H).astype(jnp.float32)

    chunk = _pick_time_chunk(nt, max_chunk)
    nblk = nt // chunk
    bb = _pick_batch_block(B, max_bb)
    nb = B // bb

    kernel = functools.partial(_pblstm_kernel, hidden_dim=H, time_chunk=chunk)

    # Weight/bias blocks never change across grid steps -> single-buffered.
    def wspec(shape):
        return pl.BlockSpec(shape, lambda b, t: (0, 0), pipeline_mode=pl.Buffered(1))

    out_shape = (
        jax.ShapeDtypeStruct((B, nt, H), out_dtype),   # forward hidden per step
        jax.ShapeDtypeStruct((B, nt, H), out_dtype),   # backward hidden per step
        jax.ShapeDtypeStruct((B, H), out_dtype),       # final c (forward)
        jax.ShapeDtypeStruct((B, H), out_dtype),       # final c (backward)
    )

    grid_spec = pltpu.PrefetchScalarGridSpec(
        num_scalar_prefetch=0,
        grid=(nb, nblk),
        in_specs=[
            pl.BlockSpec((bb, chunk, twoF), lambda b, t: (b, t, 0)),             # x, fwd order
            pl.BlockSpec((bb, chunk, twoF), lambda b, t: (b, nblk - 1 - t, 0)),  # x, bwd order
            wspec((twoF, 4 * H)),                                                # wx fwd
            wspec((H, 4 * H)),                                                   # wh fwd
            wspec((1, 4 * H)),                                                   # b  fwd
            wspec((twoF, 4 * H)),                                                # wx bwd
            wspec((H, 4 * H)),                                                   # wh bwd
            wspec((1, 4 * H)),                                                   # b  bwd
        ],
        out_specs=[
            pl.BlockSpec((bb, chunk, H), lambda b, t: (b, t, 0)),
            pl.BlockSpec((bb, chunk, H), lambda b, t: (b, nblk - 1 - t, 0)),
            pl.BlockSpec((bb, H), lambda b, t: (b, 0)),
            pl.BlockSpec((bb, H), lambda b, t: (b, 0)),
        ],
        scratch_shapes=[
            pltpu.VMEM((bb, H), jnp.float32),   # h forward
            pltpu.VMEM((bb, H), jnp.float32),   # c forward
            pltpu.VMEM((bb, H), jnp.float32),   # h backward
            pltpu.VMEM((bb, H), jnp.float32),   # c backward
        ],
    )

    # VMEM budget with the real dtypes / buffer counts, clamped well under
    # v7x's 64 MiB per-TC VMEM.
    cbytes = jnp.dtype(compute_dtype).itemsize
    obytes = jnp.dtype(out_dtype).itemsize
    wsize = twoF * 4 * H + H * 4 * H
    vmem_est = (
        2 * 2 * bb * chunk * twoF * cbytes        # x fwd+bwd blocks, double-buffered
        + 2 * 2 * bb * chunk * H * obytes         # out fwd+bwd blocks, double-buffered
        + 2 * 1 * wsize * cbytes                  # weights both dirs, single-buffered
        + 2 * 1 * 4 * H * 4                       # biases (f32), single-buffered
        + 2 * 2 * bb * H * obytes                 # final-c output blocks
        + 4 * bb * H * 4                          # f32 h/c carries
        + 2 * bb * chunk * 4 * H * 4              # hoisted xg_f/xg_b f32 temporaries
    )
    vmem_limit = int(min(max(2 * vmem_est, 16 * 2**20), 48 * 2**20))

    flops = 4 * nt * B * 4 * H * (twoF + H)                 # 2 dirs x 2 matmuls per step
    transcendentals = 2 * nt * B * 5 * H                    # 3 sigmoid + 2 tanh per cell
    bytes_accessed = (
        2 * nt * B * twoF * cbytes                          # x read by both directions
        + 2 * wsize * cbytes + 2 * 4 * H * 4                # weights + biases
        + 2 * nt * B * H * obytes + 2 * B * H * obytes      # outputs
    )

    out_f, out_b, cn_f, cn_b = pl.pallas_call(
        kernel,
        out_shape=out_shape,
        grid_spec=grid_spec,
        compiler_params=pltpu.CompilerParams(
            dimension_semantics=("parallel", "arbitrary"),
            vmem_limit_bytes=vmem_limit,
        ),
        cost_estimate=pl.CostEstimate(
            flops=flops,
            transcendentals=transcendentals,
            bytes_accessed=bytes_accessed,
        ),
    )(x2, x2, wx_f, wh_f, b_f, wx_b, wh_b, b_b)

    # Assemble PyTorch-style results (batch-major; only the fwd/bwd concat left).
    output = jnp.concatenate([out_f, out_b], axis=-1)              # [B, nt, 2H]
    h_n = jnp.stack([out_f[:, -1, :], out_b[:, 0, :]], axis=0)     # [2, B, H]
    c_n = jnp.stack([cn_f, cn_b], axis=0)                          # [2, B, H]
    return output, (h_n, c_n)


# ----------------------------- pure-JAX reference -----------------------------

def _lstm_scan_ref(x_tm, wx, wh, b, H, compute_dtype):
    Bsz = x_tm.shape[1]
    wx = wx.astype(compute_dtype)
    wh = wh.astype(compute_dtype)

    def step(carry, x_t):
        h, c = carry
        gates = (jnp.dot(x_t.astype(compute_dtype), wx,
                         preferred_element_type=jnp.float32)
                 + jnp.dot(h.astype(compute_dtype), wh,
                           preferred_element_type=jnp.float32)
                 + b)
        i = jax.nn.sigmoid(gates[:, 0 * H:1 * H])
        f = jax.nn.sigmoid(gates[:, 1 * H:2 * H])
        g = jnp.tanh(gates[:, 2 * H:3 * H])
        o = jax.nn.sigmoid(gates[:, 3 * H:4 * H])
        c = f * c + i * g
        h = o * jnp.tanh(c)
        return (h, c), h

    init = (jnp.zeros((Bsz, H), jnp.float32), jnp.zeros((Bsz, H), jnp.float32))
    (h_n, c_n), out = lax.scan(step, init, x_tm.astype(jnp.float32))
    return out, h_n, c_n


def pblstm_reference(x, params, H, compute_dtype=jnp.float32):
    B, T, F = x.shape
    nt = T // 2
    x_tm = jnp.transpose(x.reshape(B, nt, 2 * F), (1, 0, 2))
    wx_f = params["w_ih_fwd"].T
    wh_f = params["w_hh_fwd"].T
    b_f = params["b_ih_fwd"] + params["b_hh_fwd"]
    wx_b = params["w_ih_bwd"].T
    wh_b = params["w_hh_bwd"].T
    b_b = params["b_ih_bwd"] + params["b_hh_bwd"]

    out_f, hn_f, cn_f = _lstm_scan_ref(x_tm, wx_f, wh_f, b_f, H, compute_dtype)
    out_b_rev, hn_b, cn_b = _lstm_scan_ref(x_tm[::-1], wx_b, wh_b, b_b, H, compute_dtype)
    out_b = out_b_rev[::-1]

    output = jnp.transpose(jnp.concatenate([out_f, out_b], axis=-1), (1, 0, 2))
    h_n = jnp.stack([hn_f, hn_b], axis=0)
    c_n = jnp.stack([cn_f, cn_b], axis=0)
    return output.astype(x.dtype), (h_n.astype(x.dtype), c_n.astype(x.dtype))


if __name__ == "__main__":
    # Small demo shapes: batch=2, seq=16 (-> 8 pooled steps), feature=32, hidden=32.
    B, T, F, H = 2, 16, 32, 32

    rng = jax.random.PRNGKey(0)
    keys = jax.random.split(rng, 9)
    scale = 1.0 / jnp.sqrt(jnp.float32(H))

    def u(k, shape):
        return jax.random.uniform(k, shape, jnp.float32, -scale, scale)

    params = {
        "w_ih_fwd": u(keys[0], (4 * H, 2 * F)),
        "w_hh_fwd": u(keys[1], (4 * H, H)),
        "b_ih_fwd": u(keys[2], (4 * H,)),
        "b_hh_fwd": u(keys[3], (4 * H,)),
        "w_ih_bwd": u(keys[4], (4 * H, 2 * F)),
        "w_hh_bwd": u(keys[5], (4 * H, H)),
        "b_ih_bwd": u(keys[6], (4 * H,)),
        "b_hh_bwd": u(keys[7], (4 * H,)),
    }
    x = jax.random.normal(keys[8], (B, T, F), dtype=jnp.float32)

    output, (h_n, c_n) = pblstm_forward(x, params, H)
    output = jax.block_until_ready(output)

    assert output.shape == (B, T // 2, 2 * H)
    assert h_n.shape == (2, B, H) and c_n.shape == (2, B, H)

    # Check 1: against a reference using the same bf16-operand / f32-accumulate
    # precision (verifies the kernel itself, independent of precision choice).
    ref_out, (ref_hn, ref_cn) = pblstm_reference(x, params, H, compute_dtype=jnp.bfloat16)
    assert jnp.allclose(output, ref_out, atol=2e-3, rtol=2e-3), "output mismatch (matched precision)"
    assert jnp.allclose(h_n, ref_hn, atol=2e-3, rtol=2e-3), "h_n mismatch (matched precision)"
    assert jnp.allclose(c_n, ref_cn, atol=2e-3, rtol=2e-3), "c_n mismatch (matched precision)"

    # Check 2: against the full-f32 reference (bounds the bf16 precision loss).
    f32_out, (f32_hn, f32_cn) = pblstm_reference(x, params, H, compute_dtype=jnp.float32)
    assert jnp.allclose(output, f32_out, atol=3e-2, rtol=3e-2), "output drifted from f32 reference"
    assert jnp.allclose(h_n, f32_hn, atol=3e-2, rtol=3e-2), "h_n drifted from f32 reference"
    assert jnp.allclose(c_n, f32_cn, atol=3e-2, rtol=3e-2), "c_n drifted from f32 reference"

    print("KERNEL_OK")
</pallas_src>

<mosaic_0001>
module attributes {stable_mosaic.version = 11 : i64} {
  func.func @_pblstm_kernel(%arg0: i32, %arg1: i32, %arg2: memref<2x8x64xbf16, #tpu.memory_space<vmem>>, %arg3: memref<2x8x64xbf16, #tpu.memory_space<vmem>>, %arg4: memref<64x128xbf16, #tpu.memory_space<vmem>>, %arg5: memref<32x128xbf16, #tpu.memory_space<vmem>>, %arg6: memref<1x128xf32, #tpu.memory_space<vmem>>, %arg7: memref<64x128xbf16, #tpu.memory_space<vmem>>, %arg8: memref<32x128xbf16, #tpu.memory_space<vmem>>, %arg9: memref<1x128xf32, #tpu.memory_space<vmem>>, %arg10: memref<2x8x32xf32, #tpu.memory_space<vmem>>, %arg11: memref<2x8x32xf32, #tpu.memory_space<vmem>>, %arg12: memref<2x32xf32, #tpu.memory_space<vmem>>, %arg13: memref<2x32xf32, #tpu.memory_space<vmem>>, %arg14: memref<2x32xf32, #tpu.memory_space<vmem>>, %arg15: memref<2x32xf32, #tpu.memory_space<vmem>>, %arg16: memref<2x32xf32, #tpu.memory_space<vmem>>, %arg17: memref<2x32xf32, #tpu.memory_space<vmem>>) attributes {dimension_semantics = [#tpu.dimension_semantics<parallel>, #tpu.dimension_semantics<arbitrary>], iteration_bounds = array<i64: 1, 1>, scalar_prefetch = 0 : i64, scratch_operands = 4 : i64, tpu.core_type = #tpu.core_type<tc>, window_params = [{transform_indices = @transform_0, window_bounds = array<i64: 2, 8, 64>}, {transform_indices = @transform_1, window_bounds = array<i64: 2, 8, 64>}, {pipeline_mode = #tpu.pipeline_mode<synchronous>, transform_indices = @transform_2, window_bounds = array<i64: 64, 128>}, {pipeline_mode = #tpu.pipeline_mode<synchronous>, transform_indices = @transform_3, window_bounds = array<i64: 32, 128>}, {pipeline_mode = #tpu.pipeline_mode<synchronous>, transform_indices = @transform_4, window_bounds = array<i64: 1, 128>}, {pipeline_mode = #tpu.pipeline_mode<synchronous>, transform_indices = @transform_5, window_bounds = array<i64: 64, 128>}, {pipeline_mode = #tpu.pipeline_mode<synchronous>, transform_indices = @transform_6, window_bounds = array<i64: 32, 128>}, {pipeline_mode = #tpu.pipeline_mode<synchronous>, transform_indices = @transform_7, window_bounds = array<i64: 1, 128>}, {transform_indices = @transform_8, window_bounds = array<i64: 2, 8, 32>}, {transform_indices = @transform_9, window_bounds = array<i64: 2, 8, 32>}, {transform_indices = @transform_10, window_bounds = array<i64: 2, 32>}, {transform_indices = @transform_11, window_bounds = array<i64: 2, 32>}]} {
    %c0_i32 = arith.constant 0 : i32
    %0 = arith.cmpi eq, %arg1, %c0_i32 : i32
    %1 = arith.extui %0 : i1 to i32
    %c0_i32_0 = arith.constant 0 : i32
    %2 = arith.cmpi ne, %1, %c0_i32_0 : i32
    scf.if %2 {
      %cst_356 = arith.constant 0.000000e+00 : f32
      %713 = vector.broadcast %cst_356 : f32 to vector<2x32xf32>
      %c0_357 = arith.constant 0 : index
      %c0_358 = arith.constant 0 : index
      %714 = vector.load %arg14[%c0_357, %c0_358] : memref<2x32xf32, #tpu.memory_space<vmem>>, vector<2x32xf32>
      tpu.vector_store %arg14[%c0_357, %c0_358], %713 {strides = array<i32>} : memref<2x32xf32, #tpu.memory_space<vmem>>, vector<2x32xf32>,
      %cst_359 = arith.constant 0.000000e+00 : f32
      %715 = vector.broadcast %cst_359 : f32 to vector<2x32xf32>
      %c0_360 = arith.constant 0 : index
      %c0_361 = arith.constant 0 : index
      %716 = vector.load %arg15[%c0_360, %c0_361] : memref<2x32xf32, #tpu.memory_space<vmem>>, vector<2x32xf32>
      tpu.vector_store %arg15[%c0_360, %c0_361], %715 {strides = array<i32>} : memref<2x32xf32, #tpu.memory_space<vmem>>, vector<2x32xf32>,
      %cst_362 = arith.constant 0.000000e+00 : f32
      %717 = vector.broadcast %cst_362 : f32 to vector<2x32xf32>
      %c0_363 = arith.constant 0 : index
      %c0_364 = arith.constant 0 : index
      %718 = vector.load %arg16[%c0_363, %c0_364] : memref<2x32xf32, #tpu.memory_space<vmem>>, vector<2x32xf32>
      tpu.vector_store %arg16[%c0_363, %c0_364], %717 {strides = array<i32>} : memref<2x32xf32, #tpu.memory_space<vmem>>, vector<2x32xf32>,
      %cst_365 = arith.constant 0.000000e+00 : f32
      %719 = vector.broadcast %cst_365 : f32 to vector<2x32xf32>
      %c0_366 = arith.constant 0 : index
      %c0_367 = arith.constant 0 : index
      %720 = vector.load %arg17[%c0_366, %c0_367] : memref<2x32xf32, #tpu.memory_space<vmem>>, vector<2x32xf32>
      tpu.vector_store %arg17[%c0_366, %c0_367], %719 {strides = array<i32>} : memref<2x32xf32, #tpu.memory_space<vmem>>, vector<2x32xf32>,
    } else {
    }
    %c0 = arith.constant 0 : index
    %c0_1 = arith.constant 0 : index
    %c0_2 = arith.constant 0 : index
    %3 = vector.load %arg2[%c0, %c0_1, %c0_2] : memref<2x8x64xbf16, #tpu.memory_space<vmem>>, vector<2x8x64xbf16>
    %4 = vector.shape_cast %3 : vector<2x8x64xbf16> to vector<16x64xbf16>
    %c0_3 = arith.constant 0 : index
    %c0_4 = arith.constant 0 : index
    %5 = vector.load %arg4[%c0_3, %c0_4] : memref<64x128xbf16, #tpu.memory_space<vmem>>, vector<64x128xbf16>
    %cst = arith.constant dense<0.000000e+00> : vector<16x128xf32>
    %6 = tpu.matmul %4, %5, %cst {dimension_numbers = #tpu.dot_dimension_numbers<[1], [0], [0], [1], [0, 0, 1, 1], [], []>} : vector<16x64xbf16>, vector<64x128xbf16>, vector<16x128xf32> -> vector<16x128xf32>
    %c0_5 = arith.constant 0 : index
    %c0_6 = arith.constant 0 : index
    %7 = vector.load %arg6[%c0_5, %c0_6] : memref<1x128xf32, #tpu.memory_space<vmem>>, vector<1x128xf32>
    %8 = vector.broadcast %7 : vector<1x128xf32> to vector<16x128xf32>
    %9 = arith.addf %6, %8 : vector<16x128xf32>
    %10 = vector.shape_cast %9 : vector<16x128xf32> to vector<2x8x128xf32>
    %c0_7 = arith.constant 0 : index
    %c0_8 = arith.constant 0 : index
    %c0_9 = arith.constant 0 : index
    %11 = vector.load %arg3[%c0_7, %c0_8, %c0_9] : memref<2x8x64xbf16, #tpu.memory_space<vmem>>, vector<2x8x64xbf16>
    %12 = vector.shape_cast %11 : vector<2x8x64xbf16> to vector<16x64xbf16>
    %c0_10 = arith.constant 0 : index
    %c0_11 = arith.constant 0 : index
    %13 = vector.load %arg7[%c0_10, %c0_11] : memref<64x128xbf16, #tpu.memory_space<vmem>>, vector<64x128xbf16>
    %cst_12 = arith.constant dense<0.000000e+00> : vector<16x128xf32>
    %14 = tpu.matmul %12, %13, %cst_12 {dimension_numbers = #tpu.dot_dimension_numbers<[1], [0], [0], [1], [0, 0, 1, 1], [], []>} : vector<16x64xbf16>, vector<64x128xbf16>, vector<16x128xf32> -> vector<16x128xf32>
    %c0_13 = arith.constant 0 : index
    %c0_14 = arith.constant 0 : index
    %15 = vector.load %arg9[%c0_13, %c0_14] : memref<1x128xf32, #tpu.memory_space<vmem>>, vector<1x128xf32>
    %16 = vector.broadcast %15 : vector<1x128xf32> to vector<16x128xf32>
    %17 = arith.addf %14, %16 : vector<16x128xf32>
    %18 = vector.shape_cast %17 : vector<16x128xf32> to vector<2x8x128xf32>
    %c0_15 = arith.constant 0 : index
    %c0_16 = arith.constant 0 : index
    %19 = vector.load %arg5[%c0_15, %c0_16] : memref<32x128xbf16, #tpu.memory_space<vmem>>, vector<32x128xbf16>
    %c0_17 = arith.constant 0 : index
    %c0_18 = arith.constant 0 : index
    %20 = vector.load %arg8[%c0_17, %c0_18] : memref<32x128xbf16, #tpu.memory_space<vmem>>, vector<32x128xbf16>
    %21 = vector.extract_strided_slice %10 {offsets = [0, 0, 0], sizes = [2, 1, 128], strides = [1, 1, 1]} : vector<2x8x128xf32> to vector<2x1x128xf32>
    %22 = vector.shape_cast %21 : vector<2x1x128xf32> to vector<2x128xf32>
    %c0_19 = arith.constant 0 : index
    %c0_20 = arith.constant 0 : index
    %23 = vector.load %arg14[%c0_19, %c0_20] : memref<2x32xf32, #tpu.memory_space<vmem>>, vector<2x32xf32>
    %c0_21 = arith.constant 0 : index
    %c0_22 = arith.constant 0 : index
    %24 = vector.load %arg15[%c0_21, %c0_22] : memref<2x32xf32, #tpu.memory_space<vmem>>, vector<2x32xf32>
    %25 = arith.truncf %23 : vector<2x32xf32> to vector<2x32xbf16>
    %cst_23 = arith.constant dense<0.000000e+00> : vector<2x128xf32>
    %26 = tpu.matmul %25, %19, %cst_23 {dimension_numbers = #tpu.dot_dimension_numbers<[1], [0], [0], [1], [0, 0, 1, 1], [], []>} : vector<2x32xbf16>, vector<32x128xbf16>, vector<2x128xf32> -> vector<2x128xf32>
    %27 = arith.addf %22, %26 : vector<2x128xf32>
    %28 = vector.extract_strided_slice %27 {offsets = [0, 0], sizes = [2, 32], strides = [1, 1]} : vector<2x128xf32> to vector<2x32xf32>
    %cst_24 = arith.constant 5.000000e-01 : f32
    %29 = vector.broadcast %cst_24 : f32 to vector<2x32xf32>
    %30 = arith.mulf %29, %28 : vector<2x32xf32>
    %31 = math.tanh %30 : vector<2x32xf32>
    %cst_25 = arith.constant 5.000000e-01 : f32
    %32 = vector.broadcast %cst_25 : f32 to vector<2x32xf32>
    %33 = arith.mulf %32, %31 : vector<2x32xf32>
    %cst_26 = arith.constant 5.000000e-01 : f32
    %34 = vector.broadcast %cst_26 : f32 to vector<2x32xf32>
    %35 = arith.addf %33, %34 : vector<2x32xf32>
    %36 = vector.extract_strided_slice %27 {offsets = [0, 32], sizes = [2, 32], strides = [1, 1]} : vector<2x128xf32> to vector<2x32xf32>
    %cst_27 = arith.constant 5.000000e-01 : f32
    %37 = vector.broadcast %cst_27 : f32 to vector<2x32xf32>
    %38 = arith.mulf %37, %36 : vector<2x32xf32>
    %39 = math.tanh %38 : vector<2x32xf32>
    %cst_28 = arith.constant 5.000000e-01 : f32
    %40 = vector.broadcast %cst_28 : f32 to vector<2x32xf32>
    %41 = arith.mulf %40, %39 : vector<2x32xf32>
    %cst_29 = arith.constant 5.000000e-01 : f32
    %42 = vector.broadcast %cst_29 : f32 to vector<2x32xf32>
    %43 = arith.addf %41, %42 : vector<2x32xf32>
    %44 = vector.extract_strided_slice %27 {offsets = [0, 64], sizes = [2, 32], strides = [1, 1]} : vector<2x128xf32> to vector<2x32xf32>
    %45 = math.tanh %44 : vector<2x32xf32>
    %46 = vector.extract_strided_slice %27 {offsets = [0, 96], sizes = [2, 32], strides = [1, 1]} : vector<2x128xf32> to vector<2x32xf32>
    %cst_30 = arith.constant 5.000000e-01 : f32
    %47 = vector.broadcast %cst_30 : f32 to vector<2x32xf32>
    %48 = arith.mulf %47, %46 : vector<2x32xf32>
    %49 = math.tanh %48 : vector<2x32xf32>
    %cst_31 = arith.constant 5.000000e-01 : f32
    %50 = vector.broadcast %cst_31 : f32 to vector<2x32xf32>
    %51 = arith.mulf %50, %49 : vector<2x32xf32>
    %cst_32 = arith.constant 5.000000e-01 : f32
    %52 = vector.broadcast %cst_32 : f32 to vector<2x32xf32>
    %53 = arith.addf %51, %52 : vector<2x32xf32>
    %54 = arith.mulf %43, %24 : vector<2x32xf32>
    %55 = arith.mulf %35, %45 : vector<2x32xf32>
    %56 = arith.addf %54, %55 : vector<2x32xf32>
    %57 = math.tanh %56 : vector<2x32xf32>
    %58 = arith.mulf %53, %57 : vector<2x32xf32>
    %c0_33 = arith.constant 0 : index
    %c0_34 = arith.constant 0 : index
    %59 = vector.load %arg14[%c0_33, %c0_34] : memref<2x32xf32, #tpu.memory_space<vmem>>, vector<2x32xf32>
    tpu.vector_store %arg14[%c0_33, %c0_34], %58 {strides = array<i32>} : memref<2x32xf32, #tpu.memory_space<vmem>>, vector<2x32xf32>,
    %c0_35 = arith.constant 0 : index
    %c0_36 = arith.constant 0 : index
    %60 = vector.load %arg15[%c0_35, %c0_36] : memref<2x32xf32, #tpu.memory_space<vmem>>, vector<2x32xf32>
    tpu.vector_store %arg15[%c0_35, %c0_36], %56 {strides = array<i32>} : memref<2x32xf32, #tpu.memory_space<vmem>>, vector<2x32xf32>,
    %c0_37 = arith.constant 0 : index
    %c0_38 = arith.constant 0 : index
    %c0_39 = arith.constant 0 : index
    %61 = vector.load %arg10[%c0_37, %c0_38, %c0_39] : memref<2x8x32xf32, #tpu.memory_space<vmem>>, vector<2x1x32xf32>
    %62 = vector.shape_cast %61 : vector<2x1x32xf32> to vector<2x32xf32>
    %63 = vector.shape_cast %58 : vector<2x32xf32> to vector<2x1x32xf32>
    tpu.vector_store %arg10[%c0_37, %c0_38, %c0_39], %63 {strides = array<i32>} : memref<2x8x32xf32, #tpu.memory_space<vmem>>, vector<2x1x32xf32>,
    %64 = vector.extract_strided_slice %18 {offsets = [0, 7, 0], sizes = [2, 1, 128], strides = [1, 1, 1]} : vector<2x8x128xf32> to vector<2x1x128xf32>
    %65 = vector.shape_cast %64 : vector<2x1x128xf32> to vector<2x128xf32>
    %c0_40 = arith.constant 0 : index
    %c0_41 = arith.constant 0 : index
    %66 = vector.load %arg16[%c0_40, %c0_41] : memref<2x32xf32, #tpu.memory_space<vmem>>, vector<2x32xf32>
    %c0_42 = arith.constant 0 : index
    %c0_43 = arith.constant 0 : index
    %67 = vector.load %arg17[%c0_42, %c0_43] : memref<2x32xf32, #tpu.memory_space<vmem>>, vector<2x32xf32>
    %68 = arith.truncf %66 : vector<2x32xf32> to vector<2x32xbf16>
    %cst_44 = arith.constant dense<0.000000e+00> : vector<2x128xf32>
    %69 = tpu.matmul %68, %20, %cst_44 {dimension_numbers = #tpu.dot_dimension_numbers<[1], [0], [0], [1], [0, 0, 1, 1], [], []>} : vector<2x32xbf16>, vector<32x128xbf16>, vector<2x128xf32> -> vector<2x128xf32>
    %70 = arith.addf %65, %69 : vector<2x128xf32>
    %71 = vector.extract_strided_slice %70 {offsets = [0, 0], sizes = [2, 32], strides = [1, 1]} : vector<2x128xf32> to vector<2x32xf32>
    %cst_45 = arith.constant 5.000000e-01 : f32
    %72 = vector.broadcast %cst_45 : f32 to vector<2x32xf32>
    %73 = arith.mulf %72, %71 : vector<2x32xf32>
    %74 = math.tanh %73 : vector<2x32xf32>
    %cst_46 = arith.constant 5.000000e-01 : f32
    %75 = vector.broadcast %cst_46 : f32 to vector<2x32xf32>
    %76 = arith.mulf %75, %74 : vector<2x32xf32>
    %cst_47 = arith.constant 5.000000e-01 : f32
    %77 = vector.broadcast %cst_47 : f32 to vector<2x32xf32>
    %78 = arith.addf %76, %77 : vector<2x32xf32>
    %79 = vector.extract_strided_slice %70 {offsets = [0, 32], sizes = [2, 32], strides = [1, 1]} : vector<2x128xf32> to vector<2x32xf32>
    %cst_48 = arith.constant 5.000000e-01 : f32
    %80 = vector.broadcast %cst_48 : f32 to vector<2x32xf32>
    %81 = arith.mulf %80, %79 : vector<2x32xf32>
    %82 = math.tanh %81 : vector<2x32xf32>
    %cst_49 = arith.constant 5.000000e-01 : f32
    %83 = vector.broadcast %cst_49 : f32 to vector<2x32xf32>
    %84 = arith.mulf %83, %82 : vector<2x32xf32>
    %cst_50 = arith.constant 5.000000e-01 : f32
    %85 = vector.broadcast %cst_50 : f32 to vector<2x32xf32>
    %86 = arith.addf %84, %85 : vector<2x32xf32>
    %87 = vector.extract_strided_slice %70 {offsets = [0, 64], sizes = [2, 32], strides = [1, 1]} : vector<2x128xf32> to vector<2x32xf32>
    %88 = math.tanh %87 : vector<2x32xf32>
    %89 = vector.extract_strided_slice %70 {offsets = [0, 96], sizes = [2, 32], strides = [1, 1]} : vector<2x128xf32> to vector<2x32xf32>
    %cst_51 = arith.constant 5.000000e-01 : f32
    %90 = vector.broadcast %cst_51 : f32 to vector<2x32xf32>
    %91 = arith.mulf %90, %89 : vector<2x32xf32>
    %92 = math.tanh %91 : vector<2x32xf32>
    %cst_52 = arith.constant 5.000000e-01 : f32
    %93 = vector.broadcast %cst_52 : f32 to vector<2x32xf32>
    %94 = arith.mulf %93, %92 : vector<2x32xf32>
    %cst_53 = arith.constant 5.000000e-01 : f32
    %95 = vector.broadcast %cst_53 : f32 to vector<2x32xf32>
    %96 = arith.addf %94, %95 : vector<2x32xf32>
    %97 = arith.mulf %86, %67 : vector<2x32xf32>
    %98 = arith.mulf %78, %88 : vector<2x32xf32>
    %99 = arith.addf %97, %98 : vector<2x32xf32>
    %100 = math.tanh %99 : vector<2x32xf32>
    %101 = arith.mulf %96, %100 : vector<2x32xf32>
    %c0_54 = arith.constant 0 : index
    %c0_55 = arith.constant 0 : index
    %102 = vector.load %arg16[%c0_54, %c0_55] : memref<2x32xf32, #tpu.memory_space<vmem>>, vector<2x32xf32>
    tpu.vector_store %arg16[%c0_54, %c0_55], %101 {strides = array<i32>} : memref<2x32xf32, #tpu.memory_space<vmem>>, vector<2x32xf32>,
    %c0_56 = arith.constant 0 : index
    %c0_57 = arith.constant 0 : index
    %103 = vector.load %arg17[%c0_56, %c0_57] : memref<2x32xf32, #tpu.memory_space<vmem>>, vector<2x32xf32>
    tpu.vector_store %arg17[%c0_56, %c0_57], %99 {strides = array<i32>} : memref<2x32xf32, #tpu.memory_space<vmem>>, vector<2x32xf32>,
    %c0_58 = arith.constant 0 : index
    %c7 = arith.constant 7 : index
    %c0_59 = arith.constant 0 : index
    %104 = vector.load %arg11[%c0_58, %c7, %c0_59] : memref<2x8x32xf32, #tpu.memory_space<vmem>>, vector<2x1x32xf32>
    %105 = vector.shape_cast %104 : vector<2x1x32xf32> to vector<2x32xf32>
    %106 = vector.shape_cast %101 : vector<2x32xf32> to vector<2x1x32xf32>
    tpu.vector_store %arg11[%c0_58, %c7, %c0_59], %106 {strides = array<i32>} : memref<2x8x32xf32, #tpu.memory_space<vmem>>, vector<2x1x32xf32>,
    %107 = vector.extract_strided_slice %10 {offsets = [0, 1, 0], sizes = [2, 1, 128], strides = [1, 1, 1]} : vector<2x8x128xf32> to vector<2x1x128xf32>
    %108 = vector.shape_cast %107 : vector<2x1x128xf32> to vector<2x128xf32>
    %c0_60 = arith.constant 0 : index
    %c0_61 = arith.constant 0 : index
    %109 = vector.load %arg14[%c0_60, %c0_61] : memref<2x32xf32, #tpu.memory_space<vmem>>, vector<2x32xf32>
    %c0_62 = arith.constant 0 : index
    %c0_63 = arith.constant 0 : index
    %110 = vector.load %arg15[%c0_62, %c0_63] : memref<2x32xf32, #tpu.memory_space<vmem>>, vector<2x32xf32>
    %111 = arith.truncf %109 : vector<2x32xf32> to vector<2x32xbf16>
    %cst_64 = arith.constant dense<0.000000e+00> : vector<2x128xf32>
    %112 = tpu.matmul %111, %19, %cst_64 {dimension_numbers = #tpu.dot_dimension_numbers<[1], [0], [0], [1], [0, 0, 1, 1], [], []>} : vector<2x32xbf16>, vector<32x128xbf16>, vector<2x128xf32> -> vector<2x128xf32>
    %113 = arith.addf %108, %112 : vector<2x128xf32>
    %114 = vector.extract_strided_slice %113 {offsets = [0, 0], sizes = [2, 32], strides = [1, 1]} : vector<2x128xf32> to vector<2x32xf32>
    %cst_65 = arith.constant 5.000000e-01 : f32
    %115 = vector.broadcast %cst_65 : f32 to vector<2x32xf32>
    %116 = arith.mulf %115, %114 : vector<2x32xf32>
    %117 = math.tanh %116 : vector<2x32xf32>
    %cst_66 = arith.constant 5.000000e-01 : f32
    %118 = vector.broadcast %cst_66 : f32 to vector<2x32xf32>
    %119 = arith.mulf %118, %117 : vector<2x32xf32>
    %cst_67 = arith.constant 5.000000e-01 : f32
    %120 = vector.broadcast %cst_67 : f32 to vector<2x32xf32>
    %121 = arith.addf %119, %120 : vector<2x32xf32>
    %122 = vector.extract_strided_slice %113 {offsets = [0, 32], sizes = [2, 32], strides = [1, 1]} : vector<2x128xf32> to vector<2x32xf32>
    %cst_68 = arith.constant 5.000000e-01 : f32
    %123 = vector.broadcast %cst_68 : f32 to vector<2x32xf32>
    %124 = arith.mulf %123, %122 : vector<2x32xf32>
    %125 = math.tanh %124 : vector<2x32xf32>
    %cst_69 = arith.constant 5.000000e-01 : f32
    %126 = vector.broadcast %cst_69 : f32 to vector<2x32xf32>
    %127 = arith.mulf %126, %125 : vector<2x32xf32>
    %cst_70 = arith.constant 5.000000e-01 : f32
    %128 = vector.broadcast %cst_70 : f32 to vector<2x32xf32>
    %129 = arith.addf %127, %128 : vector<2x32xf32>
    %130 = vector.extract_strided_slice %113 {offsets = [0, 64], sizes = [2, 32], strides = [1, 1]} : vector<2x128xf32> to vector<2x32xf32>
    %131 = math.tanh %130 : vector<2x32xf32>
    %132 = vector.extract_strided_slice %113 {offsets = [0, 96], sizes = [2, 32], strides = [1, 1]} : vector<2x128xf32> to vector<2x32xf32>
    %cst_71 = arith.constant 5.000000e-01 : f32
    %133 = vector.broadcast %cst_71 : f32 to vector<2x32xf32>
    %134 = arith.mulf %133, %132 : vector<2x32xf32>
    %135 = math.tanh %134 : vector<2x32xf32>
    %cst_72 = arith.constant 5.000000e-01 : f32
    %136 = vector.broadcast %cst_72 : f32 to vector<2x32xf32>
    %137 = arith.mulf %136, %135 : vector<2x32xf32>
    %cst_73 = arith.constant 5.000000e-01 : f32
    %138 = vector.broadcast %cst_73 : f32 to vector<2x32xf32>
    %139 = arith.addf %137, %138 : vector<2x32xf32>
    %140 = arith.mulf %129, %110 : vector<2x32xf32>
    %141 = arith.mulf %121, %131 : vector<2x32xf32>
    %142 = arith.addf %140, %141 : vector<2x32xf32>
    %143 = math.tanh %142 : vector<2x32xf32>
    %144 = arith.mulf %139, %143 : vector<2x32xf32>
    %c0_74 = arith.constant 0 : index
    %c0_75 = arith.constant 0 : index
    %145 = vector.load %arg14[%c0_74, %c0_75] : memref<2x32xf32, #tpu.memory_space<vmem>>, vector<2x32xf32>
    tpu.vector_store %arg14[%c0_74, %c0_75], %144 {strides = array<i32>} : memref<2x32xf32, #tpu.memory_space<vmem>>, vector<2x32xf32>,
    %c0_76 = arith.constant 0 : index
    %c0_77 = arith.constant 0 : index
    %146 = vector.load %arg15[%c0_76, %c0_77] : memref<2x32xf32, #tpu.memory_space<vmem>>, vector<2x32xf32>
    tpu.vector_store %arg15[%c0_76, %c0_77], %142 {strides = array<i32>} : memref<2x32xf32, #tpu.memory_space<vmem>>, vector<2x32xf32>,
    %c0_78 = arith.constant 0 : index
    %c1 = arith.constant 1 : index
    %c0_79 = arith.constant 0 : index
    %147 = vector.load %arg10[%c0_78, %c1, %c0_79] : memref<2x8x32xf32, #tpu.memory_space<vmem>>, vector<2x1x32xf32>
    %148 = vector.shape_cast %147 : vector<2x1x32xf32> to vector<2x32xf32>
    %149 = vector.shape_cast %144 : vector<2x32xf32> to vector<2x1x32xf32>
    tpu.vector_store %arg10[%c0_78, %c1, %c0_79], %149 {strides = array<i32>} : memref<2x8x32xf32, #tpu.memory_space<vmem>>, vector<2x1x32xf32>,
    %150 = vector.extract_strided_slice %18 {offsets = [0, 6, 0], sizes = [2, 1, 128], strides = [1, 1, 1]} : vector<2x8x128xf32> to vector<2x1x128xf32>
    %151 = vector.shape_cast %150 : vector<2x1x128xf32> to vector<2x128xf32>
    %c0_80 = arith.constant 0 : index
    %c0_81 = arith.constant 0 : index
    %152 = vector.load %arg16[%c0_80, %c0_81] : memref<2x32xf32, #tpu.memory_space<vmem>>, vector<2x32xf32>
    %c0_82 = arith.constant 0 : index
    %c0_83 = arith.constant 0 : index
    %153 = vector.load %arg17[%c0_82, %c0_83] : memref<2x32xf32, #tpu.memory_space<vmem>>, vector<2x32xf32>
    %154 = arith.truncf %152 : vector<2x32xf32> to vector<2x32xbf16>
    %cst_84 = arith.constant dense<0.000000e+00> : vector<2x128xf32>
    %155 = tpu.matmul %154, %20, %cst_84 {dimension_numbers = #tpu.dot_dimension_numbers<[1], [0], [0], [1], [0, 0, 1, 1], [], []>} : vector<2x32xbf16>, vector<32x128xbf16>, vector<2x128xf32> -> vector<2x128xf32>
    %156 = arith.addf %151, %155 : vector<2x128xf32>
    %157 = vector.extract_strided_slice %156 {offsets = [0, 0], sizes = [2, 32], strides = [1, 1]} : vector<2x128xf32> to vector<2x32xf32>
    %cst_85 = arith.constant 5.000000e-01 : f32
    %158 = vector.broadcast %cst_85 : f32 to vector<2x32xf32>
    %159 = arith.mulf %158, %157 : vector<2x32xf32>
    %160 = math.tanh %159 : vector<2x32xf32>
    %cst_86 = arith.constant 5.000000e-01 : f32
    %161 = vector.broadcast %cst_86 : f32 to vector<2x32xf32>
    %162 = arith.mulf %161, %160 : vector<2x32xf32>
    %cst_87 = arith.constant 5.000000e-01 : f32
    %163 = vector.broadcast %cst_87 : f32 to vector<2x32xf32>
    %164 = arith.addf %162, %163 : vector<2x32xf32>
    %165 = vector.extract_strided_slice %156 {offsets = [0, 32], sizes = [2, 32], strides = [1, 1]} : vector<2x128xf32> to vector<2x32xf32>
    %cst_88 = arith.constant 5.000000e-01 : f32
    %166 = vector.broadcast %cst_88 : f32 to vector<2x32xf32>
    %167 = arith.mulf %166, %165 : vector<2x32xf32>
    %168 = math.tanh %167 : vector<2x32xf32>
    %cst_89 = arith.constant 5.000000e-01 : f32
    %169 = vector.broadcast %cst_89 : f32 to vector<2x32xf32>
    %170 = arith.mulf %169, %168 : vector<2x32xf32>
    %cst_90 = arith.constant 5.000000e-01 : f32
    %171 = vector.broadcast %cst_90 : f32 to vector<2x32xf32>
    %172 = arith.addf %170, %171 : vector<2x32xf32>
    %173 = vector.extract_strided_slice %156 {offsets = [0, 64], sizes = [2, 32], strides = [1, 1]} : vector<2x128xf32> to vector<2x32xf32>
    %174 = math.tanh %173 : vector<2x32xf32>
    %175 = vector.extract_strided_slice %156 {offsets = [0, 96], sizes = [2, 32], strides = [1, 1]} : vector<2x128xf32> to vector<2x32xf32>
    %cst_91 = arith.constant 5.000000e-01 : f32
    %176 = vector.broadcast %cst_91 : f32 to vector<2x32xf32>
    %177 = arith.mulf %176, %175 : vector<2x32xf32>
    %178 = math.tanh %177 : vector<2x32xf32>
    %cst_92 = arith.constant 5.000000e-01 : f32
    %179 = vector.broadcast %cst_92 : f32 to vector<2x32xf32>
    %180 = arith.mulf %179, %178 : vector<2x32xf32>
    %cst_93 = arith.constant 5.000000e-01 : f32
    %181 = vector.broadcast %cst_93 : f32 to vector<2x32xf32>
    %182 = arith.addf %180, %181 : vector<2x32xf32>
    %183 = arith.mulf %172, %153 : vector<2x32xf32>
    %184 = arith.mulf %164, %174 : vector<2x32xf32>
    %185 = arith.addf %183, %184 : vector<2x32xf32>
    %186 = math.tanh %185 : vector<2x32xf32>
    %187 = arith.mulf %182, %186 : vector<2x32xf32>
    %c0_94 = arith.constant 0 : index
    %c0_95 = arith.constant 0 : index
    %188 = vector.load %arg16[%c0_94, %c0_95] : memref<2x32xf32, #tpu.memory_space<vmem>>, vector<2x32xf32>
    tpu.vector_store %arg16[%c0_94, %c0_95], %187 {strides = array<i32>} : memref<2x32xf32, #tpu.memory_space<vmem>>, vector<2x32xf32>,
    %c0_96 = arith.constant 0 : index
    %c0_97 = arith.constant 0 : index
    %189 = vector.load %arg17[%c0_96, %c0_97] : memref<2x32xf32, #tpu.memory_space<vmem>>, vector<2x32xf32>
    tpu.vector_store %arg17[%c0_96, %c0_97], %185 {strides = array<i32>} : memref<2x32xf32, #tpu.memory_space<vmem>>, vector<2x32xf32>,
    %c0_98 = arith.constant 0 : index
    %c6 = arith.constant 6 : index
    %c0_99 = arith.constant 0 : index
    %190 = vector.load %arg11[%c0_98, %c6, %c0_99] : memref<2x8x32xf32, #tpu.memory_space<vmem>>, vector<2x1x32xf32>
    %191 = vector.shape_cast %190 : vector<2x1x32xf32> to vector<2x32xf32>
    %192 = vector.shape_cast %187 : vector<2x32xf32> to vector<2x1x32xf32>
    tpu.vector_store %arg11[%c0_98, %c6, %c0_99], %192 {strides = array<i32>} : memref<2x8x32xf32, #tpu.memory_space<vmem>>, vector<2x1x32xf32>,
    %193 = vector.extract_strided_slice %10 {offsets = [0, 2, 0], sizes = [2, 1, 128], strides = [1, 1, 1]} : vector<2x8x128xf32> to vector<2x1x128xf32>
    %194 = vector.shape_cast %193 : vector<2x1x128xf32> to vector<2x128xf32>
    %c0_100 = arith.constant 0 : index
    %c0_101 = arith.constant 0 : index
    %195 = vector.load %arg14[%c0_100, %c0_101] : memref<2x32xf32, #tpu.memory_space<vmem>>, vector<2x32xf32>
    %c0_102 = arith.constant 0 : index
    %c0_103 = arith.constant 0 : index
    %196 = vector.load %arg15[%c0_102, %c0_103] : memref<2x32xf32, #tpu.memory_space<vmem>>, vector<2x32xf32>
    %197 = arith.truncf %195 : vector<2x32xf32> to vector<2x32xbf16>
    %cst_104 = arith.constant dense<0.000000e+00> : vector<2x128xf32>
    %198 = tpu.matmul %197, %19, %cst_104 {dimension_numbers = #tpu.dot_dimension_numbers<[1], [0], [0], [1], [0, 0, 1, 1], [], []>} : vector<2x32xbf16>, vector<32x128xbf16>, vector<2x128xf32> -> vector<2x128xf32>
    %199 = arith.addf %194, %198 : vector<2x128xf32>
    %200 = vector.extract_strided_slice %199 {offsets = [0, 0], sizes = [2, 32], strides = [1, 1]} : vector<2x128xf32> to vector<2x32xf32>
    %cst_105 = arith.constant 5.000000e-01 : f32
    %201 = vector.broadcast %cst_105 : f32 to vector<2x32xf32>
    %202 = arith.mulf %201, %200 : vector<2x32xf32>
    %203 = math.tanh %202 : vector<2x32xf32>
    %cst_106 = arith.constant 5.000000e-01 : f32
    %204 = vector.broadcast %cst_106 : f32 to vector<2x32xf32>
    %205 = arith.mulf %204, %203 : vector<2x32xf32>
    %cst_107 = arith.constant 5.000000e-01 : f32
    %206 = vector.broadcast %cst_107 : f32 to vector<2x32xf32>
    %207 = arith.addf %205, %206 : vector<2x32xf32>
    %208 = vector.extract_strided_slice %199 {offsets = [0, 32], sizes = [2, 32], strides = [1, 1]} : vector<2x128xf32> to vector<2x32xf32>
    %cst_108 = arith.constant 5.000000e-01 : f32
    %209 = vector.broadcast %cst_108 : f32 to vector<2x32xf32>
    %210 = arith.mulf %209, %208 : vector<2x32xf32>
    %211 = math.tanh %210 : vector<2x32xf32>
    %cst_109 = arith.constant 5.000000e-01 : f32
    %212 = vector.broadcast %cst_109 : f32 to vector<2x32xf32>
    %213 = arith.mulf %212, %211 : vector<2x32xf32>
    %cst_110 = arith.constant 5.000000e-01 : f32
    %214 = vector.broadcast %cst_110 : f32 to vector<2x32xf32>
    %215 = arith.addf %213, %214 : vector<2x32xf32>
    %216 = vector.extract_strided_slice %199 {offsets = [0, 64], sizes = [2, 32], strides = [1, 1]} : vector<2x128xf32> to vector<2x32xf32>
    %217 = math.tanh %216 : vector<2x32xf32>
    %218 = vector.extract_strided_slice %199 {offsets = [0, 96], sizes = [2, 32], strides = [1, 1]} : vector<2x128xf32> to vector<2x32xf32>
    %cst_111 = arith.constant 5.000000e-01 : f32
    %219 = vector.broadcast %cst_111 : f32 to vector<2x32xf32>
    %220 = arith.mulf %219, %218 : vector<2x32xf32>
    %221 = math.tanh %220 : vector<2x32xf32>
    %cst_112 = arith.constant 5.000000e-01 : f32
    %222 = vector.broadcast %cst_112 : f32 to vector<2x32xf32>
    %223 = arith.mulf %222, %221 : vector<2x32xf32>
    %cst_113 = arith.constant 5.000000e-01 : f32
    %224 = vector.broadcast %cst_113 : f32 to vector<2x32xf32>
    %225 = arith.addf %223, %224 : vector<2x32xf32>
    %226 = arith.mulf %215, %196 : vector<2x32xf32>
    %227 = arith.mulf %207, %217 : vector<2x32xf32>
    %228 = arith.addf %226, %227 : vector<2x32xf32>
    %229 = math.tanh %228 : vector<2x32xf32>
    %230 = arith.mulf %225, %229 : vector<2x32xf32>
    %c0_114 = arith.constant 0 : index
    %c0_115 = arith.constant 0 : index
    %231 = vector.load %arg14[%c0_114, %c0_115] : memref<2x32xf32, #tpu.memory_space<vmem>>, vector<2x32xf32>
    tpu.vector_store %arg14[%c0_114, %c0_115], %230 {strides = array<i32>} : memref<2x32xf32, #tpu.memory_space<vmem>>, vector<2x32xf32>,
    %c0_116 = arith.constant 0 : index
    %c0_117 = arith.constant 0 : index
    %232 = vector.load %arg15[%c0_116, %c0_117] : memref<2x32xf32, #tpu.memory_space<vmem>>, vector<2x32xf32>
    tpu.vector_store %arg15[%c0_116, %c0_117], %228 {strides = array<i32>} : memref<2x32xf32, #tpu.memory_space<vmem>>, vector<2x32xf32>,
    %c0_118 = arith.constant 0 : index
    %c2 = arith.constant 2 : index
    %c0_119 = arith.constant 0 : index
    %233 = vector.load %arg10[%c0_118, %c2, %c0_119] : memref<2x8x32xf32, #tpu.memory_space<vmem>>, vector<2x1x32xf32>
    %234 = vector.shape_cast %233 : vector<2x1x32xf32> to vector<2x32xf32>
    %235 = vector.shape_cast %230 : vector<2x32xf32> to vector<2x1x32xf32>
    tpu.vector_store %arg10[%c0_118, %c2, %c0_119], %235 {strides = array<i32>} : memref<2x8x32xf32, #tpu.memory_space<vmem>>, vector<2x1x32xf32>,
    %236 = vector.extract_strided_slice %18 {offsets = [0, 5, 0], sizes = [2, 1, 128], strides = [1, 1, 1]} : vector<2x8x128xf32> to vector<2x1x128xf32>
    %237 = vector.shape_cast %236 : vector<2x1x128xf32> to vector<2x128xf32>
    %c0_120 = arith.constant 0 : index
    %c0_121 = arith.constant 0 : index
    %238 = vector.load %arg16[%c0_120, %c0_121] : memref<2x32xf32, #tpu.memory_space<vmem>>, vector<2x32xf32>
    %c0_122 = arith.constant 0 : index
    %c0_123 = arith.constant 0 : index
    %239 = vector.load %arg17[%c0_122, %c0_123] : memref<2x32xf32, #tpu.memory_space<vmem>>, vector<2x32xf32>
    %240 = arith.truncf %238 : vector<2x32xf32> to vector<2x32xbf16>
    %cst_124 = arith.constant dense<0.000000e+00> : vector<2x128xf32>
    %241 = tpu.matmul %240, %20, %cst_124 {dimension_numbers = #tpu.dot_dimension_numbers<[1], [0], [0], [1], [0, 0, 1, 1], [], []>} : vector<2x32xbf16>, vector<32x128xbf16>, vector<2x128xf32> -> vector<2x128xf32>
    %242 = arith.addf %237, %241 : vector<2x128xf32>
    %243 = vector.extract_strided_slice %242 {offsets = [0, 0], sizes = [2, 32], strides = [1, 1]} : vector<2x128xf32> to vector<2x32xf32>
    %cst_125 = arith.constant 5.000000e-01 : f32
    %244 = vector.broadcast %cst_125 : f32 to vector<2x32xf32>
    %245 = arith.mulf %244, %243 : vector<2x32xf32>
    %246 = math.tanh %245 : vector<2x32xf32>
    %cst_126 = arith.constant 5.000000e-01 : f32
    %247 = vector.broadcast %cst_126 : f32 to vector<2x32xf32>
    %248 = arith.mulf %247, %246 : vector<2x32xf32>
    %cst_127 = arith.constant 5.000000e-01 : f32
    %249 = vector.broadcast %cst_127 : f32 to vector<2x32xf32>
    %250 = arith.addf %248, %249 : vector<2x32xf32>
    %251 = vector.extract_strided_slice %242 {offsets = [0, 32], sizes = [2, 32], strides = [1, 1]} : vector<2x128xf32> to vector<2x32xf32>
    %cst_128 = arith.constant 5.000000e-01 : f32
    %252 = vector.broadcast %cst_128 : f32 to vector<2x32xf32>
    %253 = arith.mulf %252, %251 : vector<2x32xf32>
    %254 = math.tanh %253 : vector<2x32xf32>
    %cst_129 = arith.constant 5.000000e-01 : f32
    %255 = vector.broadcast %cst_129 : f32 to vector<2x32xf32>
    %256 = arith.mulf %255, %254 : vector<2x32xf32>
    %cst_130 = arith.constant 5.000000e-01 : f32
    %257 = vector.broadcast %cst_130 : f32 to vector<2x32xf32>
    %258 = arith.addf %256, %257 : vector<2x32xf32>
    %259 = vector.extract_strided_slice %242 {offsets = [0, 64], sizes = [2, 32], strides = [1, 1]} : vector<2x128xf32> to vector<2x32xf32>
    %260 = math.tanh %259 : vector<2x32xf32>
    %261 = vector.extract_strided_slice %242 {offsets = [0, 96], sizes = [2, 32], strides = [1, 1]} : vector<2x128xf32> to vector<2x32xf32>
    %cst_131 = arith.constant 5.000000e-01 : f32
    %262 = vector.broadcast %cst_131 : f32 to vector<2x32xf32>
    %263 = arith.mulf %262, %261 : vector<2x32xf32>
    %264 = math.tanh %263 : vector<2x32xf32>
    %cst_132 = arith.constant 5.000000e-01 : f32
    %265 = vector.broadcast %cst_132 : f32 to vector<2x32xf32>
    %266 = arith.mulf %265, %264 : vector<2x32xf32>
    %cst_133 = arith.constant 5.000000e-01 : f32
    %267 = vector.broadcast %cst_133 : f32 to vector<2x32xf32>
    %268 = arith.addf %266, %267 : vector<2x32xf32>
    %269 = arith.mulf %258, %239 : vector<2x32xf32>
    %270 = arith.mulf %250, %260 : vector<2x32xf32>
    %271 = arith.addf %269, %270 : vector<2x32xf32>
    %272 = math.tanh %271 : vector<2x32xf32>
    %273 = arith.mulf %268, %272 : vector<2x32xf32>
    %c0_134 = arith.constant 0 : index
    %c0_135 = arith.constant 0 : index
    %274 = vector.load %arg16[%c0_134, %c0_135] : memref<2x32xf32, #tpu.memory_space<vmem>>, vector<2x32xf32>
    tpu.vector_store %arg16[%c0_134, %c0_135], %273 {strides = array<i32>} : memref<2x32xf32, #tpu.memory_space<vmem>>, vector<2x32xf32>,
    %c0_136 = arith.constant 0 : index
    %c0_137 = arith.constant 0 : index
    %275 = vector.load %arg17[%c0_136, %c0_137] : memref<2x32xf32, #tpu.memory_space<vmem>>, vector<2x32xf32>
    tpu.vector_store %arg17[%c0_136, %c0_137], %271 {strides = array<i32>} : memref<2x32xf32, #tpu.memory_space<vmem>>, vector<2x32xf32>,
    %c0_138 = arith.constant 0 : index
    %c5 = arith.constant 5 : index
    %c0_139 = arith.constant 0 : index
    %276 = vector.load %arg11[%c0_138, %c5, %c0_139] : memref<2x8x32xf32, #tpu.memory_space<vmem>>, vector<2x1x32xf32>
    %277 = vector.shape_cast %276 : vector<2x1x32xf32> to vector<2x32xf32>
    %278 = vector.shape_cast %273 : vector<2x32xf32> to vector<2x1x32xf32>
    tpu.vector_store %arg11[%c0_138, %c5, %c0_139], %278 {strides = array<i32>} : memref<2x8x32xf32, #tpu.memory_space<vmem>>, vector<2x1x32xf32>,
    %279 = vector.extract_strided_slice %10 {offsets = [0, 3, 0], sizes = [2, 1, 128], strides = [1, 1, 1]} : vector<2x8x128xf32> to vector<2x1x128xf32>
    %280 = vector.shape_cast %279 : vector<2x1x128xf32> to vector<2x128xf32>
    %c0_140 = arith.constant 0 : index
    %c0_141 = arith.constant 0 : index
    %281 = vector.load %arg14[%c0_140, %c0_141] : memref<2x32xf32, #tpu.memory_space<vmem>>, vector<2x32xf32>
    %c0_142 = arith.constant 0 : index
    %c0_143 = arith.constant 0 : index
    %282 = vector.load %arg15[%c0_142, %c0_143] : memref<2x32xf32, #tpu.memory_space<vmem>>, vector<2x32xf32>
    %283 = arith.truncf %281 : vector<2x32xf32> to vector<2x32xbf16>
    %cst_144 = arith.constant dense<0.000000e+00> : vector<2x128xf32>
    %284 = tpu.matmul %283, %19, %cst_144 {dimension_numbers = #tpu.dot_dimension_numbers<[1], [0], [0], [1], [0, 0, 1, 1], [], []>} : vector<2x32xbf16>, vector<32x128xbf16>, vector<2x128xf32> -> vector<2x128xf32>
    %285 = arith.addf %280, %284 : vector<2x128xf32>
    %286 = vector.extract_strided_slice %285 {offsets = [0, 0], sizes = [2, 32], strides = [1, 1]} : vector<2x128xf32> to vector<2x32xf32>
    %cst_145 = arith.constant 5.000000e-01 : f32
    %287 = vector.broadcast %cst_145 : f32 to vector<2x32xf32>
    %288 = arith.mulf %287, %286 : vector<2x32xf32>
    %289 = math.tanh %288 : vector<2x32xf32>
    %cst_146 = arith.constant 5.000000e-01 : f32
    %290 = vector.broadcast %cst_146 : f32 to vector<2x32xf32>
    %291 = arith.mulf %290, %289 : vector<2x32xf32>
    %cst_147 = arith.constant 5.000000e-01 : f32
    %292 = vector.broadcast %cst_147 : f32 to vector<2x32xf32>
    %293 = arith.addf %291, %292 : vector<2x32xf32>
    %294 = vector.extract_strided_slice %285 {offsets = [0, 32], sizes = [2, 32], strides = [1, 1]} : vector<2x128xf32> to vector<2x32xf32>
    %cst_148 = arith.constant 5.000000e-01 : f32
    %295 = vector.broadcast %cst_148 : f32 to vector<2x32xf32>
    %296 = arith.mulf %295, %294 : vector<2x32xf32>
    %297 = math.tanh %296 : vector<2x32xf32>
    %cst_149 = arith.constant 5.000000e-01 : f32
    %298 = vector.broadcast %cst_149 : f32 to vector<2x32xf32>
    %299 = arith.mulf %298, %297 : vector<2x32xf32>
    %cst_150 = arith.constant 5.000000e-01 : f32
    %300 = vector.broadcast %cst_150 : f32 to vector<2x32xf32>
    %301 = arith.addf %299, %300 : vector<2x32xf32>
    %302 = vector.extract_strided_slice %285 {offsets = [0, 64], sizes = [2, 32], strides = [1, 1]} : vector<2x128xf32> to vector<2x32xf32>
    %303 = math.tanh %302 : vector<2x32xf32>
    %304 = vector.extract_strided_slice %285 {offsets = [0, 96], sizes = [2, 32], strides = [1, 1]} : vector<2x128xf32> to vector<2x32xf32>
    %cst_151 = arith.constant 5.000000e-01 : f32
    %305 = vector.broadcast %cst_151 : f32 to vector<2x32xf32>
    %306 = arith.mulf %305, %304 : vector<2x32xf32>
    %307 = math.tanh %306 : vector<2x32xf32>
    %cst_152 = arith.constant 5.000000e-01 : f32
    %308 = vector.broadcast %cst_152 : f32 to vector<2x32xf32>
    %309 = arith.mulf %308, %307 : vector<2x32xf32>
    %cst_153 = arith.constant 5.000000e-01 : f32
    %310 = vector.broadcast %cst_153 : f32 to vector<2x32xf32>
    %311 = arith.addf %309, %310 : vector<2x32xf32>
    %312 = arith.mulf %301, %282 : vector<2x32xf32>
    %313 = arith.mulf %293, %303 : vector<2x32xf32>
    %314 = arith.addf %312, %313 : vector<2x32xf32>
    %315 = math.tanh %314 : vector<2x32xf32>
    %316 = arith.mulf %311, %315 : vector<2x32xf32>
    %c0_154 = arith.constant 0 : index
    %c0_155 = arith.constant 0 : index
    %317 = vector.load %arg14[%c0_154, %c0_155] : memref<2x32xf32, #tpu.memory_space<vmem>>, vector<2x32xf32>
    tpu.vector_store %arg14[%c0_154, %c0_155], %316 {strides = array<i32>} : memref<2x32xf32, #tpu.memory_space<vmem>>, vector<2x32xf32>,
    %c0_156 = arith.constant 0 : index
    %c0_157 = arith.constant 0 : index
    %318 = vector.load %arg15[%c0_156, %c0_157] : memref<2x32xf32, #tpu.memory_space<vmem>>, vector<2x32xf32>
    tpu.vector_store %arg15[%c0_156, %c0_157], %314 {strides = array<i32>} : memref<2x32xf32, #tpu.memory_space<vmem>>, vector<2x32xf32>,
    %c0_158 = arith.constant 0 : index
    %c3 = arith.constant 3 : index
    %c0_159 = arith.constant 0 : index
    %319 = vector.load %arg10[%c0_158, %c3, %c0_159] : memref<2x8x32xf32, #tpu.memory_space<vmem>>, vector<2x1x32xf32>
    %320 = vector.shape_cast %319 : vector<2x1x32xf32> to vector<2x32xf32>
    %321 = vector.shape_cast %316 : vector<2x32xf32> to vector<2x1x32xf32>
    tpu.vector_store %arg10[%c0_158, %c3, %c0_159], %321 {strides = array<i32>} : memref<2x8x32xf32, #tpu.memory_space<vmem>>, vector<2x1x32xf32>,
    %322 = vector.extract_strided_slice %18 {offsets = [0, 4, 0], sizes = [2, 1, 128], strides = [1, 1, 1]} : vector<2x8x128xf32> to vector<2x1x128xf32>
    %323 = vector.shape_cast %322 : vector<2x1x128xf32> to vector<2x128xf32>
    %c0_160 = arith.constant 0 : index
    %c0_161 = arith.constant 0 : index
    %324 = vector.load %arg16[%c0_160, %c0_161] : memref<2x32xf32, #tpu.memory_space<vmem>>, vector<2x32xf32>
    %c0_162 = arith.constant 0 : index
    %c0_163 = arith.constant 0 : index
    %325 = vector.load %arg17[%c0_162, %c0_163] : memref<2x32xf32, #tpu.memory_space<vmem>>, vector<2x32xf32>
    %326 = arith.truncf %324 : vector<2x32xf32> to vector<2x32xbf16>
    %cst_164 = arith.constant dense<0.000000e+00> : vector<2x128xf32>
    %327 = tpu.matmul %326, %20, %cst_164 {dimension_numbers = #tpu.dot_dimension_numbers<[1], [0], [0], [1], [0, 0, 1, 1], [], []>} : vector<2x32xbf16>, vector<32x128xbf16>, vector<2x128xf32> -> vector<2x128xf32>
    %328 = arith.addf %323, %327 : vector<2x128xf32>
    %329 = vector.extract_strided_slice %328 {offsets = [0, 0], sizes = [2, 32], strides = [1, 1]} : vector<2x128xf32> to vector<2x32xf32>
    %cst_165 = arith.constant 5.000000e-01 : f32
    %330 = vector.broadcast %cst_165 : f32 to vector<2x32xf32>
    %331 = arith.mulf %330, %329 : vector<2x32xf32>
    %332 = math.tanh %331 : vector<2x32xf32>
    %cst_166 = arith.constant 5.000000e-01 : f32
    %333 = vector.broadcast %cst_166 : f32 to vector<2x32xf32>
    %334 = arith.mulf %333, %332 : vector<2x32xf32>
    %cst_167 = arith.constant 5.000000e-01 : f32
    %335 = vector.broadcast %cst_167 : f32 to vector<2x32xf32>
    %336 = arith.addf %334, %335 : vector<2x32xf32>
    %337 = vector.extract_strided_slice %328 {offsets = [0, 32], sizes = [2, 32], strides = [1, 1]} : vector<2x128xf32> to vector<2x32xf32>
    %cst_168 = arith.constant 5.000000e-01 : f32
    %338 = vector.broadcast %cst_168 : f32 to vector<2x32xf32>
    %339 = arith.mulf %338, %337 : vector<2x32xf32>
    %340 = math.tanh %339 : vector<2x32xf32>
    %cst_169 = arith.constant 5.000000e-01 : f32
    %341 = vector.broadcast %cst_169 : f32 to vector<2x32xf32>
    %342 = arith.mulf %341, %340 : vector<2x32xf32>
    %cst_170 = arith.constant 5.000000e-01 : f32
    %343 = vector.broadcast %cst_170 : f32 to vector<2x32xf32>
    %344 = arith.addf %342, %343 : vector<2x32xf32>
    %345 = vector.extract_strided_slice %328 {offsets = [0, 64], sizes = [2, 32], strides = [1, 1]} : vector<2x128xf32> to vector<2x32xf32>
    %346 = math.tanh %345 : vector<2x32xf32>
    %347 = vector.extract_strided_slice %328 {offsets = [0, 96], sizes = [2, 32], strides = [1, 1]} : vector<2x128xf32> to vector<2x32xf32>
    %cst_171 = arith.constant 5.000000e-01 : f32
    %348 = vector.broadcast %cst_171 : f32 to vector<2x32xf32>
    %349 = arith.mulf %348, %347 : vector<2x32xf32>
    %350 = math.tanh %349 : vector<2x32xf32>
    %cst_172 = arith.constant 5.000000e-01 : f32
    %351 = vector.broadcast %cst_172 : f32 to vector<2x32xf32>
    %352 = arith.mulf %351, %350 : vector<2x32xf32>
    %cst_173 = arith.constant 5.000000e-01 : f32
    %353 = vector.broadcast %cst_173 : f32 to vector<2x32xf32>
    %354 = arith.addf %352, %353 : vector<2x32xf32>
    %355 = arith.mulf %344, %325 : vector<2x32xf32>
    %356 = arith.mulf %336, %346 : vector<2x32xf32>
    %357 = arith.addf %355, %356 : vector<2x32xf32>
    %358 = math.tanh %357 : vector<2x32xf32>
    %359 = arith.mulf %354, %358 : vector<2x32xf32>
    %c0_174 = arith.constant 0 : index
    %c0_175 = arith.constant 0 : index
    %360 = vector.load %arg16[%c0_174, %c0_175] : memref<2x32xf32, #tpu.memory_space<vmem>>, vector<2x32xf32>
    tpu.vector_store %arg16[%c0_174, %c0_175], %359 {strides = array<i32>} : memref<2x32xf32, #tpu.memory_space<vmem>>, vector<2x32xf32>,
    %c0_176 = arith.constant 0 : index
    %c0_177 = arith.constant 0 : index
    %361 = vector.load %arg17[%c0_176, %c0_177] : memref<2x32xf32, #tpu.memory_space<vmem>>, vector<2x32xf32>
    tpu.vector_store %arg17[%c0_176, %c0_177], %357 {strides = array<i32>} : memref<2x32xf32, #tpu.memory_space<vmem>>, vector<2x32xf32>,
    %c0_178 = arith.constant 0 : index
    %c4 = arith.constant 4 : index
    %c0_179 = arith.constant 0 : index
    %362 = vector.load %arg11[%c0_178, %c4, %c0_179] : memref<2x8x32xf32, #tpu.memory_space<vmem>>, vector<2x1x32xf32>
    %363 = vector.shape_cast %362 : vector<2x1x32xf32> to vector<2x32xf32>
    %364 = vector.shape_cast %359 : vector<2x32xf32> to vector<2x1x32xf32>
    tpu.vector_store %arg11[%c0_178, %c4, %c0_179], %364 {strides = array<i32>} : memref<2x8x32xf32, #tpu.memory_space<vmem>>, vector<2x1x32xf32>,
    %365 = vector.extract_strided_slice %10 {offsets = [0, 4, 0], sizes = [2, 1, 128], strides = [1, 1, 1]} : vector<2x8x128xf32> to vector<2x1x128xf32>
    %366 = vector.shape_cast %365 : vector<2x1x128xf32> to vector<2x128xf32>
    %c0_180 = arith.constant 0 : index
    %c0_181 = arith.constant 0 : index
    %367 = vector.load %arg14[%c0_180, %c0_181] : memref<2x32xf32, #tpu.memory_space<vmem>>, vector<2x32xf32>
    %c0_182 = arith.constant 0 : index
    %c0_183 = arith.constant 0 : index
    %368 = vector.load %arg15[%c0_182, %c0_183] : memref<2x32xf32, #tpu.memory_space<vmem>>, vector<2x32xf32>
    %369 = arith.truncf %367 : vector<2x32xf32> to vector<2x32xbf16>
    %cst_184 = arith.constant dense<0.000000e+00> : vector<2x128xf32>
    %370 = tpu.matmul %369, %19, %cst_184 {dimension_numbers = #tpu.dot_dimension_numbers<[1], [0], [0], [1], [0, 0, 1, 1], [], []>} : vector<2x32xbf16>, vector<32x128xbf16>, vector<2x128xf32> -> vector<2x128xf32>
    %371 = arith.addf %366, %370 : vector<2x128xf32>
    %372 = vector.extract_strided_slice %371 {offsets = [0, 0], sizes = [2, 32], strides = [1, 1]} : vector<2x128xf32> to vector<2x32xf32>
    %cst_185 = arith.constant 5.000000e-01 : f32
    %373 = vector.broadcast %cst_185 : f32 to vector<2x32xf32>
    %374 = arith.mulf %373, %372 : vector<2x32xf32>
    %375 = math.tanh %374 : vector<2x32xf32>
    %cst_186 = arith.constant 5.000000e-01 : f32
    %376 = vector.broadcast %cst_186 : f32 to vector<2x32xf32>
    %377 = arith.mulf %376, %375 : vector<2x32xf32>
    %cst_187 = arith.constant 5.000000e-01 : f32
    %378 = vector.broadcast %cst_187 : f32 to vector<2x32xf32>
    %379 = arith.addf %377, %378 : vector<2x32xf32>
    %380 = vector.extract_strided_slice %371 {offsets = [0, 32], sizes = [2, 32], strides = [1, 1]} : vector<2x128xf32> to vector<2x32xf32>
    %cst_188 = arith.constant 5.000000e-01 : f32
    %381 = vector.broadcast %cst_188 : f32 to vector<2x32xf32>
    %382 = arith.mulf %381, %380 : vector<2x32xf32>
    %383 = math.tanh %382 : vector<2x32xf32>
    %cst_189 = arith.constant 5.000000e-01 : f32
    %384 = vector.broadcast %cst_189 : f32 to vector<2x32xf32>
    %385 = arith.mulf %384, %383 : vector<2x32xf32>
    %cst_190 = arith.constant 5.000000e-01 : f32
    %386 = vector.broadcast %cst_190 : f32 to vector<2x32xf32>
    %387 = arith.addf %385, %386 : vector<2x32xf32>
    %388 = vector.extract_strided_slice %371 {offsets = [0, 64], sizes = [2, 32], strides = [1, 1]} : vector<2x128xf32> to vector<2x32xf32>
    %389 = math.tanh %388 : vector<2x32xf32>
    %390 = vector.extract_strided_slice %371 {offsets = [0, 96], sizes = [2, 32], strides = [1, 1]} : vector<2x128xf32> to vector<2x32xf32>
    %cst_191 = arith.constant 5.000000e-01 : f32
    %391 = vector.broadcast %cst_191 : f32 to vector<2x32xf32>
    %392 = arith.mulf %391, %390 : vector<2x32xf32>
    %393 = math.tanh %392 : vector<2x32xf32>
    %cst_192 = arith.constant 5.000000e-01 : f32
    %394 = vector.broadcast %cst_192 : f32 to vector<2x32xf32>
    %395 = arith.mulf %394, %393 : vector<2x32xf32>
    %cst_193 = arith.constant 5.000000e-01 : f32
    %396 = vector.broadcast %cst_193 : f32 to vector<2x32xf32>
    %397 = arith.addf %395, %396 : vector<2x32xf32>
    %398 = arith.mulf %387, %368 : vector<2x32xf32>
    %399 = arith.mulf %379, %389 : vector<2x32xf32>
    %400 = arith.addf %398, %399 : vector<2x32xf32>
    %401 = math.tanh %400 : vector<2x32xf32>
    %402 = arith.mulf %397, %401 : vector<2x32xf32>
    %c0_194 = arith.constant 0 : index
    %c0_195 = arith.constant 0 : index
    %403 = vector.load %arg14[%c0_194, %c0_195] : memref<2x32xf32, #tpu.memory_space<vmem>>, vector<2x32xf32>
    tpu.vector_store %arg14[%c0_194, %c0_195], %402 {strides = array<i32>} : memref<2x32xf32, #tpu.memory_space<vmem>>, vector<2x32xf32>,
    %c0_196 = arith.constant 0 : index
    %c0_197 = arith.constant 0 : index
    %404 = vector.load %arg15[%c0_196, %c0_197] : memref<2x32xf32, #tpu.memory_space<vmem>>, vector<2x32xf32>
    tpu.vector_store %arg15[%c0_196, %c0_197], %400 {strides = array<i32>} : memref<2x32xf32, #tpu.memory_space<vmem>>, vector<2x32xf32>,
    %c0_198 = arith.constant 0 : index
    %c4_199 = arith.constant 4 : index
    %c0_200 = arith.constant 0 : index
    %405 = vector.load %arg10[%c0_198, %c4_199, %c0_200] : memref<2x8x32xf32, #tpu.memory_space<vmem>>, vector<2x1x32xf32>
    %406 = vector.shape_cast %405 : vector<2x1x32xf32> to vector<2x32xf32>
    %407 = vector.shape_cast %402 : vector<2x32xf32> to vector<2x1x32xf32>
    tpu.vector_store %arg10[%c0_198, %c4_199, %c0_200], %407 {strides = array<i32>} : memref<2x8x32xf32, #tpu.memory_space<vmem>>, vector<2x1x32xf32>,
    %408 = vector.extract_strided_slice %18 {offsets = [0, 3, 0], sizes = [2, 1, 128], strides = [1, 1, 1]} : vector<2x8x128xf32> to vector<2x1x128xf32>
    %409 = vector.shape_cast %408 : vector<2x1x128xf32> to vector<2x128xf32>
    %c0_201 = arith.constant 0 : index
    %c0_202 = arith.constant 0 : index
    %410 = vector.load %arg16[%c0_201, %c0_202] : memref<2x32xf32, #tpu.memory_space<vmem>>, vector<2x32xf32>
    %c0_203 = arith.constant 0 : index
    %c0_204 = arith.constant 0 : index
    %411 = vector.load %arg17[%c0_203, %c0_204] : memref<2x32xf32, #tpu.memory_space<vmem>>, vector<2x32xf32>
    %412 = arith.truncf %410 : vector<2x32xf32> to vector<2x32xbf16>
    %cst_205 = arith.constant dense<0.000000e+00> : vector<2x128xf32>
    %413 = tpu.matmul %412, %20, %cst_205 {dimension_numbers = #tpu.dot_dimension_numbers<[1], [0], [0], [1], [0, 0, 1, 1], [], []>} : vector<2x32xbf16>, vector<32x128xbf16>, vector<2x128xf32> -> vector<2x128xf32>
    %414 = arith.addf %409, %413 : vector<2x128xf32>
    %415 = vector.extract_strided_slice %414 {offsets = [0, 0], sizes = [2, 32], strides = [1, 1]} : vector<2x128xf32> to vector<2x32xf32>
    %cst_206 = arith.constant 5.000000e-01 : f32
    %416 = vector.broadcast %cst_206 : f32 to vector<2x32xf32>
    %417 = arith.mulf %416, %415 : vector<2x32xf32>
    %418 = math.tanh %417 : vector<2x32xf32>
    %cst_207 = arith.constant 5.000000e-01 : f32
    %419 = vector.broadcast %cst_207 : f32 to vector<2x32xf32>
    %420 = arith.mulf %419, %418 : vector<2x32xf32>
    %cst_208 = arith.constant 5.000000e-01 : f32
    %421 = vector.broadcast %cst_208 : f32 to vector<2x32xf32>
    %422 = arith.addf %420, %421 : vector<2x32xf32>
    %423 = vector.extract_strided_slice %414 {offsets = [0, 32], sizes = [2, 32], strides = [1, 1]} : vector<2x128xf32> to vector<2x32xf32>
    %cst_209 = arith.constant 5.000000e-01 : f32
    %424 = vector.broadcast %cst_209 : f32 to vector<2x32xf32>
    %425 = arith.mulf %424, %423 : vector<2x32xf32>
    %426 = math.tanh %425 : vector<2x32xf32>
    %cst_210 = arith.constant 5.000000e-01 : f32
    %427 = vector.broadcast %cst_210 : f32 to vector<2x32xf32>
    %428 = arith.mulf %427, %426 : vector<2x32xf32>
    %cst_211 = arith.constant 5.000000e-01 : f32
    %429 = vector.broadcast %cst_211 : f32 to vector<2x32xf32>
    %430 = arith.addf %428, %429 : vector<2x32xf32>
    %431 = vector.extract_strided_slice %414 {offsets = [0, 64], sizes = [2, 32], strides = [1, 1]} : vector<2x128xf32> to vector<2x32xf32>
    %432 = math.tanh %431 : vector<2x32xf32>
    %433 = vector.extract_strided_slice %414 {offsets = [0, 96], sizes = [2, 32], strides = [1, 1]} : vector<2x128xf32> to vector<2x32xf32>
    %cst_212 = arith.constant 5.000000e-01 : f32
    %434 = vector.broadcast %cst_212 : f32 to vector<2x32xf32>
    %435 = arith.mulf %434, %433 : vector<2x32xf32>
    %436 = math.tanh %435 : vector<2x32xf32>
    %cst_213 = arith.constant 5.000000e-01 : f32
    %437 = vector.broadcast %cst_213 : f32 to vector<2x32xf32>
    %438 = arith.mulf %437, %436 : vector<2x32xf32>
    %cst_214 = arith.constant 5.000000e-01 : f32
    %439 = vector.broadcast %cst_214 : f32 to vector<2x32xf32>
    %440 = arith.addf %438, %439 : vector<2x32xf32>
    %441 = arith.mulf %430, %411 : vector<2x32xf32>
    %442 = arith.mulf %422, %432 : vector<2x32xf32>
    %443 = arith.addf %441, %442 : vector<2x32xf32>
    %444 = math.tanh %443 : vector<2x32xf32>
    %445 = arith.mulf %440, %444 : vector<2x32xf32>
    %c0_215 = arith.constant 0 : index
    %c0_216 = arith.constant 0 : index
    %446 = vector.load %arg16[%c0_215, %c0_216] : memref<2x32xf32, #tpu.memory_space<vmem>>, vector<2x32xf32>
    tpu.vector_store %arg16[%c0_215, %c0_216], %445 {strides = array<i32>} : memref<2x32xf32, #tpu.memory_space<vmem>>, vector<2x32xf32>,
    %c0_217 = arith.constant 0 : index
    %c0_218 = arith.constant 0 : index
    %447 = vector.load %arg17[%c0_217, %c0_218] : memref<2x32xf32, #tpu.memory_space<vmem>>, vector<2x32xf32>
    tpu.vector_store %arg17[%c0_217, %c0_218], %443 {strides = array<i32>} : memref<2x32xf32, #tpu.memory_space<vmem>>, vector<2x32xf32>,
    %c0_219 = arith.constant 0 : index
    %c3_220 = arith.constant 3 : index
    %c0_221 = arith.constant 0 : index
    %448 = vector.load %arg11[%c0_219, %c3_220, %c0_221] : memref<2x8x32xf32, #tpu.memory_space<vmem>>, vector<2x1x32xf32>
    %449 = vector.shape_cast %448 : vector<2x1x32xf32> to vector<2x32xf32>
    %450 = vector.shape_cast %445 : vector<2x32xf32> to vector<2x1x32xf32>
    tpu.vector_store %arg11[%c0_219, %c3_220, %c0_221], %450 {strides = array<i32>} : memref<2x8x32xf32, #tpu.memory_space<vmem>>, vector<2x1x32xf32>,
    %451 = vector.extract_strided_slice %10 {offsets = [0, 5, 0], sizes = [2, 1, 128], strides = [1, 1, 1]} : vector<2x8x128xf32> to vector<2x1x128xf32>
    %452 = vector.shape_cast %451 : vector<2x1x128xf32> to vector<2x128xf32>
    %c0_222 = arith.constant 0 : index
    %c0_223 = arith.constant 0 : index
    %453 = vector.load %arg14[%c0_222, %c0_223] : memref<2x32xf32, #tpu.memory_space<vmem>>, vector<2x32xf32>
    %c0_224 = arith.constant 0 : index
    %c0_225 = arith.constant 0 : index
    %454 = vector.load %arg15[%c0_224, %c0_225] : memref<2x32xf32, #tpu.memory_space<vmem>>, vector<2x32xf32>
    %455 = arith.truncf %453 : vector<2x32xf32> to vector<2x32xbf16>
    %cst_226 = arith.constant dense<0.000000e+00> : vector<2x128xf32>
    %456 = tpu.matmul %455, %19, %cst_226 {dimension_numbers = #tpu.dot_dimension_numbers<[1], [0], [0], [1], [0, 0, 1, 1], [], []>} : vector<2x32xbf16>, vector<32x128xbf16>, vector<2x128xf32> -> vector<2x128xf32>
    %457 = arith.addf %452, %456 : vector<2x128xf32>
    %458 = vector.extract_strided_slice %457 {offsets = [0, 0], sizes = [2, 32], strides = [1, 1]} : vector<2x128xf32> to vector<2x32xf32>
    %cst_227 = arith.constant 5.000000e-01 : f32
    %459 = vector.broadcast %cst_227 : f32 to vector<2x32xf32>
    %460 = arith.mulf %459, %458 : vector<2x32xf32>
    %461 = math.tanh %460 : vector<2x32xf32>
    %cst_228 = arith.constant 5.000000e-01 : f32
    %462 = vector.broadcast %cst_228 : f32 to vector<2x32xf32>
    %463 = arith.mulf %462, %461 : vector<2x32xf32>
    %cst_229 = arith.constant 5.000000e-01 : f32
    %464 = vector.broadcast %cst_229 : f32 to vector<2x32xf32>
    %465 = arith.addf %463, %464 : vector<2x32xf32>
    %466 = vector.extract_strided_slice %457 {offsets = [0, 32], sizes = [2, 32], strides = [1, 1]} : vector<2x128xf32> to vector<2x32xf32>
    %cst_230 = arith.constant 5.000000e-01 : f32
    %467 = vector.broadcast %cst_230 : f32 to vector<2x32xf32>
    %468 = arith.mulf %467, %466 : vector<2x32xf32>
    %469 = math.tanh %468 : vector<2x32xf32>
    %cst_231 = arith.constant 5.000000e-01 : f32
    %470 = vector.broadcast %cst_231 : f32 to vector<2x32xf32>
    %471 = arith.mulf %470, %469 : vector<2x32xf32>
    %cst_232 = arith.constant 5.000000e-01 : f32
    %472 = vector.broadcast %cst_232 : f32 to vector<2x32xf32>
    %473 = arith.addf %471, %472 : vector<2x32xf32>
    %474 = vector.extract_strided_slice %457 {offsets = [0, 64], sizes = [2, 32], strides = [1, 1]} : vector<2x128xf32> to vector<2x32xf32>
    %475 = math.tanh %474 : vector<2x32xf32>
    %476 = vector.extract_strided_slice %457 {offsets = [0, 96], sizes = [2, 32], strides = [1, 1]} : vector<2x128xf32> to vector<2x32xf32>
    %cst_233 = arith.constant 5.000000e-01 : f32
    %477 = vector.broadcast %cst_233 : f32 to vector<2x32xf32>
    %478 = arith.mulf %477, %476 : vector<2x32xf32>
    %479 = math.tanh %478 : vector<2x32xf32>
    %cst_234 = arith.constant 5.000000e-01 : f32
    %480 = vector.broadcast %cst_234 : f32 to vector<2x32xf32>
    %481 = arith.mulf %480, %479 : vector<2x32xf32>
    %cst_235 = arith.constant 5.000000e-01 : f32
    %482 = vector.broadcast %cst_235 : f32 to vector<2x32xf32>
    %483 = arith.addf %481, %482 : vector<2x32xf32>
    %484 = arith.mulf %473, %454 : vector<2x32xf32>
    %485 = arith.mulf %465, %475 : vector<2x32xf32>
    %486 = arith.addf %484, %485 : vector<2x32xf32>
    %487 = math.tanh %486 : vector<2x32xf32>
    %488 = arith.mulf %483, %487 : vector<2x32xf32>
    %c0_236 = arith.constant 0 : index
    %c0_237 = arith.constant 0 : index
    %489 = vector.load %arg14[%c0_236, %c0_237] : memref<2x32xf32, #tpu.memory_space<vmem>>, vector<2x32xf32>
    tpu.vector_store %arg14[%c0_236, %c0_237], %488 {strides = array<i32>} : memref<2x32xf32, #tpu.memory_space<vmem>>, vector<2x32xf32>,
    %c0_238 = arith.constant 0 : index
    %c0_239 = arith.constant 0 : index
    %490 = vector.load %arg15[%c0_238, %c0_239] : memref<2x32xf32, #tpu.memory_space<vmem>>, vector<2x32xf32>
    tpu.vector_store %arg15[%c0_238, %c0_239], %486 {strides = array<i32>} : memref<2x32xf32, #tpu.memory_space<vmem>>, vector<2x32xf32>,
    %c0_240 = arith.constant 0 : index
    %c5_241 = arith.constant 5 : index
    %c0_242 = arith.constant 0 : index
    %491 = vector.load %arg10[%c0_240, %c5_241, %c0_242] : memref<2x8x32xf32, #tpu.memory_space<vmem>>, vector<2x1x32xf32>
    %492 = vector.shape_cast %491 : vector<2x1x32xf32> to vector<2x32xf32>
    %493 = vector.shape_cast %488 : vector<2x32xf32> to vector<2x1x32xf32>
    tpu.vector_store %arg10[%c0_240, %c5_241, %c0_242], %493 {strides = array<i32>} : memref<2x8x32xf32, #tpu.memory_space<vmem>>, vector<2x1x32xf32>,
    %494 = vector.extract_strided_slice %18 {offsets = [0, 2, 0], sizes = [2, 1, 128], strides = [1, 1, 1]} : vector<2x8x128xf32> to vector<2x1x128xf32>
    %495 = vector.shape_cast %494 : vector<2x1x128xf32> to vector<2x128xf32>
    %c0_243 = arith.constant 0 : index
    %c0_244 = arith.constant 0 : index
    %496 = vector.load %arg16[%c0_243, %c0_244] : memref<2x32xf32, #tpu.memory_space<vmem>>, vector<2x32xf32>
    %c0_245 = arith.constant 0 : index
    %c0_246 = arith.constant 0 : index
    %497 = vector.load %arg17[%c0_245, %c0_246] : memref<2x32xf32, #tpu.memory_space<vmem>>, vector<2x32xf32>
    %498 = arith.truncf %496 : vector<2x32xf32> to vector<2x32xbf16>
    %cst_247 = arith.constant dense<0.000000e+00> : vector<2x128xf32>
    %499 = tpu.matmul %498, %20, %cst_247 {dimension_numbers = #tpu.dot_dimension_numbers<[1], [0], [0], [1], [0, 0, 1, 1], [], []>} : vector<2x32xbf16>, vector<32x128xbf16>, vector<2x128xf32> -> vector<2x128xf32>
    %500 = arith.addf %495, %499 : vector<2x128xf32>
    %501 = vector.extract_strided_slice %500 {offsets = [0, 0], sizes = [2, 32], strides = [1, 1]} : vector<2x128xf32> to vector<2x32xf32>
    %cst_248 = arith.constant 5.000000e-01 : f32
    %502 = vector.broadcast %cst_248 : f32 to vector<2x32xf32>
    %503 = arith.mulf %502, %501 : vector<2x32xf32>
    %504 = math.tanh %503 : vector<2x32xf32>
    %cst_249 = arith.constant 5.000000e-01 : f32
    %505 = vector.broadcast %cst_249 : f32 to vector<2x32xf32>
    %506 = arith.mulf %505, %504 : vector<2x32xf32>
    %cst_250 = arith.constant 5.000000e-01 : f32
    %507 = vector.broadcast %cst_250 : f32 to vector<2x32xf32>
    %508 = arith.addf %506, %507 : vector<2x32xf32>
    %509 = vector.extract_strided_slice %500 {offsets = [0, 32], sizes = [2, 32], strides = [1, 1]} : vector<2x128xf32> to vector<2x32xf32>
    %cst_251 = arith.constant 5.000000e-01 : f32
    %510 = vector.broadcast %cst_251 : f32 to vector<2x32xf32>
    %511 = arith.mulf %510, %509 : vector<2x32xf32>
    %512 = math.tanh %511 : vector<2x32xf32>
    %cst_252 = arith.constant 5.000000e-01 : f32
    %513 = vector.broadcast %cst_252 : f32 to vector<2x32xf32>
    %514 = arith.mulf %513, %512 : vector<2x32xf32>
    %cst_253 = arith.constant 5.000000e-01 : f32
    %515 = vector.broadcast %cst_253 : f32 to vector<2x32xf32>
    %516 = arith.addf %514, %515 : vector<2x32xf32>
    %517 = vector.extract_strided_slice %500 {offsets = [0, 64], sizes = [2, 32], strides = [1, 1]} : vector<2x128xf32> to vector<2x32xf32>
    %518 = math.tanh %517 : vector<2x32xf32>
    %519 = vector.extract_strided_slice %500 {offsets = [0, 96], sizes = [2, 32], strides = [1, 1]} : vector<2x128xf32> to vector<2x32xf32>
    %cst_254 = arith.constant 5.000000e-01 : f32
    %520 = vector.broadcast %cst_254 : f32 to vector<2x32xf32>
    %521 = arith.mulf %520, %519 : vector<2x32xf32>
    %522 = math.tanh %521 : vector<2x32xf32>
    %cst_255 = arith.constant 5.000000e-01 : f32
    %523 = vector.broadcast %cst_255 : f32 to vector<2x32xf32>
    %524 = arith.mulf %523, %522 : vector<2x32xf32>
    %cst_256 = arith.constant 5.000000e-01 : f32
    %525 = vector.broadcast %cst_256 : f32 to vector<2x32xf32>
    %526 = arith.addf %524, %525 : vector<2x32xf32>
    %527 = arith.mulf %516, %497 : vector<2x32xf32>
    %528 = arith.mulf %508, %518 : vector<2x32xf32>
    %529 = arith.addf %527, %528 : vector<2x32xf32>
    %530 = math.tanh %529 : vector<2x32xf32>
    %531 = arith.mulf %526, %530 : vector<2x32xf32>
    %c0_257 = arith.constant 0 : index
    %c0_258 = arith.constant 0 : index
    %532 = vector.load %arg16[%c0_257, %c0_258] : memref<2x32xf32, #tpu.memory_space<vmem>>, vector<2x32xf32>
    tpu.vector_store %arg16[%c0_257, %c0_258], %531 {strides = array<i32>} : memref<2x32xf32, #tpu.memory_space<vmem>>, vector<2x32xf32>,
    %c0_259 = arith.constant 0 : index
    %c0_260 = arith.constant 0 : index
    %533 = vector.load %arg17[%c0_259, %c0_260] : memref<2x32xf32, #tpu.memory_space<vmem>>, vector<2x32xf32>
    tpu.vector_store %arg17[%c0_259, %c0_260], %529 {strides = array<i32>} : memref<2x32xf32, #tpu.memory_space<vmem>>, vector<2x32xf32>,
    %c0_261 = arith.constant 0 : index
    %c2_262 = arith.constant 2 : index
    %c0_263 = arith.constant 0 : index
    %534 = vector.load %arg11[%c0_261, %c2_262, %c0_263] : memref<2x8x32xf32, #tpu.memory_space<vmem>>, vector<2x1x32xf32>
    %535 = vector.shape_cast %534 : vector<2x1x32xf32> to vector<2x32xf32>
    %536 = vector.shape_cast %531 : vector<2x32xf32> to vector<2x1x32xf32>
    tpu.vector_store %arg11[%c0_261, %c2_262, %c0_263], %536 {strides = array<i32>} : memref<2x8x32xf32, #tpu.memory_space<vmem>>, vector<2x1x32xf32>,
    %537 = vector.extract_strided_slice %10 {offsets = [0, 6, 0], sizes = [2, 1, 128], strides = [1, 1, 1]} : vector<2x8x128xf32> to vector<2x1x128xf32>
    %538 = vector.shape_cast %537 : vector<2x1x128xf32> to vector<2x128xf32>
    %c0_264 = arith.constant 0 : index
    %c0_265 = arith.constant 0 : index
    %539 = vector.load %arg14[%c0_264, %c0_265] : memref<2x32xf32, #tpu.memory_space<vmem>>, vector<2x32xf32>
    %c0_266 = arith.constant 0 : index
    %c0_267 = arith.constant 0 : index
    %540 = vector.load %arg15[%c0_266, %c0_267] : memref<2x32xf32, #tpu.memory_space<vmem>>, vector<2x32xf32>
    %541 = arith.truncf %539 : vector<2x32xf32> to vector<2x32xbf16>
    %cst_268 = arith.constant dense<0.000000e+00> : vector<2x128xf32>
    %542 = tpu.matmul %541, %19, %cst_268 {dimension_numbers = #tpu.dot_dimension_numbers<[1], [0], [0], [1], [0, 0, 1, 1], [], []>} : vector<2x32xbf16>, vector<32x128xbf16>, vector<2x128xf32> -> vector<2x128xf32>
    %543 = arith.addf %538, %542 : vector<2x128xf32>
    %544 = vector.extract_strided_slice %543 {offsets = [0, 0], sizes = [2, 32], strides = [1, 1]} : vector<2x128xf32> to vector<2x32xf32>
    %cst_269 = arith.constant 5.000000e-01 : f32
    %545 = vector.broadcast %cst_269 : f32 to vector<2x32xf32>
    %546 = arith.mulf %545, %544 : vector<2x32xf32>
    %547 = math.tanh %546 : vector<2x32xf32>
    %cst_270 = arith.constant 5.000000e-01 : f32
    %548 = vector.broadcast %cst_270 : f32 to vector<2x32xf32>
    %549 = arith.mulf %548, %547 : vector<2x32xf32>
    %cst_271 = arith.constant 5.000000e-01 : f32
    %550 = vector.broadcast %cst_271 : f32 to vector<2x32xf32>
    %551 = arith.addf %549, %550 : vector<2x32xf32>
    %552 = vector.extract_strided_slice %543 {offsets = [0, 32], sizes = [2, 32], strides = [1, 1]} : vector<2x128xf32> to vector<2x32xf32>
    %cst_272 = arith.constant 5.000000e-01 : f32
    %553 = vector.broadcast %cst_272 : f32 to vector<2x32xf32>
    %554 = arith.mulf %553, %552 : vector<2x32xf32>
    %555 = math.tanh %554 : vector<2x32xf32>
    %cst_273 = arith.constant 5.000000e-01 : f32
    %556 = vector.broadcast %cst_273 : f32 to vector<2x32xf32>
    %557 = arith.mulf %556, %555 : vector<2x32xf32>
    %cst_274 = arith.constant 5.000000e-01 : f32
    %558 = vector.broadcast %cst_274 : f32 to vector<2x32xf32>
    %559 = arith.addf %557, %558 : vector<2x32xf32>
    %560 = vector.extract_strided_slice %543 {offsets = [0, 64], sizes = [2, 32], strides = [1, 1]} : vector<2x128xf32> to vector<2x32xf32>
    %561 = math.tanh %560 : vector<2x32xf32>
    %562 = vector.extract_strided_slice %543 {offsets = [0, 96], sizes = [2, 32], strides = [1, 1]} : vector<2x128xf32> to vector<2x32xf32>
    %cst_275 = arith.constant 5.000000e-01 : f32
    %563 = vector.broadcast %cst_275 : f32 to vector<2x32xf32>
    %564 = arith.mulf %563, %562 : vector<2x32xf32>
    %565 = math.tanh %564 : vector<2x32xf32>
    %cst_276 = arith.constant 5.000000e-01 : f32
    %566 = vector.broadcast %cst_276 : f32 to vector<2x32xf32>
    %567 = arith.mulf %566, %565 : vector<2x32xf32>
    %cst_277 = arith.constant 5.000000e-01 : f32
    %568 = vector.broadcast %cst_277 : f32 to vector<2x32xf32>
    %569 = arith.addf %567, %568 : vector<2x32xf32>
    %570 = arith.mulf %559, %540 : vector<2x32xf32>
    %571 = arith.mulf %551, %561 : vector<2x32xf32>
    %572 = arith.addf %570, %571 : vector<2x32xf32>
    %573 = math.tanh %572 : vector<2x32xf32>
    %574 = arith.mulf %569, %573 : vector<2x32xf32>
    %c0_278 = arith.constant 0 : index
    %c0_279 = arith.constant 0 : index
    %575 = vector.load %arg14[%c0_278, %c0_279] : memref<2x32xf32, #tpu.memory_space<vmem>>, vector<2x32xf32>
    tpu.vector_store %arg14[%c0_278, %c0_279], %574 {strides = array<i32>} : memref<2x32xf32, #tpu.memory_space<vmem>>, vector<2x32xf32>,
    %c0_280 = arith.constant 0 : index
    %c0_281 = arith.constant 0 : index
    %576 = vector.load %arg15[%c0_280, %c0_281] : memref<2x32xf32, #tpu.memory_space<vmem>>, vector<2x32xf32>
    tpu.vector_store %arg15[%c0_280, %c0_281], %572 {strides = array<i32>} : memref<2x32xf32, #tpu.memory_space<vmem>>, vector<2x32xf32>,
    %c0_282 = arith.constant 0 : index
    %c6_283 = arith.constant 6 : index
    %c0_284 = arith.constant 0 : index
    %577 = vector.load %arg10[%c0_282, %c6_283, %c0_284] : memref<2x8x32xf32, #tpu.memory_space<vmem>>, vector<2x1x32xf32>
    %578 = vector.shape_cast %577 : vector<2x1x32xf32> to vector<2x32xf32>
    %579 = vector.shape_cast %574 : vector<2x32xf32> to vector<2x1x32xf32>
    tpu.vector_store %arg10[%c0_282, %c6_283, %c0_284], %579 {strides = array<i32>} : memref<2x8x32xf32, #tpu.memory_space<vmem>>, vector<2x1x32xf32>,
    %580 = vector.extract_strided_slice %18 {offsets = [0, 1, 0], sizes = [2, 1, 128], strides = [1, 1, 1]} : vector<2x8x128xf32> to vector<2x1x128xf32>
    %581 = vector.shape_cast %580 : vector<2x1x128xf32> to vector<2x128xf32>
    %c0_285 = arith.constant 0 : index
    %c0_286 = arith.constant 0 : index
    %582 = vector.load %arg16[%c0_285, %c0_286] : memref<2x32xf32, #tpu.memory_space<vmem>>, vector<2x32xf32>
    %c0_287 = arith.constant 0 : index
    %c0_288 = arith.constant 0 : index
    %583 = vector.load %arg17[%c0_287, %c0_288] : memref<2x32xf32, #tpu.memory_space<vmem>>, vector<2x32xf32>
    %584 = arith.truncf %582 : vector<2x32xf32> to vector<2x32xbf16>
    %cst_289 = arith.constant dense<0.000000e+00> : vector<2x128xf32>
    %585 = tpu.matmul %584, %20, %cst_289 {dimension_numbers = #tpu.dot_dimension_numbers<[1], [0], [0], [1], [0, 0, 1, 1], [], []>} : vector<2x32xbf16>, vector<32x128xbf16>, vector<2x128xf32> -> vector<2x128xf32>
    %586 = arith.addf %581, %585 : vector<2x128xf32>
    %587 = vector.extract_strided_slice %586 {offsets = [0, 0], sizes = [2, 32], strides = [1, 1]} : vector<2x128xf32> to vector<2x32xf32>
    %cst_290 = arith.constant 5.000000e-01 : f32
    %588 = vector.broadcast %cst_290 : f32 to vector<2x32xf32>
    %589 = arith.mulf %588, %587 : vector<2x32xf32>
    %590 = math.tanh %589 : vector<2x32xf32>
    %cst_291 = arith.constant 5.000000e-01 : f32
    %591 = vector.broadcast %cst_291 : f32 to vector<2x32xf32>
    %592 = arith.mulf %591, %590 : vector<2x32xf32>
    %cst_292 = arith.constant 5.000000e-01 : f32
    %593 = vector.broadcast %cst_292 : f32 to vector<2x32xf32>
    %594 = arith.addf %592, %593 : vector<2x32xf32>
    %595 = vector.extract_strided_slice %586 {offsets = [0, 32], sizes = [2, 32], strides = [1, 1]} : vector<2x128xf32> to vector<2x32xf32>
    %cst_293 = arith.constant 5.000000e-01 : f32
    %596 = vector.broadcast %cst_293 : f32 to vector<2x32xf32>
    %597 = arith.mulf %596, %595 : vector<2x32xf32>
    %598 = math.tanh %597 : vector<2x32xf32>
    %cst_294 = arith.constant 5.000000e-01 : f32
    %599 = vector.broadcast %cst_294 : f32 to vector<2x32xf32>
    %600 = arith.mulf %599, %598 : vector<2x32xf32>
    %cst_295 = arith.constant 5.000000e-01 : f32
    %601 = vector.broadcast %cst_295 : f32 to vector<2x32xf32>
    %602 = arith.addf %600, %601 : vector<2x32xf32>
    %603 = vector.extract_strided_slice %586 {offsets = [0, 64], sizes = [2, 32], strides = [1, 1]} : vector<2x128xf32> to vector<2x32xf32>
    %604 = math.tanh %603 : vector<2x32xf32>
    %605 = vector.extract_strided_slice %586 {offsets = [0, 96], sizes = [2, 32], strides = [1, 1]} : vector<2x128xf32> to vector<2x32xf32>
    %cst_296 = arith.constant 5.000000e-01 : f32
    %606 = vector.broadcast %cst_296 : f32 to vector<2x32xf32>
    %607 = arith.mulf %606, %605 : vector<2x32xf32>
    %608 = math.tanh %607 : vector<2x32xf32>
    %cst_297 = arith.constant 5.000000e-01 : f32
    %609 = vector.broadcast %cst_297 : f32 to vector<2x32xf32>
    %610 = arith.mulf %609, %608 : vector<2x32xf32>
    %cst_298 = arith.constant 5.000000e-01 : f32
    %611 = vector.broadcast %cst_298 : f32 to vector<2x32xf32>
    %612 = arith.addf %610, %611 : vector<2x32xf32>
    %613 = arith.mulf %602, %583 : vector<2x32xf32>
    %614 = arith.mulf %594, %604 : vector<2x32xf32>
    %615 = arith.addf %613, %614 : vector<2x32xf32>
    %616 = math.tanh %615 : vector<2x32xf32>
    %617 = arith.mulf %612, %616 : vector<2x32xf32>
    %c0_299 = arith.constant 0 : index
    %c0_300 = arith.constant 0 : index
    %618 = vector.load %arg16[%c0_299, %c0_300] : memref<2x32xf32, #tpu.memory_space<vmem>>, vector<2x32xf32>
    tpu.vector_store %arg16[%c0_299, %c0_300], %617 {strides = array<i32>} : memref<2x32xf32, #tpu.memory_space<vmem>>, vector<2x32xf32>,
    %c0_301 = arith.constant 0 : index
    %c0_302 = arith.constant 0 : index
    %619 = vector.load %arg17[%c0_301, %c0_302] : memref<2x32xf32, #tpu.memory_space<vmem>>, vector<2x32xf32>
    tpu.vector_store %arg17[%c0_301, %c0_302], %615 {strides = array<i32>} : memref<2x32xf32, #tpu.memory_space<vmem>>, vector<2x32xf32>,
    %c0_303 = arith.constant 0 : index
    %c1_304 = arith.constant 1 : index
    %c0_305 = arith.constant 0 : index
    %620 = vector.load %arg11[%c0_303, %c1_304, %c0_305] : memref<2x8x32xf32, #tpu.memory_space<vmem>>, vector<2x1x32xf32>
    %621 = vector.shape_cast %620 : vector<2x1x32xf32> to vector<2x32xf32>
    %622 = vector.shape_cast %617 : vector<2x32xf32> to vector<2x1x32xf32>
    tpu.vector_store %arg11[%c0_303, %c1_304, %c0_305], %622 {strides = array<i32>} : memref<2x8x32xf32, #tpu.memory_space<vmem>>, vector<2x1x32xf32>,
    %623 = vector.extract_strided_slice %10 {offsets = [0, 7, 0], sizes = [2, 1, 128], strides = [1, 1, 1]} : vector<2x8x128xf32> to vector<2x1x128xf32>
    %624 = vector.shape_cast %623 : vector<2x1x128xf32> to vector<2x128xf32>
    %c0_306 = arith.constant 0 : index
    %c0_307 = arith.constant 0 : index
    %625 = vector.load %arg14[%c0_306, %c0_307] : memref<2x32xf32, #tpu.memory_space<vmem>>, vector<2x32xf32>
    %c0_308 = arith.constant 0 : index
    %c0_309 = arith.constant 0 : index
    %626 = vector.load %arg15[%c0_308, %c0_309] : memref<2x32xf32, #tpu.memory_space<vmem>>, vector<2x32xf32>
    %627 = arith.truncf %625 : vector<2x32xf32> to vector<2x32xbf16>
    %cst_310 = arith.constant dense<0.000000e+00> : vector<2x128xf32>
    %628 = tpu.matmul %627, %19, %cst_310 {dimension_numbers = #tpu.dot_dimension_numbers<[1], [0], [0], [1], [0, 0, 1, 1], [], []>} : vector<2x32xbf16>, vector<32x128xbf16>, vector<2x128xf32> -> vector<2x128xf32>
    %629 = arith.addf %624, %628 : vector<2x128xf32>
    %630 = vector.extract_strided_slice %629 {offsets = [0, 0], sizes = [2, 32], strides = [1, 1]} : vector<2x128xf32> to vector<2x32xf32>
    %cst_311 = arith.constant 5.000000e-01 : f32
    %631 = vector.broadcast %cst_311 : f32 to vector<2x32xf32>
    %632 = arith.mulf %631, %630 : vector<2x32xf32>
    %633 = math.tanh %632 : vector<2x32xf32>
    %cst_312 = arith.constant 5.000000e-01 : f32
    %634 = vector.broadcast %cst_312 : f32 to vector<2x32xf32>
    %635 = arith.mulf %634, %633 : vector<2x32xf32>
    %cst_313 = arith.constant 5.000000e-01 : f32
    %636 = vector.broadcast %cst_313 : f32 to vector<2x32xf32>
    %637 = arith.addf %635, %636 : vector<2x32xf32>
    %638 = vector.extract_strided_slice %629 {offsets = [0, 32], sizes = [2, 32], strides = [1, 1]} : vector<2x128xf32> to vector<2x32xf32>
    %cst_314 = arith.constant 5.000000e-01 : f32
    %639 = vector.broadcast %cst_314 : f32 to vector<2x32xf32>
    %640 = arith.mulf %639, %638 : vector<2x32xf32>
    %641 = math.tanh %640 : vector<2x32xf32>
    %cst_315 = arith.constant 5.000000e-01 : f32
    %642 = vector.broadcast %cst_315 : f32 to vector<2x32xf32>
    %643 = arith.mulf %642, %641 : vector<2x32xf32>
    %cst_316 = arith.constant 5.000000e-01 : f32
    %644 = vector.broadcast %cst_316 : f32 to vector<2x32xf32>
    %645 = arith.addf %643, %644 : vector<2x32xf32>
    %646 = vector.extract_strided_slice %629 {offsets = [0, 64], sizes = [2, 32], strides = [1, 1]} : vector<2x128xf32> to vector<2x32xf32>
    %647 = math.tanh %646 : vector<2x32xf32>
    %648 = vector.extract_strided_slice %629 {offsets = [0, 96], sizes = [2, 32], strides = [1, 1]} : vector<2x128xf32> to vector<2x32xf32>
    %cst_317 = arith.constant 5.000000e-01 : f32
    %649 = vector.broadcast %cst_317 : f32 to vector<2x32xf32>
    %650 = arith.mulf %649, %648 : vector<2x32xf32>
    %651 = math.tanh %650 : vector<2x32xf32>
    %cst_318 = arith.constant 5.000000e-01 : f32
    %652 = vector.broadcast %cst_318 : f32 to vector<2x32xf32>
    %653 = arith.mulf %652, %651 : vector<2x32xf32>
    %cst_319 = arith.constant 5.000000e-01 : f32
    %654 = vector.broadcast %cst_319 : f32 to vector<2x32xf32>
    %655 = arith.addf %653, %654 : vector<2x32xf32>
    %656 = arith.mulf %645, %626 : vector<2x32xf32>
    %657 = arith.mulf %637, %647 : vector<2x32xf32>
    %658 = arith.addf %656, %657 : vector<2x32xf32>
    %659 = math.tanh %658 : vector<2x32xf32>
    %660 = arith.mulf %655, %659 : vector<2x32xf32>
    %c0_320 = arith.constant 0 : index
    %c0_321 = arith.constant 0 : index
    %661 = vector.load %arg14[%c0_320, %c0_321] : memref<2x32xf32, #tpu.memory_space<vmem>>, vector<2x32xf32>
    tpu.vector_store %arg14[%c0_320, %c0_321], %660 {strides = array<i32>} : memref<2x32xf32, #tpu.memory_space<vmem>>, vector<2x32xf32>,
    %c0_322 = arith.constant 0 : index
    %c0_323 = arith.constant 0 : index
    %662 = vector.load %arg15[%c0_322, %c0_323] : memref<2x32xf32, #tpu.memory_space<vmem>>, vector<2x32xf32>
    tpu.vector_store %arg15[%c0_322, %c0_323], %658 {strides = array<i32>} : memref<2x32xf32, #tpu.memory_space<vmem>>, vector<2x32xf32>,
    %c0_324 = arith.constant 0 : index
    %c7_325 = arith.constant 7 : index
    %c0_326 = arith.constant 0 : index
    %663 = vector.load %arg10[%c0_324, %c7_325, %c0_326] : memref<2x8x32xf32, #tpu.memory_space<vmem>>, vector<2x1x32xf32>
    %664 = vector.shape_cast %663 : vector<2x1x32xf32> to vector<2x32xf32>
    %665 = vector.shape_cast %660 : vector<2x32xf32> to vector<2x1x32xf32>
    tpu.vector_store %arg10[%c0_324, %c7_325, %c0_326], %665 {strides = array<i32>} : memref<2x8x32xf32, #tpu.memory_space<vmem>>, vector<2x1x32xf32>,
    %666 = vector.extract_strided_slice %18 {offsets = [0, 0, 0], sizes = [2, 1, 128], strides = [1, 1, 1]} : vector<2x8x128xf32> to vector<2x1x128xf32>
    %667 = vector.shape_cast %666 : vector<2x1x128xf32> to vector<2x128xf32>
    %c0_327 = arith.constant 0 : index
    %c0_328 = arith.constant 0 : index
    %668 = vector.load %arg16[%c0_327, %c0_328] : memref<2x32xf32, #tpu.memory_space<vmem>>, vector<2x32xf32>
    %c0_329 = arith.constant 0 : index
    %c0_330 = arith.constant 0 : index
    %669 = vector.load %arg17[%c0_329, %c0_330] : memref<2x32xf32, #tpu.memory_space<vmem>>, vector<2x32xf32>
    %670 = arith.truncf %668 : vector<2x32xf32> to vector<2x32xbf16>
    %cst_331 = arith.constant dense<0.000000e+00> : vector<2x128xf32>
    %671 = tpu.matmul %670, %20, %cst_331 {dimension_numbers = #tpu.dot_dimension_numbers<[1], [0], [0], [1], [0, 0, 1, 1], [], []>} : vector<2x32xbf16>, vector<32x128xbf16>, vector<2x128xf32> -> vector<2x128xf32>
    %672 = arith.addf %667, %671 : vector<2x128xf32>
    %673 = vector.extract_strided_slice %672 {offsets = [0, 0], sizes = [2, 32], strides = [1, 1]} : vector<2x128xf32> to vector<2x32xf32>
    %cst_332 = arith.constant 5.000000e-01 : f32
    %674 = vector.broadcast %cst_332 : f32 to vector<2x32xf32>
    %675 = arith.mulf %674, %673 : vector<2x32xf32>
    %676 = math.tanh %675 : vector<2x32xf32>
    %cst_333 = arith.constant 5.000000e-01 : f32
    %677 = vector.broadcast %cst_333 : f32 to vector<2x32xf32>
    %678 = arith.mulf %677, %676 : vector<2x32xf32>
    %cst_334 = arith.constant 5.000000e-01 : f32
    %679 = vector.broadcast %cst_334 : f32 to vector<2x32xf32>
    %680 = arith.addf %678, %679 : vector<2x32xf32>
    %681 = vector.extract_strided_slice %672 {offsets = [0, 32], sizes = [2, 32], strides = [1, 1]} : vector<2x128xf32> to vector<2x32xf32>
    %cst_335 = arith.constant 5.000000e-01 : f32
    %682 = vector.broadcast %cst_335 : f32 to vector<2x32xf32>
    %683 = arith.mulf %682, %681 : vector<2x32xf32>
    %684 = math.tanh %683 : vector<2x32xf32>
    %cst_336 = arith.constant 5.000000e-01 : f32
    %685 = vector.broadcast %cst_336 : f32 to vector<2x32xf32>
    %686 = arith.mulf %685, %684 : vector<2x32xf32>
    %cst_337 = arith.constant 5.000000e-01 : f32
    %687 = vector.broadcast %cst_337 : f32 to vector<2x32xf32>
    %688 = arith.addf %686, %687 : vector<2x32xf32>
    %689 = vector.extract_strided_slice %672 {offsets = [0, 64], sizes = [2, 32], strides = [1, 1]} : vector<2x128xf32> to vector<2x32xf32>
    %690 = math.tanh %689 : vector<2x32xf32>
    %691 = vector.extract_strided_slice %672 {offsets = [0, 96], sizes = [2, 32], strides = [1, 1]} : vector<2x128xf32> to vector<2x32xf32>
    %cst_338 = arith.constant 5.000000e-01 : f32
    %692 = vector.broadcast %cst_338 : f32 to vector<2x32xf32>
    %693 = arith.mulf %692, %691 : vector<2x32xf32>
    %694 = math.tanh %693 : vector<2x32xf32>
    %cst_339 = arith.constant 5.000000e-01 : f32
    %695 = vector.broadcast %cst_339 : f32 to vector<2x32xf32>
    %696 = arith.mulf %695, %694 : vector<2x32xf32>
    %cst_340 = arith.constant 5.000000e-01 : f32
    %697 = vector.broadcast %cst_340 : f32 to vector<2x32xf32>
    %698 = arith.addf %696, %697 : vector<2x32xf32>
    %699 = arith.mulf %688, %669 : vector<2x32xf32>
    %700 = arith.mulf %680, %690 : vector<2x32xf32>
    %701 = arith.addf %699, %700 : vector<2x32xf32>
    %702 = math.tanh %701 : vector<2x32xf32>
    %703 = arith.mulf %698, %702 : vector<2x32xf32>
    %c0_341 = arith.constant 0 : index
    %c0_342 = arith.constant 0 : index
    %704 = vector.load %arg16[%c0_341, %c0_342] : memref<2x32xf32, #tpu.memory_space<vmem>>, vector<2x32xf32>
    tpu.vector_store %arg16[%c0_341, %c0_342], %703 {strides = array<i32>} : memref<2x32xf32, #tpu.memory_space<vmem>>, vector<2x32xf32>,
    %c0_343 = arith.constant 0 : index
    %c0_344 = arith.constant 0 : index
    %705 = vector.load %arg17[%c0_343, %c0_344] : memref<2x32xf32, #tpu.memory_space<vmem>>, vector<2x32xf32>
    tpu.vector_store %arg17[%c0_343, %c0_344], %701 {strides = array<i32>} : memref<2x32xf32, #tpu.memory_space<vmem>>, vector<2x32xf32>,
    %c0_345 = arith.constant 0 : index
    %c0_346 = arith.constant 0 : index
    %c0_347 = arith.constant 0 : index
    %706 = vector.load %arg11[%c0_345, %c0_346, %c0_347] : memref<2x8x32xf32, #tpu.memory_space<vmem>>, vector<2x1x32xf32>
    %707 = vector.shape_cast %706 : vector<2x1x32xf32> to vector<2x32xf32>
    %708 = vector.shape_cast %703 : vector<2x32xf32> to vector<2x1x32xf32>
    tpu.vector_store %arg11[%c0_345, %c0_346, %c0_347], %708 {strides = array<i32>} : memref<2x8x32xf32, #tpu.memory_space<vmem>>, vector<2x1x32xf32>,
    %c0_348 = arith.constant 0 : index
    %c0_349 = arith.constant 0 : index
    %709 = vector.load %arg15[%c0_348, %c0_349] : memref<2x32xf32, #tpu.memory_space<vmem>>, vector<2x32xf32>
    %c0_350 = arith.constant 0 : index
    %c0_351 = arith.constant 0 : index
    %710 = vector.load %arg12[%c0_350, %c0_351] : memref<2x32xf32, #tpu.memory_space<vmem>>, vector<2x32xf32>
    tpu.vector_store %arg12[%c0_350, %c0_351], %709 {strides = array<i32>} : memref<2x32xf32, #tpu.memory_space<vmem>>, vector<2x32xf32>,
    %c0_352 = arith.constant 0 : index
    %c0_353 = arith.constant 0 : index
    %711 = vector.load %arg17[%c0_352, %c0_353] : memref<2x32xf32, #tpu.memory_space<vmem>>, vector<2x32xf32>
    %c0_354 = arith.constant 0 : index
    %c0_355 = arith.constant 0 : index
    %712 = vector.load %arg13[%c0_354, %c0_355] : memref<2x32xf32, #tpu.memory_space<vmem>>, vector<2x32xf32>
    tpu.vector_store %arg13[%c0_354, %c0_355], %711 {strides = array<i32>} : memref<2x32xf32, #tpu.memory_space<vmem>>, vector<2x32xf32>,
    return
  }
  func.func @transform_0(%arg0: i32, %arg1: i32) -> (i32, i32, i32) {
    %c0_i32 = arith.constant 0 : i32
    %c0_i32_0 = arith.constant 0 : i32
    return %arg0, %arg1, %c0_i32 : i32, i32, i32
  }
  func.func @transform_1(%arg0: i32, %arg1: i32) -> (i32, i32, i32) {
    %c0_i32 = arith.constant 0 : i32
    %0 = arith.subi %c0_i32, %arg1 : i32
    %c0_i32_0 = arith.constant 0 : i32
    %c0_i32_1 = arith.constant 0 : i32
    return %arg0, %0, %c0_i32_0 : i32, i32, i32
  }
  func.func @transform_2(%arg0: i32, %arg1: i32) -> (i32, i32) {
    %c0_i32 = arith.constant 0 : i32
    %c0_i32_0 = arith.constant 0 : i32
    %c0_i32_1 = arith.constant 0 : i32
    return %c0_i32, %c0_i32_0 : i32, i32
  }
  func.func @transform_3(%arg0: i32, %arg1: i32) -> (i32, i32) {
    %c0_i32 = arith.constant 0 : i32
    %c0_i32_0 = arith.constant 0 : i32
    %c0_i32_1 = arith.constant 0 : i32
    return %c0_i32, %c0_i32_0 : i32, i32
  }
  func.func @transform_4(%arg0: i32, %arg1: i32) -> (i32, i32) {
    %c0_i32 = arith.constant 0 : i32
    %c0_i32_0 = arith.constant 0 : i32
    %c0_i32_1 = arith.constant 0 : i32
    return %c0_i32, %c0_i32_0 : i32, i32
  }
  func.func @transform_5(%arg0: i32, %arg1: i32) -> (i32, i32) {
    %c0_i32 = arith.constant 0 : i32
    %c0_i32_0 = arith.constant 0 : i32
    %c0_i32_1 = arith.constant 0 : i32
    return %c0_i32, %c0_i32_0 : i32, i32
  }
  func.func @transform_6(%arg0: i32, %arg1: i32) -> (i32, i32) {
    %c0_i32 = arith.constant 0 : i32
    %c0_i32_0 = arith.constant 0 : i32
    %c0_i32_1 = arith.constant 0 : i32
    return %c0_i32, %c0_i32_0 : i32, i32
  }
  func.func @transform_7(%arg0: i32, %arg1: i32) -> (i32, i32) {
    %c0_i32 = arith.constant 0 : i32
    %c0_i32_0 = arith.constant 0 : i32
    %c0_i32_1 = arith.constant 0 : i32
    return %c0_i32, %c0_i32_0 : i32, i32
  }
  func.func @transform_8(%arg0: i32, %arg1: i32) -> (i32, i32, i32) {
    %c0_i32 = arith.constant 0 : i32
    %c0_i32_0 = arith.constant 0 : i32
    return %arg0, %arg1, %c0_i32 : i32, i32, i32
  }
  func.func @transform_9(%arg0: i32, %arg1: i32) -> (i32, i32, i32) {
    %c0_i32 = arith.constant 0 : i32
    %0 = arith.subi %c0_i32, %arg1 : i32
    %c0_i32_0 = arith.constant 0 : i32
    %c0_i32_1 = arith.constant 0 : i32
    return %arg0, %0, %c0_i32_0 : i32, i32, i32
  }
  func.func @transform_10(%arg0: i32, %arg1: i32) -> (i32, i32) {
    %c0_i32 = arith.constant 0 : i32
    %c0_i32_0 = arith.constant 0 : i32
    return %arg0, %c0_i32 : i32, i32
  }
  func.func @transform_11(%arg0: i32, %arg1: i32) -> (i32, i32) {
    %c0_i32 = arith.constant 0 : i32
    %c0_i32_0 = arith.constant 0 : i32
    return %arg0, %c0_i32 : i32, i32
  }
}

</mosaic_0001>

<llo_original>
// kernel: tpu_custom_call.1
$region0: #{tpu_custom_call.1}
  #allocation0 [shape = 'u32[]', space=smem, size = 0x4, offset = 0x4, fixed_abs, tag = 'smem constant byte address 0x4 - core index']
  #allocation1 [shape = 'u32[144,128]{1,0:T(1,128)}', space=vmem, size = 0x12000, scoped, tag = 'internal scratch']
  #allocation2 [shape = 'f32[2,32]{1,0:T(2,128)}', space=vmem, size = 0x400, scoped, tag = 'scratch operand']
  #allocation3 [shape = 'f32[2,32]{1,0:T(2,128)}', space=vmem, size = 0x400, scoped, tag = 'scratch operand']
  #allocation4 [shape = 'f32[2,32]{1,0:T(2,128)}', space=vmem, size = 0x400, scoped, tag = 'scratch operand']
  #allocation5 [shape = 'f32[2,32]{1,0:T(2,128)}', space=vmem, size = 0x400, scoped, tag = 'scratch operand']
  %s0 = inlined_call_operand.hbm [shape: bf16[2,8,64], index: 0, kind: input, shape index: {}]
  %s1 = inlined_call_operand.hbm [shape: bf16[2,8,64], index: 1, kind: input, shape index: {}]
  %s2 = inlined_call_operand.hbm [shape: bf16[64,128], index: 2, kind: input, shape index: {}]
  %s3 = inlined_call_operand.hbm [shape: bf16[32,128], index: 3, kind: input, shape index: {}]
  %s4 = inlined_call_operand.vmem [shape: f32[1,128], index: 4, kind: input, shape index: {}]
  %s5 = inlined_call_operand.hbm [shape: bf16[64,128], index: 5, kind: input, shape index: {}]
  %s6 = inlined_call_operand.vmem [shape: bf16[32,128], index: 6, kind: input, shape index: {}]
  %s7 = inlined_call_operand.vmem [shape: f32[1,128], index: 7, kind: input, shape index: {}]
  %s8 = inlined_call_operand.hbm [shape: f32[2,8,32], index: 8, kind: output, shape index: {0}]
  %s9 = inlined_call_operand.hbm [shape: f32[2,8,32], index: 9, kind: output, shape index: {1}]
  %s10 = inlined_call_operand.hbm [shape: f32[2,32], index: 10, kind: output, shape index: {2}]
  %s11 = inlined_call_operand.hbm [shape: f32[2,32], index: 11, kind: output, shape index: {3}]
  %12 = xla_tuple %s8, %s9, %s10, %s11
  %s13 = sld [smem:[#allocation0]]
  $region90: #{tpu_custom_call.1} parent=0
    _
  %s15 = ssub.s32 1, %s13
  %s16 = scalar_select 0, %s15, %s13
  $region1: #{tpu_custom_call.1} parent=0
    #allocation6 [shape = 'u8[4096]{0}', space=vmem, size = 0x1000, scoped, tag = 'input window, operand 0, single buffered']
    #allocation7 [shape = 's32[1]{0}', space=sflag, size = 0x4, scoped, tag = 'scoped memory for tpu_custom_call.1']
    #allocation8 [shape = 's32[1]{0}', space=sflag, size = 0x4, scoped, tag = 'scoped memory for tpu_custom_call.1']
    #allocation9 [shape = 'u8[4096]{0}', space=vmem, size = 0x1000, scoped, tag = 'input window, operand 1, single buffered']
    #allocation10 [shape = 's32[1]{0}', space=sflag, size = 0x4, scoped, tag = 'scoped memory for tpu_custom_call.1']
    #allocation11 [shape = 'u8[16384]{0}', space=vmem, size = 0x4000, scoped, tag = 'input window, operand 2, single buffered']
    #allocation12 [shape = 'u8[8192]{0}', space=vmem, size = 0x2000, scoped, tag = 'input window, operand 3, single buffered']
    #allocation13 [shape = 's32[1]{0}', space=sflag, size = 0x4, scoped, tag = 'scoped memory for tpu_custom_call.1']
    #allocation14 [shape = 'u8[16384]{0}', space=vmem, size = 0x4000, scoped, tag = 'input window, operand 5, single buffered']
    #allocation15 [shape = 'u8[8192]{0}', space=vmem, size = 0x2000, scoped, tag = 'output window, operand 0, single buffered']
    #allocation16 [shape = 'u8[8192]{0}', space=vmem, size = 0x2000, scoped, tag = 'output window, operand 1, single buffered']
    #allocation17 [shape = 's32[1]{0}', space=sflag, size = 0x4, scoped, tag = 'scoped memory for tpu_custom_call.1']
    #allocation18 [shape = 'u8[1024]{0}', space=vmem, size = 0x400, scoped, tag = 'output window, operand 2, single buffered']
    #allocation19 [shape = 'u8[1024]{0}', space=vmem, size = 0x400, scoped, tag = 'output window, operand 3, single buffered']
    #allocation20 [shape = 's32[1]{0}', space=sflag, size = 0x4, scoped, tag = 'scoped memory for tpu_custom_call.1']
    %17 = vsyncpa [#allocation7], 0
    %18 = vsyncpa [#allocation10], 0
    %19 = vsyncpa [#allocation13], 0
    %20 = vsyncpa [#allocation8], 0
    %21 = vsyncpa [#allocation17], 0
    %22 = vsyncpa [#allocation20], 0
    // Predicated region
    $region2: #{tpu_custom_call.1} parent=1 // pred_check
      _
    $region3: #{tpu_custom_call.1} parent=1 // pred_check_branch
      %24 = sbr.rel (0) target = $region5
    $region4: #{tpu_custom_call.1} parent=1 // pred_region
      %s26 = ssub.s32 128, 128
      %27 = vsyncadd [#allocation7], %s26
      %s28 = sshll.u32 [#allocation6], 4
      %s29 = int_to_ptr.vmem [resolvable:$true] %s28
      %34 = dma.hbm_to_vmem [thread:$0]  %s0, 128, %s29, [#allocation7], 64, 64, 4
    $region5: #{tpu_custom_call.1} parent=1 // pred_fallthru
      _
    // Predicated region
    $region6: #{tpu_custom_call.1} parent=1 // pred_check
      _
    $region7: #{tpu_custom_call.1} parent=1 // pred_check_branch
      %36 = sbr.rel (0) target = $region9
    $region8: #{tpu_custom_call.1} parent=1 // pred_region
      %s37 = ssub.s32 0, 0
      %s39 = ssub.s32 128, 128
      %40 = vsyncadd [#allocation10], %s39
      %s41 = smul.addr %s37, 64
      %s42 = scalar_lea.hbm %s1, %s41
      %s43 = sshll.u32 [#allocation9], 4
      %s44 = int_to_ptr.vmem [resolvable:$true] %s43
      %49 = dma.hbm_to_vmem [thread:$0]  %s42, 128, %s44, [#allocation10], 64, 64, 4
    $region9: #{tpu_custom_call.1} parent=1 // pred_fallthru
      _
    // Predicated region
    $region10: #{tpu_custom_call.1} parent=1 // pred_check
      _
    $region11: #{tpu_custom_call.1} parent=1 // pred_check_branch
      %51 = sbr.rel (0) target = $region13
    $region12: #{tpu_custom_call.1} parent=1 // pred_region
      %s53 = ssub.s32 512, 512
      %54 = vsyncadd [#allocation10], %s53
      %s55 = sshll.u32 [#allocation11], 4
      %s56 = int_to_ptr.vmem [resolvable:$true] %s55
      %61 = dma.hbm_to_vmem [thread:$0]  %s2, 512, %s56, [#allocation10], 64, 64, 4
    $region13: #{tpu_custom_call.1} parent=1 // pred_fallthru
      _
    // Predicated region
    $region14: #{tpu_custom_call.1} parent=1 // pred_check
      _
    $region15: #{tpu_custom_call.1} parent=1 // pred_check_branch
      %63 = sbr.rel (0) target = $region17
    $region16: #{tpu_custom_call.1} parent=1 // pred_region
      %s65 = ssub.s32 256, 256
      %66 = vsyncadd [#allocation13], %s65
      %s67 = sshll.u32 [#allocation12], 4
      %s68 = int_to_ptr.vmem [resolvable:$true] %s67
      %73 = dma.hbm_to_vmem [thread:$0]  %s3, 256, %s68, [#allocation13], 64, 64, 4
    $region17: #{tpu_custom_call.1} parent=1 // pred_fallthru
      _
    // Predicated region
    $region18: #{tpu_custom_call.1} parent=1 // pred_check
      _
    $region19: #{tpu_custom_call.1} parent=1 // pred_check_branch
      %75 = sbr.rel (0) target = $region21
    $region20: #{tpu_custom_call.1} parent=1 // pred_region
      _
    $region21: #{tpu_custom_call.1} parent=1 // pred_fallthru
      _
    // Predicated region
    $region22: #{tpu_custom_call.1} parent=1 // pred_check
      _
    $region23: #{tpu_custom_call.1} parent=1 // pred_check_branch
      %77 = sbr.rel (0) target = $region25
    $region24: #{tpu_custom_call.1} parent=1 // pred_region
      %s79 = ssub.s32 512, 512
      %80 = vsyncadd [#allocation13], %s79
      %s81 = sshll.u32 [#allocation14], 4
      %s82 = int_to_ptr.vmem [resolvable:$true] %s81
      %87 = dma.hbm_to_vmem [thread:$0]  %s5, 512, %s82, [#allocation13], 64, 64, 4
    $region25: #{tpu_custom_call.1} parent=1 // pred_fallthru
      _
    // Predicated region
    $region26: #{tpu_custom_call.1} parent=1 // pred_check
      _
    $region27: #{tpu_custom_call.1} parent=1 // pred_check_branch
      %89 = sbr.rel (0) target = $region29
    $region28: #{tpu_custom_call.1} parent=1 // pred_region
      _
    $region29: #{tpu_custom_call.1} parent=1 // pred_fallthru
      _
    // Predicated region
    $region30: #{tpu_custom_call.1} parent=1 // pred_check
      _
    $region31: #{tpu_custom_call.1} parent=1 // pred_check_branch
      %91 = sbr.rel (0) target = $region33
    $region32: #{tpu_custom_call.1} parent=1 // pred_region
      _
    $region33: #{tpu_custom_call.1} parent=1 // pred_fallthru
      _
    // Predicated region
    $region34: #{tpu_custom_call.1} parent=1 // pred_check
      _
    $region35: #{tpu_custom_call.1} parent=1 // pred_check_branch
      %93 = sbr.rel (0) target = $region37
    $region36: #{tpu_custom_call.1} parent=1 // pred_region
      %94 = dma.done [#allocation7], 128
    $region37: #{tpu_custom_call.1} parent=1 // pred_fallthru
      _
    // Predicated region
    $region38: #{tpu_custom_call.1} parent=1 // pred_check
      _
    $region39: #{tpu_custom_call.1} parent=1 // pred_check_branch
      %96 = sbr.rel (0) target = $region41
    $region40: #{tpu_custom_call.1} parent=1 // pred_region
      %97 = dma.done [#allocation10], 128
    $region41: #{tpu_custom_call.1} parent=1 // pred_fallthru
      _
    // Predicated region
    $region42: #{tpu_custom_call.1} parent=1 // pred_check
      _
    $region43: #{tpu_custom_call.1} parent=1 // pred_check_branch
      %99 = sbr.rel (0) target = $region45
    $region44: #{tpu_custom_call.1} parent=1 // pred_region
      %100 = dma.done [#allocation10], 512
    $region45: #{tpu_custom_call.1} parent=1 // pred_fallthru
      _
    // Predicated region
    $region46: #{tpu_custom_call.1} parent=1 // pred_check
      _
    $region47: #{tpu_custom_call.1} parent=1 // pred_check_branch
      %102 = sbr.rel (0) target = $region49
    $region48: #{tpu_custom_call.1} parent=1 // pred_region
      %103 = dma.done [#allocation13], 256
    $region49: #{tpu_custom_call.1} parent=1 // pred_fallthru
      _
    // Predicated region
    $region50: #{tpu_custom_call.1} parent=1 // pred_check
      _
    $region51: #{tpu_custom_call.1} parent=1 // pred_check_branch
      %105 = sbr.rel (0) target = $region53
    $region52: #{tpu_custom_call.1} parent=1 // pred_region
      %106 = dma.done [#allocation13], 512
    $region53: #{tpu_custom_call.1} parent=1 // pred_fallthru
      _
    %s107 = ssub.s32 0, 0
    %s108 = ssub.s32 0, 0
    %p110 = scmp.eq.s32.totalorder 0, 0
    // Predicated region
    $region54: #{tpu_custom_call.1} parent=1 // pred_check
      %p111 = pneg %p110
    $region55: #{tpu_custom_call.1} parent=1 // pred_check_branch
      %113 = sbr.rel (%p111) target = $region57
    $region56: #{tpu_custom_call.1} parent=1 // pred_region
      %vm114 = vcmask 254976
      %115 = vst.msk [vmem:[#allocation2] sm:$0x3] %vm114, 0.0
      %116 = vst.msk [vmem:[#allocation3] sm:$0x3] %vm114, 0.0
      %117 = vst.msk [vmem:[#allocation4] sm:$0x3] %vm114, 0.0
      %118 = vst.msk [vmem:[#allocation5] sm:$0x3] %vm114, 0.0
    $region57: #{tpu_custom_call.1} parent=1 // pred_fallthru
      _
    %v119 = vld [vmem:[#allocation6] sm:$0xf]
    %v120 = vld [vmem:[#allocation6 + $0x4] sm:$0xf]
    %v121 = vld [vmem:[#allocation11] sm:$0xf]
    %v122 = vld [vmem:[#allocation11 + $0x4] sm:$0xf]
    %v123 = vld [vmem:[#allocation11 + $0x8] sm:$0xf]
    %v124 = vld [vmem:[#allocation11 + $0xc] sm:$0xf]
    %v125 = vld [vmem:[#allocation11 + $0x10] sm:$0xf]
    %v126 = vld [vmem:[#allocation11 + $0x14] sm:$0xf]
    %v127 = vld [vmem:[#allocation11 + $0x18] sm:$0xf]
    %v128 = vld [vmem:[#allocation11 + $0x1c] sm:$0xf]
    %v129 = vld [vmem:[%s4] sm:$0x1]
    %v131 = vlaneseq
    %v132 = vshrl.u32 %v131, 7
    %v133 = vsub.s32 0, %v132
    %v134 = vrot.slane %v129, %v133
    %v138 = vunpack.c.l.b16 %v119
    %v139 = vunpack.c.l.b16 %v120
    %v140 = vpack.c.b16 %v139, %v138
    %v149 = vunpack.c.l.b16 %v121
    %v150 = vunpack.c.l.b16 %v122
    %v151 = vunpack.c.l.b16 %v123
    %v152 = vunpack.c.l.b16 %v124
    %v153 = vunpack.c.l.b16 %v125
    %v154 = vunpack.c.l.b16 %v126
    %v155 = vunpack.c.l.b16 %v127
    %v156 = vunpack.c.l.b16 %v128
    %v157 = vpack.c.b16 %v150, %v149
    %v158 = vpack.c.b16 %v152, %v151
    %v159 = vpack.c.b16 %v154, %v153
    %v160 = vpack.c.b16 %v156, %v155
    %vm165 = vcmask 523264
    %v167 = vsel %vm165, %v140, 0
    %169 = vmatprep.subr.bf16.mxu0 0
    %170 = vmatpush1.bf16.msra.mxu0 %v157
    %171 = vmatprep.subr.bf16.mxu0 0
    %172 = vmatpush1.bf16.msra.mxu0 %v158
    %173 = vmatprep.subr.bf16.mxu0 0
    %174 = vmatpush1.bf16.msra.mxu0 %v159
    %175 = vmatprep.subr.bf16.mxu0 0
    %176 = vmatpush1.bf16.msra.mxu0 %v160
    %177 = vmatprep.subr.bf16.mxu0 0
    %178 = vmatpush1.bf16.msra.mxu0 0
    %179 = vmatprep.subr.bf16.mxu0 0
    %180 = vmatpush1.bf16.msra.mxu0 0
    %181 = vmatprep.subr.bf16.mxu0 0
    %182 = vmatpush1.bf16.msra.mxu0 0
    %183 = vmatprep.subr.bf16.mxu0 0
    %184 = vmatpush1.bf16.msra.mxu0 0
    %185 = vmatprep.subr.bf16.mxu0 0
    %186 = vmatpush1.bf16.msra.mxu0 0
    %187 = vmatprep.subr.bf16.mxu0 0
    %188 = vmatpush1.bf16.msra.mxu0 0
    %189 = vmatprep.subr.bf16.mxu0 0
    %190 = vmatpush1.bf16.msra.mxu0 0
    %191 = vmatprep.subr.bf16.mxu0 0
    %192 = vmatpush1.bf16.msra.mxu0 0
    %193 = vmatprep.subr.bf16.mxu0 0
    %194 = vmatpush1.bf16.msra.mxu0 0
    %195 = vmatprep.subr.bf16.mxu0 0
    %196 = vmatpush1.bf16.msra.mxu0 0
    %197 = vmatprep.subr.bf16.mxu0 0
    %198 = vmatpush1.bf16.msra.mxu0 0
    %199 = vmatprep.subr.bf16.mxu0 0
    %200 = vmatpush1.bf16.msra.mxu0 0
    %201 = vmatprep.mubr.bf16.mxu0 0
    %202 = vmatmul.mubr.bf16.gmra.mrb[0].mxu0 %v167
    %v203 = vpop.f32.mrb[0].mxu0
    %v204 = vadd.f32 %v134, %v203
    %v205 = vpop.f32.mrb[0].mxu0
    %v206 = vpop.f32.mrb[0].mxu0
    %v207 = vadd.f32 %v134, %v206
    %v208 = vpop.f32.mrb[0].mxu0
    %209 = vdwg.mxu0
    %v210 = vld [vmem:[#allocation9] sm:$0xf]
    %v211 = vld [vmem:[#allocation9 + $0x4] sm:$0xf]
    %v212 = vld [vmem:[#allocation14] sm:$0xf]
    %v213 = vld [vmem:[#allocation14 + $0x4] sm:$0xf]
    %v214 = vld [vmem:[#allocation14 + $0x8] sm:$0xf]
    %v215 = vld [vmem:[#allocation14 + $0xc] sm:$0xf]
    %v216 = vld [vmem:[#allocation14 + $0x10] sm:$0xf]
    %v217 = vld [vmem:[#allocation14 + $0x14] sm:$0xf]
    %v218 = vld [vmem:[#allocation14 + $0x18] sm:$0xf]
    %v219 = vld [vmem:[#allocation14 + $0x1c] sm:$0xf]
    %v220 = vld [vmem:[%s7] sm:$0x1]
    %v222 = vlaneseq
    %v223 = vshrl.u32 %v222, 7
    %v224 = vsub.s32 0, %v223
    %v225 = vrot.slane %v220, %v224
    %v229 = vunpack.c.l.b16 %v210
    %v230 = vunpack.c.l.b16 %v211
    %v231 = vpack.c.b16 %v230, %v229
    %v240 = vunpack.c.l.b16 %v212
    %v241 = vunpack.c.l.b16 %v213
    %v242 = vunpack.c.l.b16 %v214
    %v243 = vunpack.c.l.b16 %v215
    %v244 = vunpack.c.l.b16 %v216
    %v245 = vunpack.c.l.b16 %v217
    %v246 = vunpack.c.l.b16 %v218
    %v247 = vunpack.c.l.b16 %v219
    %v248 = vpack.c.b16 %v241, %v240
    %v249 = vpack.c.b16 %v243, %v242
    %v250 = vpack.c.b16 %v245, %v244
    %v251 = vpack.c.b16 %v247, %v246
    %v257 = vsel %vm165, %v231, 0
    %259 = vmatprep.subr.bf16.mxu0 0
    %260 = vmatpush1.bf16.msra.mxu0 %v248
    %261 = vmatprep.subr.bf16.mxu0 0
    %262 = vmatpush1.bf16.msra.mxu0 %v249
    %263 = vmatprep.subr.bf16.mxu0 0
    %264 = vmatpush1.bf16.msra.mxu0 %v250
    %265 = vmatprep.subr.bf16.mxu0 0
    %266 = vmatpush1.bf16.msra.mxu0 %v251
    %267 = vmatprep.subr.bf16.mxu0 0
    %268 = vmatpush1.bf16.msra.mxu0 0
    %269 = vmatprep.subr.bf16.mxu0 0
    %270 = vmatpush1.bf16.msra.mxu0 0
    %271 = vmatprep.subr.bf16.mxu0 0
    %272 = vmatpush1.bf16.msra.mxu0 0
    %273 = vmatprep.subr.bf16.mxu0 0
    %274 = vmatpush1.bf16.msra.mxu0 0
    %275 = vmatprep.subr.bf16.mxu0 0
    %276 = vmatpush1.bf16.msra.mxu0 0
    %277 = vmatprep.subr.bf16.mxu0 0
    %278 = vmatpush1.bf16.msra.mxu0 0
    %279 = vmatprep.subr.bf16.mxu0 0
    %280 = vmatpush1.bf16.msra.mxu0 0
    %281 = vmatprep.subr.bf16.mxu0 0
    %282 = vmatpush1.bf16.msra.mxu0 0
    %283 = vmatprep.subr.bf16.mxu0 0
    %284 = vmatpush1.bf16.msra.mxu0 0
    %285 = vmatprep.subr.bf16.mxu0 0
    %286 = vmatpush1.bf16.msra.mxu0 0
    %287 = vmatprep.subr.bf16.mxu0 0
    %288 = vmatpush1.bf16.msra.mxu0 0
    %289 = vmatprep.subr.bf16.mxu0 0
    %290 = vmatpush1.bf16.msra.mxu0 0
    %291 = vmatprep.mubr.bf16.mxu0 0
    %292 = vmatmul.mubr.bf16.gmra.mrb[0].mxu0 %v257
    %v293 = vpop.f32.mrb[0].mxu0
    %v294 = vadd.f32 %v225, %v293
    %v295 = vpop.f32.mrb[0].mxu0
    %v296 = vpop.f32.mrb[0].mxu0
    %v297 = vadd.f32 %v225, %v296
    %v298 = vpop.f32.mrb[0].mxu0
    %299 = vdwg.mxu0
    %v300 = vld [vmem:[#allocation12] sm:$0xf]
    %v301 = vld [vmem:[#allocation12 + $0x4] sm:$0xf]
    %v302 = vld [vmem:[#allocation12 + $0x8] sm:$0xf]
    %v303 = vld [vmem:[#allocation12 + $0xc] sm:$0xf]
    %v304 = vld [vmem:[%s6] sm:$0xf]
    %v305 = vld [vmem:[%s6 + $0x4] sm:$0xf]
    %v306 = vld [vmem:[%s6 + $0x8] sm:$0xf]
    %v307 = vld [vmem:[%s6 + $0xc] sm:$0xf]
    %v308 = vld [vmem:[#allocation2] sm:$0x3]
    %v309 = vld [vmem:[#allocation3] sm:$0x3]
    %v310 = vpack.c.bf16 %v308, %v308
    %v315 = vunpack.c.l.b16 %v300
    %v316 = vunpack.c.l.b16 %v301
    %v317 = vunpack.c.l.b16 %v302
    %v318 = vunpack.c.l.b16 %v303
    %v319 = vpack.c.b16 %v316, %v315
    %v320 = vpack.c.b16 %v318, %v317
    %vm323 = vcmask 261120
    %v325 = vsel %vm323, %v310, 0
    %327 = vmatprep.subr.bf16.mxu0 0
    %328 = vmatpush1.bf16.msra.mxu0 %v319
    %329 = vmatprep.subr.bf16.mxu0 0
    %330 = vmatpush1.bf16.msra.mxu0 %v320
    %331 = vmatprep.subr.bf16.mxu0 0
    %332 = vmatpush1.bf16.msra.mxu0 0
    %333 = vmatprep.subr.bf16.mxu0 0
    %334 = vmatpush1.bf16.msra.mxu0 0
    %335 = vmatprep.subr.bf16.mxu0 0
    %336 = vmatpush1.bf16.msra.mxu0 0
    %337 = vmatprep.subr.bf16.mxu0 0
    %338 = vmatpush1.bf16.msra.mxu0 0
    %339 = vmatprep.subr.bf16.mxu0 0
    %340 = vmatpush1.bf16.msra.mxu0 0
    %341 = vmatprep.subr.bf16.mxu0 0
    %342 = vmatpush1.bf16.msra.mxu0 0
    %343 = vmatprep.subr.bf16.mxu0 0
    %344 = vmatpush1.bf16.msra.mxu0 0
    %345 = vmatprep.subr.bf16.mxu0 0
    %346 = vmatpush1.bf16.msra.mxu0 0
    %347 = vmatprep.subr.bf16.mxu0 0
    %348 = vmatpush1.bf16.msra.mxu0 0
    %349 = vmatprep.subr.bf16.mxu0 0
    %350 = vmatpush1.bf16.msra.mxu0 0
    %351 = vmatprep.subr.bf16.mxu0 0
    %352 = vmatpush1.bf16.msra.mxu0 0
    %353 = vmatprep.subr.bf16.mxu0 0
    %354 = vmatpush1.bf16.msra.mxu0 0
    %355 = vmatprep.subr.bf16.mxu0 0
    %356 = vmatpush1.bf16.msra.mxu0 0
    %357 = vmatprep.subr.bf16.mxu0 0
    %358 = vmatpush1.bf16.msra.mxu0 0
    %359 = vmatprep.mubr.bf16.mxu0 0
    %360 = vmatmul.mubr.bf16.gmra.mrb[0].mxu0 %v325
    %v361 = vpop.f32.mrb[0].mxu0
    %v362 = vadd.f32 0.0, %v361
    %v363 = vpop.f32.mrb[0].mxu0
    %v364 = vpop.f32.mrb[0].mxu0
    %v365 = vpop.f32.mrb[0].mxu0
    %366 = vdwg.mxu0
    %v368 = vrot.slane %v362, 1
    %v371 = vadd.f32 %v204, %v362
    %v372 = vadd.f32 %v207, %v368
    %v373 = vmul.f32 %v371, 0.5
    %v374 = vmul.f32 %v372, 0.5
    %v375 = vtanh.pop %v373
    %v376 = vtanh.pop %v374
    %v377 = vmul.f32 %v375, 0.5
    %v378 = vmul.f32 %v376, 0.5
    %v379 = vadd.f32 %v377, 0.5
    %v380 = vadd.f32 %v378, 0.5
    %v381 = vtanh.pop %v371
    %v382 = vtanh.pop %v372
    %v384 = vrot.slane %v309, 1
    %385 = vrot.lane.b32.xlu0 %v309, 32
    %v386 = vpop.permute.xlu0 %385
    %387 = vrot.lane.b32.xlu0 %v384, 32
    %v388 = vpop.permute.xlu0 %387
    %v391 = vmul.f32 %v379, %v386
    %v392 = vmul.f32 %v380, %v388
    %395 = vrot.lane.b32.xlu0 %v381, 64
    %v396 = vpop.permute.xlu0 %395
    %397 = vrot.lane.b32.xlu0 %v382, 64
    %v398 = vpop.permute.xlu0 %397
    %v401 = vmul.f32 %v379, %v396
    %v402 = vmul.f32 %v380, %v398
    %405 = vrot.lane.b32.xlu0 %v401, 32
    %v406 = vpop.permute.xlu0 %405
    %407 = vrot.lane.b32.xlu0 %v402, 32
    %v408 = vpop.permute.xlu0 %407
    %v411 = vadd.f32 %v391, %v406
    %v412 = vadd.f32 %v392, %v408
    %v413 = vtanh.pop %v411
    %v414 = vtanh.pop %v412
    %417 = vrot.lane.b32.xlu0 %v413, 64
    %v418 = vpop.permute.xlu0 %417
    %419 = vrot.lane.b32.xlu0 %v414, 64
    %v420 = vpop.permute.xlu0 %419
    %v423 = vmul.f32 %v379, %v418
    %v424 = vmul.f32 %v380, %v420
    %v427 = vrot.slane %v424, 7
    %vm428 = vcmask 1041409
    %v429 = vsel %vm428, %v427, %v423
    %430 = vrot.lane.b32.xlu0 %v429, 32
    %v431 = vpop.permute.xlu0 %430
    %vm433 = vcmask 254976
    %434 = vst.msk [vmem:[#allocation2] sm:$0x3] %vm433, %v431
    %v437 = vrot.slane %v412, 7
    %v438 = vsel %vm428, %v437, %v411
    %439 = vrot.lane.b32.xlu0 %v438, 96
    %v440 = vpop.permute.xlu0 %439
    %442 = vst.msk [vmem:[#allocation3] sm:$0x3] %vm433, %v440
    %443 = vrot.lane.b32.xlu0 %v423, 32
    %v444 = vpop.permute.xlu0 %443
    %445 = vrot.lane.b32.xlu0 %v424, 32
    %v446 = vpop.permute.xlu0 %445
    %vm449 = vcmask 253952
    %450 = vst.msk [vmem:[#allocation15] sm:$0x1] %vm449, %v444
    %451 = vst.msk [vmem:[#allocation15 + $0x8] sm:$0x1] %vm449, %v446
    %v452 = vld [vmem:[#allocation4] sm:$0x3]
    %v453 = vld [vmem:[#allocation5] sm:$0x3]
    %v454 = vpack.c.bf16 %v452, %v452
    %v459 = vunpack.c.l.b16 %v304
    %v460 = vunpack.c.l.b16 %v305
    %v461 = vunpack.c.l.b16 %v306
    %v462 = vunpack.c.l.b16 %v307
    %v463 = vpack.c.b16 %v460, %v459
    %v464 = vpack.c.b16 %v462, %v461
    %v468 = vsel %vm323, %v454, 0
    %470 = vmatprep.subr.bf16.mxu0 0
    %471 = vmatpush1.bf16.msra.mxu0 %v463
    %472 = vmatprep.subr.bf16.mxu0 0
    %473 = vmatpush1.bf16.msra.mxu0 %v464
    %474 = vmatprep.subr.bf16.mxu0 0
    %475 = vmatpush1.bf16.msra.mxu0 0
    %476 = vmatprep.subr.bf16.mxu0 0
    %477 = vmatpush1.bf16.msra.mxu0 0
    %478 = vmatprep.subr.bf16.mxu0 0
    %479 = vmatpush1.bf16.msra.mxu0 0
    %480 = vmatprep.subr.bf16.mxu0 0
    %481 = vmatpush1.bf16.msra.mxu0 0
    %482 = vmatprep.subr.bf16.mxu0 0
    %483 = vmatpush1.bf16.msra.mxu0 0
    %484 = vmatprep.subr.bf16.mxu0 0
    %485 = vmatpush1.bf16.msra.mxu0 0
    %486 = vmatprep.subr.bf16.mxu0 0
    %487 = vmatpush1.bf16.msra.mxu0 0
    %488 = vmatprep.subr.bf16.mxu0 0
    %489 = vmatpush1.bf16.msra.mxu0 0
    %490 = vmatprep.subr.bf16.mxu0 0
    %491 = vmatpush1.bf16.msra.mxu0 0
    %492 = vmatprep.subr.bf16.mxu0 0
    %493 = vmatpush1.bf16.msra.mxu0 0
    %494 = vmatprep.subr.bf16.mxu0 0
    %495 = vmatpush1.bf16.msra.mxu0 0
    %496 = vmatprep.subr.bf16.mxu0 0
    %497 = vmatpush1.bf16.msra.mxu0 0
    %498 = vmatprep.subr.bf16.mxu0 0
    %499 = vmatpush1.bf16.msra.mxu0 0
    %500 = vmatprep.subr.bf16.mxu0 0
    %501 = vmatpush1.bf16.msra.mxu0 0
    %502 = vmatprep.mubr.bf16.mxu0 0
    %503 = vmatmul.mubr.bf16.gmra.mrb[0].mxu0 %v468
    %v504 = vpop.f32.mrb[0].mxu0
    %v505 = vadd.f32 0.0, %v504
    %v506 = vpop.f32.mrb[0].mxu0
    %v507 = vpop.f32.mrb[0].mxu0
    %v508 = vpop.f32.mrb[0].mxu0
    %509 = vdwg.mxu0
    %v511 = vrot.slane %v505, 1
    %v512 = vrot.slane %v505, 2
    %v515 = vadd.f32 %v294, %v511
    %v516 = vadd.f32 %v297, %v512
    %v517 = vmul.f32 %v515, 0.5
    %v518 = vmul.f32 %v516, 0.5
    %v519 = vtanh.pop %v517
    %v520 = vtanh.pop %v518
    %v521 = vmul.f32 %v519, 0.5
    %v522 = vmul.f32 %v520, 0.5
    %v523 = vadd.f32 %v521, 0.5
    %v524 = vadd.f32 %v522, 0.5
    %v525 = vtanh.pop %v515
    %v526 = vtanh.pop %v516
    %v528 = vrot.slane %v453, 1
    %v529 = vrot.slane %v453, 2
    %530 = vrot.lane.b32.xlu0 %v528, 32
    %v531 = vpop.permute.xlu0 %530
    %532 = vrot.lane.b32.xlu0 %v529, 32
    %v533 = vpop.permute.xlu0 %532
    %v536 = vmul.f32 %v523, %v531
    %v537 = vmul.f32 %v524, %v533
    %540 = vrot.lane.b32.xlu0 %v525, 64
    %v541 = vpop.permute.xlu0 %540
    %542 = vrot.lane.b32.xlu0 %v526, 64
    %v543 = vpop.permute.xlu0 %542
    %v546 = vmul.f32 %v523, %v541
    %v547 = vmul.f32 %v524, %v543
    %550 = vrot.lane.b32.xlu0 %v546, 32
    %v551 = vpop.permute.xlu0 %550
    %552 = vrot.lane.b32.xlu0 %v547, 32
    %v553 = vpop.permute.xlu0 %552
    %v556 = vadd.f32 %v536, %v551
    %v557 = vadd.f32 %v537, %v553
    %v558 = vtanh.pop %v556
    %v559 = vtanh.pop %v557
    %562 = vrot.lane.b32.xlu0 %v558, 64
    %v563 = vpop.permute.xlu0 %562
    %564 = vrot.lane.b32.xlu0 %v559, 64
    %v565 = vpop.permute.xlu0 %564
    %v568 = vmul.f32 %v523, %v563
    %v569 = vmul.f32 %v524, %v565
    %v572 = vrot.slane %v569, 7
    %573 = vrot.lane.b32.xlu0 %v568, 32
    %v574 = vpop.permute.xlu0 %573
    %575 = vrot.lane.b32.xlu0 %v572, 32
    %v576 = vpop.permute.xlu0 %575
    %vm579 = vcmask 261127
    %580 = vst.msk [vmem:[#allocation4 - $0x7] sm:$0x80] %vm579, %v574
    %581 = vst.msk [vmem:[#allocation4 + $0x1] sm:$0x1] %vm449, %v576
    %v584 = vrot.slane %v557, 7
    %585 = vrot.lane.b32.xlu0 %v556, 96
    %v586 = vpop.permute.xlu0 %585
    %587 = vrot.lane.b32.xlu0 %v584, 96
    %v588 = vpop.permute.xlu0 %587
    %591 = vst.msk [vmem:[#allocation5 - $0x7] sm:$0x80] %vm579, %v586
    %592 = vst.msk [vmem:[#allocation5 + $0x1] sm:$0x1] %vm449, %v588
    %593 = vrot.lane.b32.xlu0 %v569, 32
    %v594 = vpop.permute.xlu0 %593
    %596 = vst.msk [vmem:[#allocation16] sm:$0x80] %vm579, %v574
    %597 = vst.msk [vmem:[#allocation16 + $0x8] sm:$0x80] %vm579, %v594
    %v598 = vld [vmem:[#allocation2] sm:$0x3]
    %v599 = vld [vmem:[#allocation3] sm:$0x3]
    %v600 = vpack.c.bf16 %v598, %v598
    %v602 = vsel %vm323, %v600, 0
    %604 = vmatprep.subr.bf16.mxu0 0
    %605 = vmatpush1.bf16.msra.mxu0 %v319
    %606 = vmatprep.subr.bf16.mxu0 0
    %607 = vmatpush1.bf16.msra.mxu0 %v320
    %608 = vmatprep.subr.bf16.mxu0 0
    %609 = vmatpush1.bf16.msra.mxu0 0
    %610 = vmatprep.subr.bf16.mxu0 0
    %611 = vmatpush1.bf16.msra.mxu0 0
    %612 = vmatprep.subr.bf16.mxu0 0
    %613 = vmatpush1.bf16.msra.mxu0 0
    %614 = vmatprep.subr.bf16.mxu0 0
    %615 = vmatpush1.bf16.msra.mxu0 0
    %616 = vmatprep.subr.bf16.mxu0 0
    %617 = vmatpush1.bf16.msra.mxu0 0
    %618 = vmatprep.subr.bf16.mxu0 0
    %619 = vmatpush1.bf16.msra.mxu0 0
    %620 = vmatprep.subr.bf16.mxu0 0
    %621 = vmatpush1.bf16.msra.mxu0 0
    %622 = vmatprep.subr.bf16.mxu0 0
    %623 = vmatpush1.bf16.msra.mxu0 0
    %624 = vmatprep.subr.bf16.mxu0 0
    %625 = vmatpush1.bf16.msra.mxu0 0
    %626 = vmatprep.subr.bf16.mxu0 0
    %627 = vmatpush1.bf16.msra.mxu0 0
    %628 = vmatprep.subr.bf16.mxu0 0
    %629 = vmatpush1.bf16.msra.mxu0 0
    %630 = vmatprep.subr.bf16.mxu0 0
    %631 = vmatpush1.bf16.msra.mxu0 0
    %632 = vmatprep.subr.bf16.mxu0 0
    %633 = vmatpush1.bf16.msra.mxu0 0
    %634 = vmatprep.subr.bf16.mxu0 0
    %635 = vmatpush1.bf16.msra.mxu0 0
    %636 = vmatprep.mubr.bf16.mxu0 0
    %637 = vmatmul.mubr.bf16.gmra.mrb[0].mxu0 %v602
    %v638 = vpop.f32.mrb[0].mxu0
    %v639 = vadd.f32 0.0, %v638
    %v640 = vpop.f32.mrb[0].mxu0
    %v641 = vpop.f32.mrb[0].mxu0
    %v642 = vpop.f32.mrb[0].mxu0
    %643 = vdwg.mxu0
    %v645 = vrot.slane %v639, 7
    %v648 = vadd.f32 %v204, %v645
    %v649 = vadd.f32 %v207, %v639
    %v650 = vmul.f32 %v648, 0.5
    %v651 = vmul.f32 %v649, 0.5
    %v652 = vtanh.pop %v650
    %v653 = vtanh.pop %v651
    %v654 = vmul.f32 %v652, 0.5
    %v655 = vmul.f32 %v653, 0.5
    %v656 = vadd.f32 %v654, 0.5
    %v657 = vadd.f32 %v655, 0.5
    %v658 = vtanh.pop %v648
    %v659 = vtanh.pop %v649
    %v661 = vrot.slane %v599, 7
    %662 = vrot.lane.b32.xlu0 %v661, 32
    %v663 = vpop.permute.xlu0 %662
    %664 = vrot.lane.b32.xlu0 %v599, 32
    %v665 = vpop.permute.xlu0 %664
    %v668 = vmul.f32 %v656, %v663
    %v669 = vmul.f32 %v657, %v665
    %672 = vrot.lane.b32.xlu0 %v658, 64
    %v673 = vpop.permute.xlu0 %672
    %674 = vrot.lane.b32.xlu0 %v659, 64
    %v675 = vpop.permute.xlu0 %674
    %v678 = vmul.f32 %v656, %v673
    %v679 = vmul.f32 %v657, %v675
    %682 = vrot.lane.b32.xlu0 %v678, 32
    %v683 = vpop.permute.xlu0 %682
    %684 = vrot.lane.b32.xlu0 %v679, 32
    %v685 = vpop.permute.xlu0 %684
    %v688 = vadd.f32 %v668, %v683
    %v689 = vadd.f32 %v669, %v685
    %v690 = vtanh.pop %v688
    %v691 = vtanh.pop %v689
    %694 = vrot.lane.b32.xlu0 %v690, 64
    %v695 = vpop.permute.xlu0 %694
    %696 = vrot.lane.b32.xlu0 %v691, 64
    %v697 = vpop.permute.xlu0 %696
    %v700 = vmul.f32 %v656, %v695
    %v701 = vmul.f32 %v657, %v697
    %v704 = vrot.slane %v701, 7
    %vm705 = vcmask 1042434
    %v706 = vsel %vm705, %v704, %v700
    %707 = vrot.lane.b32.xlu0 %v706, 32
    %v708 = vpop.permute.xlu0 %707
    %vm710 = vcmask 256001
    %711 = vst.msk [vmem:[#allocation2 - $0x1] sm:$0x6] %vm710, %v708
    %v714 = vrot.slane %v689, 7
    %v715 = vsel %vm705, %v714, %v688
    %716 = vrot.lane.b32.xlu0 %v715, 96
    %v717 = vpop.permute.xlu0 %716
    %719 = vst.msk [vmem:[#allocation3 - $0x1] sm:$0x6] %vm710, %v717
    %720 = vrot.lane.b32.xlu0 %v700, 32
    %v721 = vpop.permute.xlu0 %720
    %722 = vrot.lane.b32.xlu0 %v701, 32
    %v723 = vpop.permute.xlu0 %722
    %vm726 = vcmask 254977
    %727 = vst.msk [vmem:[#allocation15] sm:$0x2] %vm726, %v721
    %728 = vst.msk [vmem:[#allocation15 + $0x8] sm:$0x2] %vm726, %v723
    %v729 = vld [vmem:[#allocation4] sm:$0x3]
    %v730 = vld [vmem:[#allocation5] sm:$0x3]
    %v731 = vpack.c.bf16 %v729, %v729
    %v733 = vsel %vm323, %v731, 0
    %735 = vmatprep.subr.bf16.mxu0 0
    %736 = vmatpush1.bf16.msra.mxu0 %v463
    %737 = vmatprep.subr.bf16.mxu0 0
    %738 = vmatpush1.bf16.msra.mxu0 %v464
    %739 = vmatprep.subr.bf16.mxu0 0
    %740 = vmatpush1.bf16.msra.mxu0 0
    %741 = vmatprep.subr.bf16.mxu0 0
    %742 = vmatpush1.bf16.msra.mxu0 0
    %743 = vmatprep.subr.bf16.mxu0 0
    %744 = vmatpush1.bf16.msra.mxu0 0
    %745 = vmatprep.subr.bf16.mxu0 0
    %746 = vmatpush1.bf16.msra.mxu0 0
    %747 = vmatprep.subr.bf16.mxu0 0
    %748 = vmatpush1.bf16.msra.mxu0 0
    %749 = vmatprep.subr.bf16.mxu0 0
    %750 = vmatpush1.bf16.msra.mxu0 0
    %751 = vmatprep.subr.bf16.mxu0 0
    %752 = vmatpush1.bf16.msra.mxu0 0
    %753 = vmatprep.subr.bf16.mxu0 0
    %754 = vmatpush1.bf16.msra.mxu0 0
    %755 = vmatprep.subr.bf16.mxu0 0
    %756 = vmatpush1.bf16.msra.mxu0 0
    %757 = vmatprep.subr.bf16.mxu0 0
    %758 = vmatpush1.bf16.msra.mxu0 0
    %759 = vmatprep.subr.bf16.mxu0 0
    %760 = vmatpush1.bf16.msra.mxu0 0
    %761 = vmatprep.subr.bf16.mxu0 0
    %762 = vmatpush1.bf16.msra.mxu0 0
    %763 = vmatprep.subr.bf16.mxu0 0
    %764 = vmatpush1.bf16.msra.mxu0 0
    %765 = vmatprep.subr.bf16.mxu0 0
    %766 = vmatpush1.bf16.msra.mxu0 0
    %767 = vmatprep.mubr.bf16.mxu0 0
    %768 = vmatmul.mubr.bf16.gmra.mrb[0].mxu0 %v733
    %v769 = vpop.f32.mrb[0].mxu0
    %v770 = vadd.f32 0.0, %v769
    %v771 = vpop.f32.mrb[0].mxu0
    %v772 = vpop.f32.mrb[0].mxu0
    %v773 = vpop.f32.mrb[0].mxu0
    %774 = vdwg.mxu0
    %v776 = vrot.slane %v770, 2
    %v777 = vrot.slane %v770, 3
    %v780 = vadd.f32 %v294, %v776
    %v781 = vadd.f32 %v297, %v777
    %v782 = vmul.f32 %v780, 0.5
    %v783 = vmul.f32 %v781, 0.5
    %v784 = vtanh.pop %v782
    %v785 = vtanh.pop %v783
    %v786 = vmul.f32 %v784, 0.5
    %v787 = vmul.f32 %v785, 0.5
    %v788 = vadd.f32 %v786, 0.5
    %v789 = vadd.f32 %v787, 0.5
    %v790 = vtanh.pop %v780
    %v791 = vtanh.pop %v781
    %v793 = vrot.slane %v730, 2
    %v794 = vrot.slane %v730, 3
    %795 = vrot.lane.b32.xlu0 %v793, 32
    %v796 = vpop.permute.xlu0 %795
    %797 = vrot.lane.b32.xlu0 %v794, 32
    %v798 = vpop.permute.xlu0 %797
    %v801 = vmul.f32 %v788, %v796
    %v802 = vmul.f32 %v789, %v798
    %805 = vrot.lane.b32.xlu0 %v790, 64
    %v806 = vpop.permute.xlu0 %805
    %807 = vrot.lane.b32.xlu0 %v791, 64
    %v808 = vpop.permute.xlu0 %807
    %v811 = vmul.f32 %v788, %v806
    %v812 = vmul.f32 %v789, %v808
    %815 = vrot.lane.b32.xlu0 %v811, 32
    %v816 = vpop.permute.xlu0 %815
    %817 = vrot.lane.b32.xlu0 %v812, 32
    %v818 = vpop.permute.xlu0 %817
    %v821 = vadd.f32 %v801, %v816
    %v822 = vadd.f32 %v802, %v818
    %v823 = vtanh.pop %v821
    %v824 = vtanh.pop %v822
    %827 = vrot.lane.b32.xlu0 %v823, 64
    %v828 = vpop.permute.xlu0 %827
    %829 = vrot.lane.b32.xlu0 %v824, 64
    %v830 = vpop.permute.xlu0 %829
    %v833 = vmul.f32 %v788, %v828
    %v834 = vmul.f32 %v789, %v830
    %v837 = vrot.slane %v834, 7
    %vm838 = vcmask 1047559
    %v839 = vsel %vm838, %v837, %v833
    %840 = vrot.lane.b32.xlu0 %v839, 32
    %v841 = vpop.permute.xlu0 %840
    %vm843 = vcmask 261126
    %844 = vst.msk [vmem:[#allocation4 - $0x6] sm:$0xc0] %vm843, %v841
    %v847 = vrot.slane %v822, 7
    %v848 = vsel %vm838, %v847, %v821
    %849 = vrot.lane.b32.xlu0 %v848, 96
    %v850 = vpop.permute.xlu0 %849
    %852 = vst.msk [vmem:[#allocation5 - $0x6] sm:$0xc0] %vm843, %v850
    %853 = vrot.lane.b32.xlu0 %v833, 32
    %v854 = vpop.permute.xlu0 %853
    %855 = vrot.lane.b32.xlu0 %v834, 32
    %v856 = vpop.permute.xlu0 %855
    %vm859 = vcmask 260102
    %860 = vst.msk [vmem:[#allocation16] sm:$0x40] %vm859, %v854
    %861 = vst.msk [vmem:[#allocation16 + $0x8] sm:$0x40] %vm859, %v856
    %v862 = vld [vmem:[#allocation2] sm:$0x3]
    %v863 = vld [vmem:[#allocation3] sm:$0x3]
    %v864 = vpack.c.bf16 %v862, %v862
    %v866 = vsel %vm323, %v864, 0
    %868 = vmatprep.subr.bf16.mxu0 0
    %869 = vmatpush1.bf16.msra.mxu0 %v319
    %870 = vmatprep.subr.bf16.mxu0 0
    %871 = vmatpush1.bf16.msra.mxu0 %v320
    %872 = vmatprep.subr.bf16.mxu0 0
    %873 = vmatpush1.bf16.msra.mxu0 0
    %874 = vmatprep.subr.bf16.mxu0 0
    %875 = vmatpush1.bf16.msra.mxu0 0
    %876 = vmatprep.subr.bf16.mxu0 0
    %877 = vmatpush1.bf16.msra.mxu0 0
    %878 = vmatprep.subr.bf16.mxu0 0
    %879 = vmatpush1.bf16.msra.mxu0 0
    %880 = vmatprep.subr.bf16.mxu0 0
    %881 = vmatpush1.bf16.msra.mxu0 0
    %882 = vmatprep.subr.bf16.mxu0 0
    %883 = vmatpush1.bf16.msra.mxu0 0
    %884 = vmatprep.subr.bf16.mxu0 0
    %885 = vmatpush1.bf16.msra.mxu0 0
    %886 = vmatprep.subr.bf16.mxu0 0
    %887 = vmatpush1.bf16.msra.mxu0 0
    %888 = vmatprep.subr.bf16.mxu0 0
    %889 = vmatpush1.bf16.msra.mxu0 0
    %890 = vmatprep.subr.bf16.mxu0 0
    %891 = vmatpush1.bf16.msra.mxu0 0
    %892 = vmatprep.subr.bf16.mxu0 0
    %893 = vmatpush1.bf16.msra.mxu0 0
    %894 = vmatprep.subr.bf16.mxu0 0
    %895 = vmatpush1.bf16.msra.mxu0 0
    %896 = vmatprep.subr.bf16.mxu0 0
    %897 = vmatpush1.bf16.msra.mxu0 0
    %898 = vmatprep.subr.bf16.mxu0 0
    %899 = vmatpush1.bf16.msra.mxu0 0
    %900 = vmatprep.mubr.bf16.mxu0 0
    %901 = vmatmul.mubr.bf16.gmra.mrb[0].mxu0 %v866
    %v902 = vpop.f32.mrb[0].mxu0
    %v903 = vadd.f32 0.0, %v902
    %v904 = vpop.f32.mrb[0].mxu0
    %v905 = vpop.f32.mrb[0].mxu0
    %v906 = vpop.f32.mrb[0].mxu0
    %907 = vdwg.mxu0
    %v909 = vrot.slane %v903, 6
    %v910 = vrot.slane %v903, 7
    %v913 = vadd.f32 %v204, %v909
    %v914 = vadd.f32 %v207, %v910
    %v915 = vmul.f32 %v913, 0.5
    %v916 = vmul.f32 %v914, 0.5
    %v917 = vtanh.pop %v915
    %v918 = vtanh.pop %v916
    %v919 = vmul.f32 %v917, 0.5
    %v920 = vmul.f32 %v918, 0.5
    %v921 = vadd.f32 %v919, 0.5
    %v922 = vadd.f32 %v920, 0.5
    %v923 = vtanh.pop %v913
    %v924 = vtanh.pop %v914
    %v926 = vrot.slane %v863, 6
    %v927 = vrot.slane %v863, 7
    %928 = vrot.lane.b32.xlu0 %v926, 32
    %v929 = vpop.permute.xlu0 %928
    %930 = vrot.lane.b32.xlu0 %v927, 32
    %v931 = vpop.permute.xlu0 %930
    %v934 = vmul.f32 %v921, %v929
    %v935 = vmul.f32 %v922, %v931
    %938 = vrot.lane.b32.xlu0 %v923, 64
    %v939 = vpop.permute.xlu0 %938
    %940 = vrot.lane.b32.xlu0 %v924, 64
    %v941 = vpop.permute.xlu0 %940
    %v944 = vmul.f32 %v921, %v939
    %v945 = vmul.f32 %v922, %v941
    %948 = vrot.lane.b32.xlu0 %v944, 32
    %v949 = vpop.permute.xlu0 %948
    %950 = vrot.lane.b32.xlu0 %v945, 32
    %v951 = vpop.permute.xlu0 %950
    %v954 = vadd.f32 %v934, %v949
    %v955 = vadd.f32 %v935, %v951
    %v956 = vtanh.pop %v954
    %v957 = vtanh.pop %v955
    %960 = vrot.lane.b32.xlu0 %v956, 64
    %v961 = vpop.permute.xlu0 %960
    %962 = vrot.lane.b32.xlu0 %v957, 64
    %v963 = vpop.permute.xlu0 %962
    %v966 = vmul.f32 %v921, %v961
    %v967 = vmul.f32 %v922, %v963
    %v970 = vrot.slane %v967, 7
    %vm971 = vcmask 1043459
    %v972 = vsel %vm971, %v970, %v966
    %973 = vrot.lane.b32.xlu0 %v972, 32
    %v974 = vpop.permute.xlu0 %973
    %vm976 = vcmask 257026
    %977 = vst.msk [vmem:[#allocation2 - $0x2] sm:$0xc] %vm976, %v974
    %v980 = vrot.slane %v955, 7
    %v981 = vsel %vm971, %v980, %v954
    %982 = vrot.lane.b32.xlu0 %v981, 96
    %v983 = vpop.permute.xlu0 %982
    %985 = vst.msk [vmem:[#allocation3 - $0x2] sm:$0xc] %vm976, %v983
    %986 = vrot.lane.b32.xlu0 %v966, 32
    %v987 = vpop.permute.xlu0 %986
    %988 = vrot.lane.b32.xlu0 %v967, 32
    %v989 = vpop.permute.xlu0 %988
    %vm992 = vcmask 256002
    %993 = vst.msk [vmem:[#allocation15] sm:$0x4] %vm992, %v987
    %994 = vst.msk [vmem:[#allocation15 + $0x8] sm:$0x4] %vm992, %v989
    %v995 = vld [vmem:[#allocation4] sm:$0x3]
    %v996 = vld [vmem:[#allocation5] sm:$0x3]
    %v997 = vpack.c.bf16 %v995, %v995
    %v999 = vsel %vm323, %v997, 0
    %1001 = vmatprep.subr.bf16.mxu0 0
    %1002 = vmatpush1.bf16.msra.mxu0 %v463
    %1003 = vmatprep.subr.bf16.mxu0 0
    %1004 = vmatpush1.bf16.msra.mxu0 %v464
    %1005 = vmatprep.subr.bf16.mxu0 0
    %1006 = vmatpush1.bf16.msra.mxu0 0
    %1007 = vmatprep.subr.bf16.mxu0 0
    %1008 = vmatpush1.bf16.msra.mxu0 0
    %1009 = vmatprep.subr.bf16.mxu0 0
    %1010 = vmatpush1.bf16.msra.mxu0 0
    %1011 = vmatprep.subr.bf16.mxu0 0
    %1012 = vmatpush1.bf16.msra.mxu0 0
    %1013 = vmatprep.subr.bf16.mxu0 0
    %1014 = vmatpush1.bf16.msra.mxu0 0
    %1015 = vmatprep.subr.bf16.mxu0 0
    %1016 = vmatpush1.bf16.msra.mxu0 0
    %1017 = vmatprep.subr.bf16.mxu0 0
    %1018 = vmatpush1.bf16.msra.mxu0 0
    %1019 = vmatprep.subr.bf16.mxu0 0
    %1020 = vmatpush1.bf16.msra.mxu0 0
    %1021 = vmatprep.subr.bf16.mxu0 0
    %1022 = vmatpush1.bf16.msra.mxu0 0
    %1023 = vmatprep.subr.bf16.mxu0 0
    %1024 = vmatpush1.bf16.msra.mxu0 0
    %1025 = vmatprep.subr.bf16.mxu0 0
    %1026 = vmatpush1.bf16.msra.mxu0 0
    %1027 = vmatprep.subr.bf16.mxu0 0
    %1028 = vmatpush1.bf16.msra.mxu0 0
    %1029 = vmatprep.subr.bf16.mxu0 0
    %1030 = vmatpush1.bf16.msra.mxu0 0
    %1031 = vmatprep.subr.bf16.mxu0 0
    %1032 = vmatpush1.bf16.msra.mxu0 0
    %1033 = vmatprep.mubr.bf16.mxu0 0
    %1034 = vmatmul.mubr.bf16.gmra.mrb[0].mxu0 %v999
    %v1035 = vpop.f32.mrb[0].mxu0
    %v1036 = vadd.f32 0.0, %v1035
    %v1037 = vpop.f32.mrb[0].mxu0
    %v1038 = vpop.f32.mrb[0].mxu0
    %v1039 = vpop.f32.mrb[0].mxu0
    %1040 = vdwg.mxu0
    %v1042 = vrot.slane %v1036, 3
    %v1043 = vrot.slane %v1036, 4
    %v1046 = vadd.f32 %v294, %v1042
    %v1047 = vadd.f32 %v297, %v1043
    %v1048 = vmul.f32 %v1046, 0.5
    %v1049 = vmul.f32 %v1047, 0.5
    %v1050 = vtanh.pop %v1048
    %v1051 = vtanh.pop %v1049
    %v1052 = vmul.f32 %v1050, 0.5
    %v1053 = vmul.f32 %v1051, 0.5
    %v1054 = vadd.f32 %v1052, 0.5
    %v1055 = vadd.f32 %v1053, 0.5
    %v1056 = vtanh.pop %v1046
    %v1057 = vtanh.pop %v1047
    %v1059 = vrot.slane %v996, 3
    %v1060 = vrot.slane %v996, 4
    %1061 = vrot.lane.b32.xlu0 %v1059, 32
    %v1062 = vpop.permute.xlu0 %1061
    %1063 = vrot.lane.b32.xlu0 %v1060, 32
    %v1064 = vpop.permute.xlu0 %1063
    %v1067 = vmul.f32 %v1054, %v1062
    %v1068 = vmul.f32 %v1055, %v1064
    %1071 = vrot.lane.b32.xlu0 %v1056, 64
    %v1072 = vpop.permute.xlu0 %1071
    %1073 = vrot.lane.b32.xlu0 %v1057, 64
    %v1074 = vpop.permute.xlu0 %1073
    %v1077 = vmul.f32 %v1054, %v1072
    %v1078 = vmul.f32 %v1055, %v1074
    %1081 = vrot.lane.b32.xlu0 %v1077, 32
    %v1082 = vpop.permute.xlu0 %1081
    %1083 = vrot.lane.b32.xlu0 %v1078, 32
    %v1084 = vpop.permute.xlu0 %1083
    %v1087 = vadd.f32 %v1067, %v1082
    %v1088 = vadd.f32 %v1068, %v1084
    %v1089 = vtanh.pop %v1087
    %v1090 = vtanh.pop %v1088
    %1093 = vrot.lane.b32.xlu0 %v1089, 64
    %v1094 = vpop.permute.xlu0 %1093
    %1095 = vrot.lane.b32.xlu0 %v1090, 64
    %v1096 = vpop.permute.xlu0 %1095
    %v1099 = vmul.f32 %v1054, %v1094
    %v1100 = vmul.f32 %v1055, %v1096
    %v1103 = vrot.slane %v1100, 7
    %vm1104 = vcmask 1046534
    %v1105 = vsel %vm1104, %v1103, %v1099
    %1106 = vrot.lane.b32.xlu0 %v1105, 32
    %v1107 = vpop.permute.xlu0 %1106
    %vm1109 = vcmask 260101
    %1110 = vst.msk [vmem:[#allocation4 - $0x5] sm:$0x60] %vm1109, %v1107
    %v1113 = vrot.slane %v1088, 7
    %v1114 = vsel %vm1104, %v1113, %v1087
    %1115 = vrot.lane.b32.xlu0 %v1114, 96
    %v1116 = vpop.permute.xlu0 %1115
    %1118 = vst.msk [vmem:[#allocation5 - $0x5] sm:$0x60] %vm1109, %v1116
    %1119 = vrot.lane.b32.xlu0 %v1099, 32
    %v1120 = vpop.permute.xlu0 %1119
    %1121 = vrot.lane.b32.xlu0 %v1100, 32
    %v1122 = vpop.permute.xlu0 %1121
    %vm1125 = vcmask 259077
    %1126 = vst.msk [vmem:[#allocation16] sm:$0x20] %vm1125, %v1120
    %1127 = vst.msk [vmem:[#allocation16 + $0x8] sm:$0x20] %vm1125, %v1122
    %v1128 = vld [vmem:[#allocation2] sm:$0x3]
    %v1129 = vld [vmem:[#allocation3] sm:$0x3]
    %v1130 = vpack.c.bf16 %v1128, %v1128
    %v1132 = vsel %vm323, %v1130, 0
    %1134 = vmatprep.subr.bf16.mxu0 0
    %1135 = vmatpush1.bf16.msra.mxu0 %v319
    %1136 = vmatprep.subr.bf16.mxu0 0
    %1137 = vmatpush1.bf16.msra.mxu0 %v320
    %1138 = vmatprep.subr.bf16.mxu0 0
    %1139 = vmatpush1.bf16.msra.mxu0 0
    %1140 = vmatprep.subr.bf16.mxu0 0
    %1141 = vmatpush1.bf16.msra.mxu0 0
    %1142 = vmatprep.subr.bf16.mxu0 0
    %1143 = vmatpush1.bf16.msra.mxu0 0
    %1144 = vmatprep.subr.bf16.mxu0 0
    %1145 = vmatpush1.bf16.msra.mxu0 0
    %1146 = vmatprep.subr.bf16.mxu0 0
    %1147 = vmatpush1.bf16.msra.mxu0 0
    %1148 = vmatprep.subr.bf16.mxu0 0
    %1149 = vmatpush1.bf16.msra.mxu0 0
    %1150 = vmatprep.subr.bf16.mxu0 0
    %1151 = vmatpush1.bf16.msra.mxu0 0
    %1152 = vmatprep.subr.bf16.mxu0 0
    %1153 = vmatpush1.bf16.msra.mxu0 0
    %1154 = vmatprep.subr.bf16.mxu0 0
    %1155 = vmatpush1.bf16.msra.mxu0 0
    %1156 = vmatprep.subr.bf16.mxu0 0
    %1157 = vmatpush1.bf16.msra.mxu0 0
    %1158 = vmatprep.subr.bf16.mxu0 0
    %1159 = vmatpush1.bf16.msra.mxu0 0
    %1160 = vmatprep.subr.bf16.mxu0 0
    %1161 = vmatpush1.bf16.msra.mxu0 0
    %1162 = vmatprep.subr.bf16.mxu0 0
    %1163 = vmatpush1.bf16.msra.mxu0 0
    %1164 = vmatprep.subr.bf16.mxu0 0
    %1165 = vmatpush1.bf16.msra.mxu0 0
    %1166 = vmatprep.mubr.bf16.mxu0 0
    %1167 = vmatmul.mubr.bf16.gmra.mrb[0].mxu0 %v1132
    %v1168 = vpop.f32.mrb[0].mxu0
    %v1169 = vadd.f32 0.0, %v1168
    %v1170 = vpop.f32.mrb[0].mxu0
    %v1171 = vpop.f32.mrb[0].mxu0
    %v1172 = vpop.f32.mrb[0].mxu0
    %1173 = vdwg.mxu0
    %v1175 = vrot.slane %v1169, 5
    %v1176 = vrot.slane %v1169, 6
    %v1179 = vadd.f32 %v204, %v1175
    %v1180 = vadd.f32 %v207, %v1176
    %v1181 = vmul.f32 %v1179, 0.5
    %v1182 = vmul.f32 %v1180, 0.5
    %v1183 = vtanh.pop %v1181
    %v1184 = vtanh.pop %v1182
    %v1185 = vmul.f32 %v1183, 0.5
    %v1186 = vmul.f32 %v1184, 0.5
    %v1187 = vadd.f32 %v1185, 0.5
    %v1188 = vadd.f32 %v1186, 0.5
    %v1189 = vtanh.pop %v1179
    %v1190 = vtanh.pop %v1180
    %v1192 = vrot.slane %v1129, 5
    %v1193 = vrot.slane %v1129, 6
    %1194 = vrot.lane.b32.xlu0 %v1192, 32
    %v1195 = vpop.permute.xlu0 %1194
    %1196 = vrot.lane.b32.xlu0 %v1193, 32
    %v1197 = vpop.permute.xlu0 %1196
    %v1200 = vmul.f32 %v1187, %v1195
    %v1201 = vmul.f32 %v1188, %v1197
    %1204 = vrot.lane.b32.xlu0 %v1189, 64
    %v1205 = vpop.permute.xlu0 %1204
    %1206 = vrot.lane.b32.xlu0 %v1190, 64
    %v1207 = vpop.permute.xlu0 %1206
    %v1210 = vmul.f32 %v1187, %v1205
    %v1211 = vmul.f32 %v1188, %v1207
    %1214 = vrot.lane.b32.xlu0 %v1210, 32
    %v1215 = vpop.permute.xlu0 %1214
    %1216 = vrot.lane.b32.xlu0 %v1211, 32
    %v1217 = vpop.permute.xlu0 %1216
    %v1220 = vadd.f32 %v1200, %v1215
    %v1221 = vadd.f32 %v1201, %v1217
    %v1222 = vtanh.pop %v1220
    %v1223 = vtanh.pop %v1221
    %1226 = vrot.lane.b32.xlu0 %v1222, 64
    %v1227 = vpop.permute.xlu0 %1226
    %1228 = vrot.lane.b32.xlu0 %v1223, 64
    %v1229 = vpop.permute.xlu0 %1228
    %v1232 = vmul.f32 %v1187, %v1227
    %v1233 = vmul.f32 %v1188, %v1229
    %v1236 = vrot.slane %v1233, 7
    %vm1237 = vcmask 1044484
    %v1238 = vsel %vm1237, %v1236, %v1232
    %1239 = vrot.lane.b32.xlu0 %v1238, 32
    %v1240 = vpop.permute.xlu0 %1239
    %vm1242 = vcmask 258051
    %1243 = vst.msk [vmem:[#allocation2 - $0x3] sm:$0x18] %vm1242, %v1240
    %v1246 = vrot.slane %v1221, 7
    %v1247 = vsel %vm1237, %v1246, %v1220
    %1248 = vrot.lane.b32.xlu0 %v1247, 96
    %v1249 = vpop.permute.xlu0 %1248
    %1251 = vst.msk [vmem:[#allocation3 - $0x3] sm:$0x18] %vm1242, %v1249
    %1252 = vrot.lane.b32.xlu0 %v1232, 32
    %v1253 = vpop.permute.xlu0 %1252
    %1254 = vrot.lane.b32.xlu0 %v1233, 32
    %v1255 = vpop.permute.xlu0 %1254
    %vm1258 = vcmask 257027
    %1259 = vst.msk [vmem:[#allocation15] sm:$0x8] %vm1258, %v1253
    %1260 = vst.msk [vmem:[#allocation15 + $0x8] sm:$0x8] %vm1258, %v1255
    %v1261 = vld [vmem:[#allocation4] sm:$0x3]
    %v1262 = vld [vmem:[#allocation5] sm:$0x3]
    %v1263 = vpack.c.bf16 %v1261, %v1261
    %v1265 = vsel %vm323, %v1263, 0
    %1267 = vmatprep.subr.bf16.mxu0 0
    %1268 = vmatpush1.bf16.msra.mxu0 %v463
    %1269 = vmatprep.subr.bf16.mxu0 0
    %1270 = vmatpush1.bf16.msra.mxu0 %v464
    %1271 = vmatprep.subr.bf16.mxu0 0
    %1272 = vmatpush1.bf16.msra.mxu0 0
    %1273 = vmatprep.subr.bf16.mxu0 0
    %1274 = vmatpush1.bf16.msra.mxu0 0
    %1275 = vmatprep.subr.bf16.mxu0 0
    %1276 = vmatpush1.bf16.msra.mxu0 0
    %1277 = vmatprep.subr.bf16.mxu0 0
    %1278 = vmatpush1.bf16.msra.mxu0 0
    %1279 = vmatprep.subr.bf16.mxu0 0
    %1280 = vmatpush1.bf16.msra.mxu0 0
    %1281 = vmatprep.subr.bf16.mxu0 0
    %1282 = vmatpush1.bf16.msra.mxu0 0
    %1283 = vmatprep.subr.bf16.mxu0 0
    %1284 = vmatpush1.bf16.msra.mxu0 0
    %1285 = vmatprep.subr.bf16.mxu0 0
    %1286 = vmatpush1.bf16.msra.mxu0 0
    %1287 = vmatprep.subr.bf16.mxu0 0
    %1288 = vmatpush1.bf16.msra.mxu0 0
    %1289 = vmatprep.subr.bf16.mxu0 0
    %1290 = vmatpush1.bf16.msra.mxu0 0
    %1291 = vmatprep.subr.bf16.mxu0 0
    %1292 = vmatpush1.bf16.msra.mxu0 0
    %1293 = vmatprep.subr.bf16.mxu0 0
    %1294 = vmatpush1.bf16.msra.mxu0 0
    %1295 = vmatprep.subr.bf16.mxu0 0
    %1296 = vmatpush1.bf16.msra.mxu0 0
    %1297 = vmatprep.subr.bf16.mxu0 0
    %1298 = vmatpush1.bf16.msra.mxu0 0
    %1299 = vmatprep.mubr.bf16.mxu0 0
    %1300 = vmatmul.mubr.bf16.gmra.mrb[0].mxu0 %v1265
    %v1301 = vpop.f32.mrb[0].mxu0
    %v1302 = vadd.f32 0.0, %v1301
    %v1303 = vpop.f32.mrb[0].mxu0
    %v1304 = vpop.f32.mrb[0].mxu0
    %v1305 = vpop.f32.mrb[0].mxu0
    %1306 = vdwg.mxu0
    %v1308 = vrot.slane %v1302, 4
    %v1309 = vrot.slane %v1302, 5
    %v1312 = vadd.f32 %v294, %v1308
    %v1313 = vadd.f32 %v297, %v1309
    %v1314 = vmul.f32 %v1312, 0.5
    %v1315 = vmul.f32 %v1313, 0.5
    %v1316 = vtanh.pop %v1314
    %v1317 = vtanh.pop %v1315
    %v1318 = vmul.f32 %v1316, 0.5
    %v1319 = vmul.f32 %v1317, 0.5
    %v1320 = vadd.f32 %v1318, 0.5
    %v1321 = vadd.f32 %v1319, 0.5
    %v1322 = vtanh.pop %v1312
    %v1323 = vtanh.pop %v1313
    %v1325 = vrot.slane %v1262, 4
    %v1326 = vrot.slane %v1262, 5
    %1327 = vrot.lane.b32.xlu0 %v1325, 32
    %v1328 = vpop.permute.xlu0 %1327
    %1329 = vrot.lane.b32.xlu0 %v1326, 32
    %v1330 = vpop.permute.xlu0 %1329
    %v1333 = vmul.f32 %v1320, %v1328
    %v1334 = vmul.f32 %v1321, %v1330
    %1337 = vrot.lane.b32.xlu0 %v1322, 64
    %v1338 = vpop.permute.xlu0 %1337
    %1339 = vrot.lane.b32.xlu0 %v1323, 64
    %v1340 = vpop.permute.xlu0 %1339
    %v1343 = vmul.f32 %v1320, %v1338
    %v1344 = vmul.f32 %v1321, %v1340
    %1347 = vrot.lane.b32.xlu0 %v1343, 32
    %v1348 = vpop.permute.xlu0 %1347
    %1349 = vrot.lane.b32.xlu0 %v1344, 32
    %v1350 = vpop.permute.xlu0 %1349
    %v1353 = vadd.f32 %v1333, %v1348
    %v1354 = vadd.f32 %v1334, %v1350
    %v1355 = vtanh.pop %v1353
    %v1356 = vtanh.pop %v1354
    %1359 = vrot.lane.b32.xlu0 %v1355, 64
    %v1360 = vpop.permute.xlu0 %1359
    %1361 = vrot.lane.b32.xlu0 %v1356, 64
    %v1362 = vpop.permute.xlu0 %1361
    %v1365 = vmul.f32 %v1320, %v1360
    %v1366 = vmul.f32 %v1321, %v1362
    %v1369 = vrot.slane %v1366, 7
    %vm1370 = vcmask 1045509
    %v1371 = vsel %vm1370, %v1369, %v1365
    %1372 = vrot.lane.b32.xlu0 %v1371, 32
    %v1373 = vpop.permute.xlu0 %1372
    %vm1375 = vcmask 259076
    %1376 = vst.msk [vmem:[#allocation4 - $0x4] sm:$0x30] %vm1375, %v1373
    %v1379 = vrot.slane %v1354, 7
    %v1380 = vsel %vm1370, %v1379, %v1353
    %1381 = vrot.lane.b32.xlu0 %v1380, 96
    %v1382 = vpop.permute.xlu0 %1381
    %1384 = vst.msk [vmem:[#allocation5 - $0x4] sm:$0x30] %vm1375, %v1382
    %1385 = vrot.lane.b32.xlu0 %v1365, 32
    %v1386 = vpop.permute.xlu0 %1385
    %1387 = vrot.lane.b32.xlu0 %v1366, 32
    %v1388 = vpop.permute.xlu0 %1387
    %vm1391 = vcmask 258052
    %1392 = vst.msk [vmem:[#allocation16] sm:$0x10] %vm1391, %v1386
    %1393 = vst.msk [vmem:[#allocation16 + $0x8] sm:$0x10] %vm1391, %v1388
    %v1394 = vld [vmem:[#allocation2] sm:$0x3]
    %v1395 = vld [vmem:[#allocation3] sm:$0x3]
    %v1396 = vpack.c.bf16 %v1394, %v1394
    %v1398 = vsel %vm323, %v1396, 0
    %1400 = vmatprep.subr.bf16.mxu0 0
    %1401 = vmatpush1.bf16.msra.mxu0 %v319
    %1402 = vmatprep.subr.bf16.mxu0 0
    %1403 = vmatpush1.bf16.msra.mxu0 %v320
    %1404 = vmatprep.subr.bf16.mxu0 0
    %1405 = vmatpush1.bf16.msra.mxu0 0
    %1406 = vmatprep.subr.bf16.mxu0 0
    %1407 = vmatpush1.bf16.msra.mxu0 0
    %1408 = vmatprep.subr.bf16.mxu0 0
    %1409 = vmatpush1.bf16.msra.mxu0 0
    %1410 = vmatprep.subr.bf16.mxu0 0
    %1411 = vmatpush1.bf16.msra.mxu0 0
    %1412 = vmatprep.subr.bf16.mxu0 0
    %1413 = vmatpush1.bf16.msra.mxu0 0
    %1414 = vmatprep.subr.bf16.mxu0 0
    %1415 = vmatpush1.bf16.msra.mxu0 0
    %1416 = vmatprep.subr.bf16.mxu0 0
    %1417 = vmatpush1.bf16.msra.mxu0 0
    %1418 = vmatprep.subr.bf16.mxu0 0
    %1419 = vmatpush1.bf16.msra.mxu0 0
    %1420 = vmatprep.subr.bf16.mxu0 0
    %1421 = vmatpush1.bf16.msra.mxu0 0
    %1422 = vmatprep.subr.bf16.mxu0 0
    %1423 = vmatpush1.bf16.msra.mxu0 0
    %1424 = vmatprep.subr.bf16.mxu0 0
    %1425 = vmatpush1.bf16.msra.mxu0 0
    %1426 = vmatprep.subr.bf16.mxu0 0
    %1427 = vmatpush1.bf16.msra.mxu0 0
    %1428 = vmatprep.subr.bf16.mxu0 0
    %1429 = vmatpush1.bf16.msra.mxu0 0
    %1430 = vmatprep.subr.bf16.mxu0 0
    %1431 = vmatpush1.bf16.msra.mxu0 0
    %1432 = vmatprep.mubr.bf16.mxu0 0
    %1433 = vmatmul.mubr.bf16.gmra.mrb[0].mxu0 %v1398
    %v1434 = vpop.f32.mrb[0].mxu0
    %v1435 = vadd.f32 0.0, %v1434
    %v1436 = vpop.f32.mrb[0].mxu0
    %v1437 = vpop.f32.mrb[0].mxu0
    %v1438 = vpop.f32.mrb[0].mxu0
    %1439 = vdwg.mxu0
    %v1441 = vrot.slane %v1435, 4
    %v1442 = vrot.slane %v1435, 5
    %v1445 = vadd.f32 %v204, %v1441
    %v1446 = vadd.f32 %v207, %v1442
    %v1447 = vmul.f32 %v1445, 0.5
    %v1448 = vmul.f32 %v1446, 0.5
    %v1449 = vtanh.pop %v1447
    %v1450 = vtanh.pop %v1448
    %v1451 = vmul.f32 %v1449, 0.5
    %v1452 = vmul.f32 %v1450, 0.5
    %v1453 = vadd.f32 %v1451, 0.5
    %v1454 = vadd.f32 %v1452, 0.5
    %v1455 = vtanh.pop %v1445
    %v1456 = vtanh.pop %v1446
    %v1458 = vrot.slane %v1395, 4
    %v1459 = vrot.slane %v1395, 5
    %1460 = vrot.lane.b32.xlu0 %v1458, 32
    %v1461 = vpop.permute.xlu0 %1460
    %1462 = vrot.lane.b32.xlu0 %v1459, 32
    %v1463 = vpop.permute.xlu0 %1462
    %v1466 = vmul.f32 %v1453, %v1461
    %v1467 = vmul.f32 %v1454, %v1463
    %1470 = vrot.lane.b32.xlu0 %v1455, 64
    %v1471 = vpop.permute.xlu0 %1470
    %1472 = vrot.lane.b32.xlu0 %v1456, 64
    %v1473 = vpop.permute.xlu0 %1472
    %v1476 = vmul.f32 %v1453, %v1471
    %v1477 = vmul.f32 %v1454, %v1473
    %1480 = vrot.lane.b32.xlu0 %v1476, 32
    %v1481 = vpop.permute.xlu0 %1480
    %1482 = vrot.lane.b32.xlu0 %v1477, 32
    %v1483 = vpop.permute.xlu0 %1482
    %v1486 = vadd.f32 %v1466, %v1481
    %v1487 = vadd.f32 %v1467, %v1483
    %v1488 = vtanh.pop %v1486
    %v1489 = vtanh.pop %v1487
    %1492 = vrot.lane.b32.xlu0 %v1488, 64
    %v1493 = vpop.permute.xlu0 %1492
    %1494 = vrot.lane.b32.xlu0 %v1489, 64
    %v1495 = vpop.permute.xlu0 %1494
    %v1498 = vmul.f32 %v1453, %v1493
    %v1499 = vmul.f32 %v1454, %v1495
    %v1502 = vrot.slane %v1499, 7
    %v1503 = vsel %vm1370, %v1502, %v1498
    %1504 = vrot.lane.b32.xlu0 %v1503, 32
    %v1505 = vpop.permute.xlu0 %1504
    %1507 = vst.msk [vmem:[#allocation2 - $0x4] sm:$0x30] %vm1375, %v1505
    %v1510 = vrot.slane %v1487, 7
    %v1511 = vsel %vm1370, %v1510, %v1486
    %1512 = vrot.lane.b32.xlu0 %v1511, 96
    %v1513 = vpop.permute.xlu0 %1512
    %1515 = vst.msk [vmem:[#allocation3 - $0x4] sm:$0x30] %vm1375, %v1513
    %1516 = vrot.lane.b32.xlu0 %v1498, 32
    %v1517 = vpop.permute.xlu0 %1516
    %1518 = vrot.lane.b32.xlu0 %v1499, 32
    %v1519 = vpop.permute.xlu0 %1518
    %1522 = vst.msk [vmem:[#allocation15] sm:$0x10] %vm1391, %v1517
    %1523 = vst.msk [vmem:[#allocation15 + $0x8] sm:$0x10] %vm1391, %v1519
    %v1524 = vld [vmem:[#allocation4] sm:$0x3]
    %v1525 = vld [vmem:[#allocation5] sm:$0x3]
    %v1526 = vpack.c.bf16 %v1524, %v1524
    %v1528 = vsel %vm323, %v1526, 0
    %1530 = vmatprep.subr.bf16.mxu0 0
    %1531 = vmatpush1.bf16.msra.mxu0 %v463
    %1532 = vmatprep.subr.bf16.mxu0 0
    %1533 = vmatpush1.bf16.msra.mxu0 %v464
    %1534 = vmatprep.subr.bf16.mxu0 0
    %1535 = vmatpush1.bf16.msra.mxu0 0
    %1536 = vmatprep.subr.bf16.mxu0 0
    %1537 = vmatpush1.bf16.msra.mxu0 0
    %1538 = vmatprep.subr.bf16.mxu0 0
    %1539 = vmatpush1.bf16.msra.mxu0 0
    %1540 = vmatprep.subr.bf16.mxu0 0
    %1541 = vmatpush1.bf16.msra.mxu0 0
    %1542 = vmatprep.subr.bf16.mxu0 0
    %1543 = vmatpush1.bf16.msra.mxu0 0
    %1544 = vmatprep.subr.bf16.mxu0 0
    %1545 = vmatpush1.bf16.msra.mxu0 0
    %1546 = vmatprep.subr.bf16.mxu0 0
    %1547 = vmatpush1.bf16.msra.mxu0 0
    %1548 = vmatprep.subr.bf16.mxu0 0
    %1549 = vmatpush1.bf16.msra.mxu0 0
    %1550 = vmatprep.subr.bf16.mxu0 0
    %1551 = vmatpush1.bf16.msra.mxu0 0
    %1552 = vmatprep.subr.bf16.mxu0 0
    %1553 = vmatpush1.bf16.msra.mxu0 0
    %1554 = vmatprep.subr.bf16.mxu0 0
    %1555 = vmatpush1.bf16.msra.mxu0 0
    %1556 = vmatprep.subr.bf16.mxu0 0
    %1557 = vmatpush1.bf16.msra.mxu0 0
    %1558 = vmatprep.subr.bf16.mxu0 0
    %1559 = vmatpush1.bf16.msra.mxu0 0
    %1560 = vmatprep.subr.bf16.mxu0 0
    %1561 = vmatpush1.bf16.msra.mxu0 0
    %1562 = vmatprep.mubr.bf16.mxu0 0
    %1563 = vmatmul.mubr.bf16.gmra.mrb[0].mxu0 %v1528
    %v1564 = vpop.f32.mrb[0].mxu0
    %v1565 = vadd.f32 0.0, %v1564
    %v1566 = vpop.f32.mrb[0].mxu0
    %v1567 = vpop.f32.mrb[0].mxu0
    %v1568 = vpop.f32.mrb[0].mxu0
    %1569 = vdwg.mxu0
    %v1571 = vrot.slane %v1565, 5
    %v1572 = vrot.slane %v1565, 6
    %v1575 = vadd.f32 %v294, %v1571
    %v1576 = vadd.f32 %v297, %v1572
    %v1577 = vmul.f32 %v1575, 0.5
    %v1578 = vmul.f32 %v1576, 0.5
    %v1579 = vtanh.pop %v1577
    %v1580 = vtanh.pop %v1578
    %v1581 = vmul.f32 %v1579, 0.5
    %v1582 = vmul.f32 %v1580, 0.5
    %v1583 = vadd.f32 %v1581, 0.5
    %v1584 = vadd.f32 %v1582, 0.5
    %v1585 = vtanh.pop %v1575
    %v1586 = vtanh.pop %v1576
    %v1588 = vrot.slane %v1525, 5
    %v1589 = vrot.slane %v1525, 6
    %1590 = vrot.lane.b32.xlu0 %v1588, 32
    %v1591 = vpop.permute.xlu0 %1590
    %1592 = vrot.lane.b32.xlu0 %v1589, 32
    %v1593 = vpop.permute.xlu0 %1592
    %v1596 = vmul.f32 %v1583, %v1591
    %v1597 = vmul.f32 %v1584, %v1593
    %1600 = vrot.lane.b32.xlu0 %v1585, 64
    %v1601 = vpop.permute.xlu0 %1600
    %1602 = vrot.lane.b32.xlu0 %v1586, 64
    %v1603 = vpop.permute.xlu0 %1602
    %v1606 = vmul.f32 %v1583, %v1601
    %v1607 = vmul.f32 %v1584, %v1603
    %1610 = vrot.lane.b32.xlu0 %v1606, 32
    %v1611 = vpop.permute.xlu0 %1610
    %1612 = vrot.lane.b32.xlu0 %v1607, 32
    %v1613 = vpop.permute.xlu0 %1612
    %v1616 = vadd.f32 %v1596, %v1611
    %v1617 = vadd.f32 %v1597, %v1613
    %v1618 = vtanh.pop %v1616
    %v1619 = vtanh.pop %v1617
    %1622 = vrot.lane.b32.xlu0 %v1618, 64
    %v1623 = vpop.permute.xlu0 %1622
    %1624 = vrot.lane.b32.xlu0 %v1619, 64
    %v1625 = vpop.permute.xlu0 %1624
    %v1628 = vmul.f32 %v1583, %v1623
    %v1629 = vmul.f32 %v1584, %v1625
    %v1632 = vrot.slane %v1629, 7
    %v1633 = vsel %vm1237, %v1632, %v1628
    %1634 = vrot.lane.b32.xlu0 %v1633, 32
    %v1635 = vpop.permute.xlu0 %1634
    %1637 = vst.msk [vmem:[#allocation4 - $0x3] sm:$0x18] %vm1242, %v1635
    %v1640 = vrot.slane %v1617, 7
    %v1641 = vsel %vm1237, %v1640, %v1616
    %1642 = vrot.lane.b32.xlu0 %v1641, 96
    %v1643 = vpop.permute.xlu0 %1642
    %1645 = vst.msk [vmem:[#allocation5 - $0x3] sm:$0x18] %vm1242, %v1643
    %1646 = vrot.lane.b32.xlu0 %v1628, 32
    %v1647 = vpop.permute.xlu0 %1646
    %1648 = vrot.lane.b32.xlu0 %v1629, 32
    %v1649 = vpop.permute.xlu0 %1648
    %1652 = vst.msk [vmem:[#allocation16] sm:$0x8] %vm1258, %v1647
    %1653 = vst.msk [vmem:[#allocation16 + $0x8] sm:$0x8] %vm1258, %v1649
    %v1654 = vld [vmem:[#allocation2] sm:$0x3]
    %v1655 = vld [vmem:[#allocation3] sm:$0x3]
    %v1656 = vpack.c.bf16 %v1654, %v1654
    %v1658 = vsel %vm323, %v1656, 0
    %1660 = vmatprep.subr.bf16.mxu0 0
    %1661 = vmatpush1.bf16.msra.mxu0 %v319
    %1662 = vmatprep.subr.bf16.mxu0 0
    %1663 = vmatpush1.bf16.msra.mxu0 %v320
    %1664 = vmatprep.subr.bf16.mxu0 0
    %1665 = vmatpush1.bf16.msra.mxu0 0
    %1666 = vmatprep.subr.bf16.mxu0 0
    %1667 = vmatpush1.bf16.msra.mxu0 0
    %1668 = vmatprep.subr.bf16.mxu0 0
    %1669 = vmatpush1.bf16.msra.mxu0 0
    %1670 = vmatprep.subr.bf16.mxu0 0
    %1671 = vmatpush1.bf16.msra.mxu0 0
    %1672 = vmatprep.subr.bf16.mxu0 0
    %1673 = vmatpush1.bf16.msra.mxu0 0
    %1674 = vmatprep.subr.bf16.mxu0 0
    %1675 = vmatpush1.bf16.msra.mxu0 0
    %1676 = vmatprep.subr.bf16.mxu0 0
    %1677 = vmatpush1.bf16.msra.mxu0 0
    %1678 = vmatprep.subr.bf16.mxu0 0
    %1679 = vmatpush1.bf16.msra.mxu0 0
    %1680 = vmatprep.subr.bf16.mxu0 0
    %1681 = vmatpush1.bf16.msra.mxu0 0
    %1682 = vmatprep.subr.bf16.mxu0 0
    %1683 = vmatpush1.bf16.msra.mxu0 0
    %1684 = vmatprep.subr.bf16.mxu0 0
    %1685 = vmatpush1.bf16.msra.mxu0 0
    %1686 = vmatprep.subr.bf16.mxu0 0
    %1687 = vmatpush1.bf16.msra.mxu0 0
    %1688 = vmatprep.subr.bf16.mxu0 0
    %1689 = vmatpush1.bf16.msra.mxu0 0
    %1690 = vmatprep.subr.bf16.mxu0 0
    %1691 = vmatpush1.bf16.msra.mxu0 0
    %1692 = vmatprep.mubr.bf16.mxu0 0
    %1693 = vmatmul.mubr.bf16.gmra.mrb[0].mxu0 %v1658
    %v1694 = vpop.f32.mrb[0].mxu0
    %v1695 = vadd.f32 0.0, %v1694
    %v1696 = vpop.f32.mrb[0].mxu0
    %v1697 = vpop.f32.mrb[0].mxu0
    %v1698 = vpop.f32.mrb[0].mxu0
    %1699 = vdwg.mxu0
    %v1701 = vrot.slane %v1695, 3
    %v1702 = vrot.slane %v1695, 4
    %v1705 = vadd.f32 %v204, %v1701
    %v1706 = vadd.f32 %v207, %v1702
    %v1707 = vmul.f32 %v1705, 0.5
    %v1708 = vmul.f32 %v1706, 0.5
    %v1709 = vtanh.pop %v1707
    %v1710 = vtanh.pop %v1708
    %v1711 = vmul.f32 %v1709, 0.5
    %v1712 = vmul.f32 %v1710, 0.5
    %v1713 = vadd.f32 %v1711, 0.5
    %v1714 = vadd.f32 %v1712, 0.5
    %v1715 = vtanh.pop %v1705
    %v1716 = vtanh.pop %v1706
    %v1718 = vrot.slane %v1655, 3
    %v1719 = vrot.slane %v1655, 4
    %1720 = vrot.lane.b32.xlu0 %v1718, 32
    %v1721 = vpop.permute.xlu0 %1720
    %1722 = vrot.lane.b32.xlu0 %v1719, 32
    %v1723 = vpop.permute.xlu0 %1722
    %v1726 = vmul.f32 %v1713, %v1721
    %v1727 = vmul.f32 %v1714, %v1723
    %1730 = vrot.lane.b32.xlu0 %v1715, 64
    %v1731 = vpop.permute.xlu0 %1730
    %1732 = vrot.lane.b32.xlu0 %v1716, 64
    %v1733 = vpop.permute.xlu0 %1732
    %v1736 = vmul.f32 %v1713, %v1731
    %v1737 = vmul.f32 %v1714, %v1733
    %1740 = vrot.lane.b32.xlu0 %v1736, 32
    %v1741 = vpop.permute.xlu0 %1740
    %1742 = vrot.lane.b32.xlu0 %v1737, 32
    %v1743 = vpop.permute.xlu0 %1742
    %v1746 = vadd.f32 %v1726, %v1741
    %v1747 = vadd.f32 %v1727, %v1743
    %v1748 = vtanh.pop %v1746
    %v1749 = vtanh.pop %v1747
    %1752 = vrot.lane.b32.xlu0 %v1748, 64
    %v1753 = vpop.permute.xlu0 %1752
    %1754 = vrot.lane.b32.xlu0 %v1749, 64
    %v1755 = vpop.permute.xlu0 %1754
    %v1758 = vmul.f32 %v1713, %v1753
    %v1759 = vmul.f32 %v1714, %v1755
    %v1762 = vrot.slane %v1759, 7
    %v1763 = vsel %vm1104, %v1762, %v1758
    %1764 = vrot.lane.b32.xlu0 %v1763, 32
    %v1765 = vpop.permute.xlu0 %1764
    %1767 = vst.msk [vmem:[#allocation2 - $0x5] sm:$0x60] %vm1109, %v1765
    %v1770 = vrot.slane %v1747, 7
    %v1771 = vsel %vm1104, %v1770, %v1746
    %1772 = vrot.lane.b32.xlu0 %v1771, 96
    %v1773 = vpop.permute.xlu0 %1772
    %1775 = vst.msk [vmem:[#allocation3 - $0x5] sm:$0x60] %vm1109, %v1773
    %1776 = vrot.lane.b32.xlu0 %v1758, 32
    %v1777 = vpop.permute.xlu0 %1776
    %1778 = vrot.lane.b32.xlu0 %v1759, 32
    %v1779 = vpop.permute.xlu0 %1778
    %1782 = vst.msk [vmem:[#allocation15] sm:$0x20] %vm1125, %v1777
    %1783 = vst.msk [vmem:[#allocation15 + $0x8] sm:$0x20] %vm1125, %v1779
    %v1784 = vld [vmem:[#allocation4] sm:$0x3]
    %v1785 = vld [vmem:[#allocation5] sm:$0x3]
    %v1786 = vpack.c.bf16 %v1784, %v1784
    %v1788 = vsel %vm323, %v1786, 0
    %1790 = vmatprep.subr.bf16.mxu0 0
    %1791 = vmatpush1.bf16.msra.mxu0 %v463
    %1792 = vmatprep.subr.bf16.mxu0 0
    %1793 = vmatpush1.bf16.msra.mxu0 %v464
    %1794 = vmatprep.subr.bf16.mxu0 0
    %1795 = vmatpush1.bf16.msra.mxu0 0
    %1796 = vmatprep.subr.bf16.mxu0 0
    %1797 = vmatpush1.bf16.msra.mxu0 0
    %1798 = vmatprep.subr.bf16.mxu0 0
    %1799 = vmatpush1.bf16.msra.mxu0 0
    %1800 = vmatprep.subr.bf16.mxu0 0
    %1801 = vmatpush1.bf16.msra.mxu0 0
    %1802 = vmatprep.subr.bf16.mxu0 0
    %1803 = vmatpush1.bf16.msra.mxu0 0
    %1804 = vmatprep.subr.bf16.mxu0 0
    %1805 = vmatpush1.bf16.msra.mxu0 0
    %1806 = vmatprep.subr.bf16.mxu0 0
    %1807 = vmatpush1.bf16.msra.mxu0 0
    %1808 = vmatprep.subr.bf16.mxu0 0
    %1809 = vmatpush1.bf16.msra.mxu0 0
    %1810 = vmatprep.subr.bf16.mxu0 0
    %1811 = vmatpush1.bf16.msra.mxu0 0
    %1812 = vmatprep.subr.bf16.mxu0 0
    %1813 = vmatpush1.bf16.msra.mxu0 0
    %1814 = vmatprep.subr.bf16.mxu0 0
    %1815 = vmatpush1.bf16.msra.mxu0 0
    %1816 = vmatprep.subr.bf16.mxu0 0
    %1817 = vmatpush1.bf16.msra.mxu0 0
    %1818 = vmatprep.subr.bf16.mxu0 0
    %1819 = vmatpush1.bf16.msra.mxu0 0
    %1820 = vmatprep.subr.bf16.mxu0 0
    %1821 = vmatpush1.bf16.msra.mxu0 0
    %1822 = vmatprep.mubr.bf16.mxu0 0
    %1823 = vmatmul.mubr.bf16.gmra.mrb[0].mxu0 %v1788
    %v1824 = vpop.f32.mrb[0].mxu0
    %v1825 = vadd.f32 0.0, %v1824
    %v1826 = vpop.f32.mrb[0].mxu0
    %v1827 = vpop.f32.mrb[0].mxu0
    %v1828 = vpop.f32.mrb[0].mxu0
    %1829 = vdwg.mxu0
    %v1831 = vrot.slane %v1825, 6
    %v1832 = vrot.slane %v1825, 7
    %v1835 = vadd.f32 %v294, %v1831
    %v1836 = vadd.f32 %v297, %v1832
    %v1837 = vmul.f32 %v1835, 0.5
    %v1838 = vmul.f32 %v1836, 0.5
    %v1839 = vtanh.pop %v1837
    %v1840 = vtanh.pop %v1838
    %v1841 = vmul.f32 %v1839, 0.5
    %v1842 = vmul.f32 %v1840, 0.5
    %v1843 = vadd.f32 %v1841, 0.5
    %v1844 = vadd.f32 %v1842, 0.5
    %v1845 = vtanh.pop %v1835
    %v1846 = vtanh.pop %v1836
    %v1848 = vrot.slane %v1785, 6
    %v1849 = vrot.slane %v1785, 7
    %1850 = vrot.lane.b32.xlu0 %v1848, 32
    %v1851 = vpop.permute.xlu0 %1850
    %1852 = vrot.lane.b32.xlu0 %v1849, 32
    %v1853 = vpop.permute.xlu0 %1852
    %v1856 = vmul.f32 %v1843, %v1851
    %v1857 = vmul.f32 %v1844, %v1853
    %1860 = vrot.lane.b32.xlu0 %v1845, 64
    %v1861 = vpop.permute.xlu0 %1860
    %1862 = vrot.lane.b32.xlu0 %v1846, 64
    %v1863 = vpop.permute.xlu0 %1862
    %v1866 = vmul.f32 %v1843, %v1861
    %v1867 = vmul.f32 %v1844, %v1863
    %1870 = vrot.lane.b32.xlu0 %v1866, 32
    %v1871 = vpop.permute.xlu0 %1870
    %1872 = vrot.lane.b32.xlu0 %v1867, 32
    %v1873 = vpop.permute.xlu0 %1872
    %v1876 = vadd.f32 %v1856, %v1871
    %v1877 = vadd.f32 %v1857, %v1873
    %v1878 = vtanh.pop %v1876
    %v1879 = vtanh.pop %v1877
    %1882 = vrot.lane.b32.xlu0 %v1878, 64
    %v1883 = vpop.permute.xlu0 %1882
    %1884 = vrot.lane.b32.xlu0 %v1879, 64
    %v1885 = vpop.permute.xlu0 %1884
    %v1888 = vmul.f32 %v1843, %v1883
    %v1889 = vmul.f32 %v1844, %v1885
    %v1892 = vrot.slane %v1889, 7
    %v1893 = vsel %vm971, %v1892, %v1888
    %1894 = vrot.lane.b32.xlu0 %v1893, 32
    %v1895 = vpop.permute.xlu0 %1894
    %1897 = vst.msk [vmem:[#allocation4 - $0x2] sm:$0xc] %vm976, %v1895
    %v1900 = vrot.slane %v1877, 7
    %v1901 = vsel %vm971, %v1900, %v1876
    %1902 = vrot.lane.b32.xlu0 %v1901, 96
    %v1903 = vpop.permute.xlu0 %1902
    %1905 = vst.msk [vmem:[#allocation5 - $0x2] sm:$0xc] %vm976, %v1903
    %1906 = vrot.lane.b32.xlu0 %v1888, 32
    %v1907 = vpop.permute.xlu0 %1906
    %1908 = vrot.lane.b32.xlu0 %v1889, 32
    %v1909 = vpop.permute.xlu0 %1908
    %1912 = vst.msk [vmem:[#allocation16] sm:$0x4] %vm992, %v1907
    %1913 = vst.msk [vmem:[#allocation16 + $0x8] sm:$0x4] %vm992, %v1909
    %v1914 = vld [vmem:[#allocation2] sm:$0x3]
    %v1915 = vld [vmem:[#allocation3] sm:$0x3]
    %v1916 = vpack.c.bf16 %v1914, %v1914
    %v1918 = vsel %vm323, %v1916, 0
    %1920 = vmatprep.subr.bf16.mxu0 0
    %1921 = vmatpush1.bf16.msra.mxu0 %v319
    %1922 = vmatprep.subr.bf16.mxu0 0
    %1923 = vmatpush1.bf16.msra.mxu0 %v320
    %1924 = vmatprep.subr.bf16.mxu0 0
    %1925 = vmatpush1.bf16.msra.mxu0 0
    %1926 = vmatprep.subr.bf16.mxu0 0
    %1927 = vmatpush1.bf16.msra.mxu0 0
    %1928 = vmatprep.subr.bf16.mxu0 0
    %1929 = vmatpush1.bf16.msra.mxu0 0
    %1930 = vmatprep.subr.bf16.mxu0 0
    %1931 = vmatpush1.bf16.msra.mxu0 0
    %1932 = vmatprep.subr.bf16.mxu0 0
    %1933 = vmatpush1.bf16.msra.mxu0 0
    %1934 = vmatprep.subr.bf16.mxu0 0
    %1935 = vmatpush1.bf16.msra.mxu0 0
    %1936 = vmatprep.subr.bf16.mxu0 0
    %1937 = vmatpush1.bf16.msra.mxu0 0
    %1938 = vmatprep.subr.bf16.mxu0 0
    %1939 = vmatpush1.bf16.msra.mxu0 0
    %1940 = vmatprep.subr.bf16.mxu0 0
    %1941 = vmatpush1.bf16.msra.mxu0 0
    %1942 = vmatprep.subr.bf16.mxu0 0
    %1943 = vmatpush1.bf16.msra.mxu0 0
    %1944 = vmatprep.subr.bf16.mxu0 0
    %1945 = vmatpush1.bf16.msra.mxu0 0
    %1946 = vmatprep.subr.bf16.mxu0 0
    %1947 = vmatpush1.bf16.msra.mxu0 0
    %1948 = vmatprep.subr.bf16.mxu0 0
    %1949 = vmatpush1.bf16.msra.mxu0 0
    %1950 = vmatprep.subr.bf16.mxu0 0
    %1951 = vmatpush1.bf16.msra.mxu0 0
    %1952 = vmatprep.mubr.bf16.mxu0 0
    %1953 = vmatmul.mubr.bf16.gmra.mrb[0].mxu0 %v1918
    %v1954 = vpop.f32.mrb[0].mxu0
    %v1955 = vadd.f32 0.0, %v1954
    %v1956 = vpop.f32.mrb[0].mxu0
    %v1957 = vpop.f32.mrb[0].mxu0
    %v1958 = vpop.f32.mrb[0].mxu0
    %1959 = vdwg.mxu0
    %v1961 = vrot.slane %v1955, 2
    %v1962 = vrot.slane %v1955, 3
    %v1965 = vadd.f32 %v204, %v1961
    %v1966 = vadd.f32 %v207, %v1962
    %v1967 = vmul.f32 %v1965, 0.5
    %v1968 = vmul.f32 %v1966, 0.5
    %v1969 = vtanh.pop %v1967
    %v1970 = vtanh.pop %v1968
    %v1971 = vmul.f32 %v1969, 0.5
    %v1972 = vmul.f32 %v1970, 0.5
    %v1973 = vadd.f32 %v1971, 0.5
    %v1974 = vadd.f32 %v1972, 0.5
    %v1975 = vtanh.pop %v1965
    %v1976 = vtanh.pop %v1966
    %v1978 = vrot.slane %v1915, 2
    %v1979 = vrot.slane %v1915, 3
    %1980 = vrot.lane.b32.xlu0 %v1978, 32
    %v1981 = vpop.permute.xlu0 %1980
    %1982 = vrot.lane.b32.xlu0 %v1979, 32
    %v1983 = vpop.permute.xlu0 %1982
    %v1986 = vmul.f32 %v1973, %v1981
    %v1987 = vmul.f32 %v1974, %v1983
    %1990 = vrot.lane.b32.xlu0 %v1975, 64
    %v1991 = vpop.permute.xlu0 %1990
    %1992 = vrot.lane.b32.xlu0 %v1976, 64
    %v1993 = vpop.permute.xlu0 %1992
    %v1996 = vmul.f32 %v1973, %v1991
    %v1997 = vmul.f32 %v1974, %v1993
    %2000 = vrot.lane.b32.xlu0 %v1996, 32
    %v2001 = vpop.permute.xlu0 %2000
    %2002 = vrot.lane.b32.xlu0 %v1997, 32
    %v2003 = vpop.permute.xlu0 %2002
    %v2006 = vadd.f32 %v1986, %v2001
    %v2007 = vadd.f32 %v1987, %v2003
    %v2008 = vtanh.pop %v2006
    %v2009 = vtanh.pop %v2007
    %2012 = vrot.lane.b32.xlu0 %v2008, 64
    %v2013 = vpop.permute.xlu0 %2012
    %2014 = vrot.lane.b32.xlu0 %v2009, 64
    %v2015 = vpop.permute.xlu0 %2014
    %v2018 = vmul.f32 %v1973, %v2013
    %v2019 = vmul.f32 %v1974, %v2015
    %v2022 = vrot.slane %v2019, 7
    %v2023 = vsel %vm838, %v2022, %v2018
    %2024 = vrot.lane.b32.xlu0 %v2023, 32
    %v2025 = vpop.permute.xlu0 %2024
    %2027 = vst.msk [vmem:[#allocation2 - $0x6] sm:$0xc0] %vm843, %v2025
    %v2030 = vrot.slane %v2007, 7
    %v2031 = vsel %vm838, %v2030, %v2006
    %2032 = vrot.lane.b32.xlu0 %v2031, 96
    %v2033 = vpop.permute.xlu0 %2032
    %2035 = vst.msk [vmem:[#allocation3 - $0x6] sm:$0xc0] %vm843, %v2033
    %2036 = vrot.lane.b32.xlu0 %v2018, 32
    %v2037 = vpop.permute.xlu0 %2036
    %2038 = vrot.lane.b32.xlu0 %v2019, 32
    %v2039 = vpop.permute.xlu0 %2038
    %2042 = vst.msk [vmem:[#allocation15] sm:$0x40] %vm859, %v2037
    %2043 = vst.msk [vmem:[#allocation15 + $0x8] sm:$0x40] %vm859, %v2039
    %v2044 = vld [vmem:[#allocation4] sm:$0x3]
    %v2045 = vld [vmem:[#allocation5] sm:$0x3]
    %v2046 = vpack.c.bf16 %v2044, %v2044
    %v2048 = vsel %vm323, %v2046, 0
    %2050 = vmatprep.subr.bf16.mxu0 0
    %2051 = vmatpush1.bf16.msra.mxu0 %v463
    %2052 = vmatprep.subr.bf16.mxu0 0
    %2053 = vmatpush1.bf16.msra.mxu0 %v464
    %2054 = vmatprep.subr.bf16.mxu0 0
    %2055 = vmatpush1.bf16.msra.mxu0 0
    %2056 = vmatprep.subr.bf16.mxu0 0
    %2057 = vmatpush1.bf16.msra.mxu0 0
    %2058 = vmatprep.subr.bf16.mxu0 0
    %2059 = vmatpush1.bf16.msra.mxu0 0
    %2060 = vmatprep.subr.bf16.mxu0 0
    %2061 = vmatpush1.bf16.msra.mxu0 0
    %2062 = vmatprep.subr.bf16.mxu0 0
    %2063 = vmatpush1.bf16.msra.mxu0 0
    %2064 = vmatprep.subr.bf16.mxu0 0
    %2065 = vmatpush1.bf16.msra.mxu0 0
    %2066 = vmatprep.subr.bf16.mxu0 0
    %2067 = vmatpush1.bf16.msra.mxu0 0
    %2068 = vmatprep.subr.bf16.mxu0 0
    %2069 = vmatpush1.bf16.msra.mxu0 0
    %2070 = vmatprep.subr.bf16.mxu0 0
    %2071 = vmatpush1.bf16.msra.mxu0 0
    %2072 = vmatprep.subr.bf16.mxu0 0
    %2073 = vmatpush1.bf16.msra.mxu0 0
    %2074 = vmatprep.subr.bf16.mxu0 0
    %2075 = vmatpush1.bf16.msra.mxu0 0
    %2076 = vmatprep.subr.bf16.mxu0 0
    %2077 = vmatpush1.bf16.msra.mxu0 0
    %2078 = vmatprep.subr.bf16.mxu0 0
    %2079 = vmatpush1.bf16.msra.mxu0 0
    %2080 = vmatprep.subr.bf16.mxu0 0
    %2081 = vmatpush1.bf16.msra.mxu0 0
    %2082 = vmatprep.mubr.bf16.mxu0 0
    %2083 = vmatmul.mubr.bf16.gmra.mrb[0].mxu0 %v2048
    %v2084 = vpop.f32.mrb[0].mxu0
    %v2085 = vadd.f32 0.0, %v2084
    %v2086 = vpop.f32.mrb[0].mxu0
    %v2087 = vpop.f32.mrb[0].mxu0
    %v2088 = vpop.f32.mrb[0].mxu0
    %2089 = vdwg.mxu0
    %v2091 = vrot.slane %v2085, 7
    %v2094 = vadd.f32 %v294, %v2091
    %v2095 = vadd.f32 %v297, %v2085
    %v2096 = vmul.f32 %v2094, 0.5
    %v2097 = vmul.f32 %v2095, 0.5
    %v2098 = vtanh.pop %v2096
    %v2099 = vtanh.pop %v2097
    %v2100 = vmul.f32 %v2098, 0.5
    %v2101 = vmul.f32 %v2099, 0.5
    %v2102 = vadd.f32 %v2100, 0.5
    %v2103 = vadd.f32 %v2101, 0.5
    %v2104 = vtanh.pop %v2094
    %v2105 = vtanh.pop %v2095
    %v2107 = vrot.slane %v2045, 7
    %2108 = vrot.lane.b32.xlu0 %v2107, 32
    %v2109 = vpop.permute.xlu0 %2108
    %2110 = vrot.lane.b32.xlu0 %v2045, 32
    %v2111 = vpop.permute.xlu0 %2110
    %v2114 = vmul.f32 %v2102, %v2109
    %v2115 = vmul.f32 %v2103, %v2111
    %2118 = vrot.lane.b32.xlu0 %v2104, 64
    %v2119 = vpop.permute.xlu0 %2118
    %2120 = vrot.lane.b32.xlu0 %v2105, 64
    %v2121 = vpop.permute.xlu0 %2120
    %v2124 = vmul.f32 %v2102, %v2119
    %v2125 = vmul.f32 %v2103, %v2121
    %2128 = vrot.lane.b32.xlu0 %v2124, 32
    %v2129 = vpop.permute.xlu0 %2128
    %2130 = vrot.lane.b32.xlu0 %v2125, 32
    %v2131 = vpop.permute.xlu0 %2130
    %v2134 = vadd.f32 %v2114, %v2129
    %v2135 = vadd.f32 %v2115, %v2131
    %v2136 = vtanh.pop %v2134
    %v2137 = vtanh.pop %v2135
    %2140 = vrot.lane.b32.xlu0 %v2136, 64
    %v2141 = vpop.permute.xlu0 %2140
    %2142 = vrot.lane.b32.xlu0 %v2137, 64
    %v2143 = vpop.permute.xlu0 %2142
    %v2146 = vmul.f32 %v2102, %v2141
    %v2147 = vmul.f32 %v2103, %v2143
    %v2150 = vrot.slane %v2147, 7
    %v2151 = vsel %vm705, %v2150, %v2146
    %2152 = vrot.lane.b32.xlu0 %v2151, 32
    %v2153 = vpop.permute.xlu0 %2152
    %2155 = vst.msk [vmem:[#allocation4 - $0x1] sm:$0x6] %vm710, %v2153
    %v2158 = vrot.slane %v2135, 7
    %v2159 = vsel %vm705, %v2158, %v2134
    %2160 = vrot.lane.b32.xlu0 %v2159, 96
    %v2161 = vpop.permute.xlu0 %2160
    %2163 = vst.msk [vmem:[#allocation5 - $0x1] sm:$0x6] %vm710, %v2161
    %2164 = vrot.lane.b32.xlu0 %v2146, 32
    %v2165 = vpop.permute.xlu0 %2164
    %2166 = vrot.lane.b32.xlu0 %v2147, 32
    %v2167 = vpop.permute.xlu0 %2166
    %2170 = vst.msk [vmem:[#allocation16] sm:$0x2] %vm726, %v2165
    %2171 = vst.msk [vmem:[#allocation16 + $0x8] sm:$0x2] %vm726, %v2167
    %v2172 = vld [vmem:[#allocation2] sm:$0x3]
    %v2173 = vld [vmem:[#allocation3] sm:$0x3]
    %v2174 = vpack.c.bf16 %v2172, %v2172
    %v2176 = vsel %vm323, %v2174, 0
    %2178 = vmatprep.subr.bf16.mxu0 0
    %2179 = vmatpush1.bf16.msra.mxu0 %v319
    %2180 = vmatprep.subr.bf16.mxu0 0
    %2181 = vmatpush1.bf16.msra.mxu0 %v320
    %2182 = vmatprep.subr.bf16.mxu0 0
    %2183 = vmatpush1.bf16.msra.mxu0 0
    %2184 = vmatprep.subr.bf16.mxu0 0
    %2185 = vmatpush1.bf16.msra.mxu0 0
    %2186 = vmatprep.subr.bf16.mxu0 0
    %2187 = vmatpush1.bf16.msra.mxu0 0
    %2188 = vmatprep.subr.bf16.mxu0 0
    %2189 = vmatpush1.bf16.msra.mxu0 0
    %2190 = vmatprep.subr.bf16.mxu0 0
    %2191 = vmatpush1.bf16.msra.mxu0 0
    %2192 = vmatprep.subr.bf16.mxu0 0
    %2193 = vmatpush1.bf16.msra.mxu0 0
    %2194 = vmatprep.subr.bf16.mxu0 0
    %2195 = vmatpush1.bf16.msra.mxu0 0
    %2196 = vmatprep.subr.bf16.mxu0 0
    %2197 = vmatpush1.bf16.msra.mxu0 0
    %2198 = vmatprep.subr.bf16.mxu0 0
    %2199 = vmatpush1.bf16.msra.mxu0 0
    %2200 = vmatprep.subr.bf16.mxu0 0
    %2201 = vmatpush1.bf16.msra.mxu0 0
    %2202 = vmatprep.subr.bf16.mxu0 0
    %2203 = vmatpush1.bf16.msra.mxu0 0
    %2204 = vmatprep.subr.bf16.mxu0 0
    %2205 = vmatpush1.bf16.msra.mxu0 0
    %2206 = vmatprep.subr.bf16.mxu0 0
    %2207 = vmatpush1.bf16.msra.mxu0 0
    %2208 = vmatprep.subr.bf16.mxu0 0
    %2209 = vmatpush1.bf16.msra.mxu0 0
    %2210 = vmatprep.mubr.bf16.mxu0 0
    %2211 = vmatmul.mubr.bf16.gmra.mrb[0].mxu0 %v2176
    %v2212 = vpop.f32.mrb[0].mxu0
    %v2213 = vadd.f32 0.0, %v2212
    %v2214 = vpop.f32.mrb[0].mxu0
    %v2215 = vpop.f32.mrb[0].mxu0
    %v2216 = vpop.f32.mrb[0].mxu0
    %2217 = vdwg.mxu0
    %v2219 = vrot.slane %v2213, 1
    %v2220 = vrot.slane %v2213, 2
    %v2223 = vadd.f32 %v204, %v2219
    %v2224 = vadd.f32 %v207, %v2220
    %v2225 = vmul.f32 %v2223, 0.5
    %v2226 = vmul.f32 %v2224, 0.5
    %v2227 = vtanh.pop %v2225
    %v2228 = vtanh.pop %v2226
    %v2229 = vmul.f32 %v2227, 0.5
    %v2230 = vmul.f32 %v2228, 0.5
    %v2231 = vadd.f32 %v2229, 0.5
    %v2232 = vadd.f32 %v2230, 0.5
    %v2233 = vtanh.pop %v2223
    %v2234 = vtanh.pop %v2224
    %v2236 = vrot.slane %v2173, 1
    %v2237 = vrot.slane %v2173, 2
    %2238 = vrot.lane.b32.xlu0 %v2236, 32
    %v2239 = vpop.permute.xlu0 %2238
    %2240 = vrot.lane.b32.xlu0 %v2237, 32
    %v2241 = vpop.permute.xlu0 %2240
    %v2244 = vmul.f32 %v2231, %v2239
    %v2245 = vmul.f32 %v2232, %v2241
    %2248 = vrot.lane.b32.xlu0 %v2233, 64
    %v2249 = vpop.permute.xlu0 %2248
    %2250 = vrot.lane.b32.xlu0 %v2234, 64
    %v2251 = vpop.permute.xlu0 %2250
    %v2254 = vmul.f32 %v2231, %v2249
    %v2255 = vmul.f32 %v2232, %v2251
    %2258 = vrot.lane.b32.xlu0 %v2254, 32
    %v2259 = vpop.permute.xlu0 %2258
    %2260 = vrot.lane.b32.xlu0 %v2255, 32
    %v2261 = vpop.permute.xlu0 %2260
    %v2264 = vadd.f32 %v2244, %v2259
    %v2265 = vadd.f32 %v2245, %v2261
    %v2266 = vtanh.pop %v2264
    %v2267 = vtanh.pop %v2265
    %2270 = vrot.lane.b32.xlu0 %v2266, 64
    %v2271 = vpop.permute.xlu0 %2270
    %2272 = vrot.lane.b32.xlu0 %v2267, 64
    %v2273 = vpop.permute.xlu0 %2272
    %v2276 = vmul.f32 %v2231, %v2271
    %v2277 = vmul.f32 %v2232, %v2273
    %v2280 = vrot.slane %v2277, 7
    %2281 = vrot.lane.b32.xlu0 %v2276, 32
    %v2282 = vpop.permute.xlu0 %2281
    %2283 = vrot.lane.b32.xlu0 %v2280, 32
    %v2284 = vpop.permute.xlu0 %2283
    %2287 = vst.msk [vmem:[#allocation2 - $0x7] sm:$0x80] %vm579, %v2282
    %2288 = vst.msk [vmem:[#allocation2 + $0x1] sm:$0x1] %vm449, %v2284
    %v2291 = vrot.slane %v2265, 7
    %2292 = vrot.lane.b32.xlu0 %v2264, 96
    %v2293 = vpop.permute.xlu0 %2292
    %2294 = vrot.lane.b32.xlu0 %v2291, 96
    %v2295 = vpop.permute.xlu0 %2294
    %2298 = vst.msk [vmem:[#allocation3 - $0x7] sm:$0x80] %vm579, %v2293
    %2299 = vst.msk [vmem:[#allocation3 + $0x1] sm:$0x1] %vm449, %v2295
    %2300 = vrot.lane.b32.xlu0 %v2277, 32
    %v2301 = vpop.permute.xlu0 %2300
    %2303 = vst.msk [vmem:[#allocation15] sm:$0x80] %vm579, %v2282
    %2304 = vst.msk [vmem:[#allocation15 + $0x8] sm:$0x80] %vm579, %v2301
    %v2305 = vld [vmem:[#allocation4] sm:$0x3]
    %v2306 = vld [vmem:[#allocation5] sm:$0x3]
    %v2307 = vpack.c.bf16 %v2305, %v2305
    %v2309 = vsel %vm323, %v2307, 0
    %2311 = vmatprep.subr.bf16.mxu0 0
    %2312 = vmatpush1.bf16.msra.mxu0 %v463
    %2313 = vmatprep.subr.bf16.mxu0 0
    %2314 = vmatpush1.bf16.msra.mxu0 %v464
    %2315 = vmatprep.subr.bf16.mxu0 0
    %2316 = vmatpush1.bf16.msra.mxu0 0
    %2317 = vmatprep.subr.bf16.mxu0 0
    %2318 = vmatpush1.bf16.msra.mxu0 0
    %2319 = vmatprep.subr.bf16.mxu0 0
    %2320 = vmatpush1.bf16.msra.mxu0 0
    %2321 = vmatprep.subr.bf16.mxu0 0
    %2322 = vmatpush1.bf16.msra.mxu0 0
    %2323 = vmatprep.subr.bf16.mxu0 0
    %2324 = vmatpush1.bf16.msra.mxu0 0
    %2325 = vmatprep.subr.bf16.mxu0 0
    %2326 = vmatpush1.bf16.msra.mxu0 0
    %2327 = vmatprep.subr.bf16.mxu0 0
    %2328 = vmatpush1.bf16.msra.mxu0 0
    %2329 = vmatprep.subr.bf16.mxu0 0
    %2330 = vmatpush1.bf16.msra.mxu0 0
    %2331 = vmatprep.subr.bf16.mxu0 0
    %2332 = vmatpush1.bf16.msra.mxu0 0
    %2333 = vmatprep.subr.bf16.mxu0 0
    %2334 = vmatpush1.bf16.msra.mxu0 0
    %2335 = vmatprep.subr.bf16.mxu0 0
    %2336 = vmatpush1.bf16.msra.mxu0 0
    %2337 = vmatprep.subr.bf16.mxu0 0
    %2338 = vmatpush1.bf16.msra.mxu0 0
    %2339 = vmatprep.subr.bf16.mxu0 0
    %2340 = vmatpush1.bf16.msra.mxu0 0
    %2341 = vmatprep.subr.bf16.mxu0 0
    %2342 = vmatpush1.bf16.msra.mxu0 0
    %2343 = vmatprep.mubr.bf16.mxu0 0
    %2344 = vmatmul.mubr.bf16.gmra.mrb[0].mxu0 %v2309
    %v2345 = vpop.f32.mrb[0].mxu0
    %v2346 = vadd.f32 0.0, %v2345
    %v2347 = vpop.f32.mrb[0].mxu0
    %v2348 = vpop.f32.mrb[0].mxu0
    %v2349 = vpop.f32.mrb[0].mxu0
    %2350 = vdwg.mxu0
    %v2352 = vrot.slane %v2346, 1
    %v2355 = vadd.f32 %v294, %v2346
    %v2356 = vadd.f32 %v297, %v2352
    %v2357 = vmul.f32 %v2355, 0.5
    %v2358 = vmul.f32 %v2356, 0.5
    %v2359 = vtanh.pop %v2357
    %v2360 = vtanh.pop %v2358
    %v2361 = vmul.f32 %v2359, 0.5
    %v2362 = vmul.f32 %v2360, 0.5
    %v2363 = vadd.f32 %v2361, 0.5
    %v2364 = vadd.f32 %v2362, 0.5
    %v2365 = vtanh.pop %v2355
    %v2366 = vtanh.pop %v2356
    %v2368 = vrot.slane %v2306, 1
    %2369 = vrot.lane.b32.xlu0 %v2306, 32
    %v2370 = vpop.permute.xlu0 %2369
    %2371 = vrot.lane.b32.xlu0 %v2368, 32
    %v2372 = vpop.permute.xlu0 %2371
    %v2375 = vmul.f32 %v2363, %v2370
    %v2376 = vmul.f32 %v2364, %v2372
    %2379 = vrot.lane.b32.xlu0 %v2365, 64
    %v2380 = vpop.permute.xlu0 %2379
    %2381 = vrot.lane.b32.xlu0 %v2366, 64
    %v2382 = vpop.permute.xlu0 %2381
    %v2385 = vmul.f32 %v2363, %v2380
    %v2386 = vmul.f32 %v2364, %v2382
    %2389 = vrot.lane.b32.xlu0 %v2385, 32
    %v2390 = vpop.permute.xlu0 %2389
    %2391 = vrot.lane.b32.xlu0 %v2386, 32
    %v2392 = vpop.permute.xlu0 %2391
    %v2395 = vadd.f32 %v2375, %v2390
    %v2396 = vadd.f32 %v2376, %v2392
    %v2397 = vtanh.pop %v2395
    %v2398 = vtanh.pop %v2396
    %2401 = vrot.lane.b32.xlu0 %v2397, 64
    %v2402 = vpop.permute.xlu0 %2401
    %2403 = vrot.lane.b32.xlu0 %v2398, 64
    %v2404 = vpop.permute.xlu0 %2403
    %v2407 = vmul.f32 %v2363, %v2402
    %v2408 = vmul.f32 %v2364, %v2404
    %v2411 = vrot.slane %v2408, 7
    %v2412 = vsel %vm428, %v2411, %v2407
    %2413 = vrot.lane.b32.xlu0 %v2412, 32
    %v2414 = vpop.permute.xlu0 %2413
    %2416 = vst.msk [vmem:[#allocation4] sm:$0x3] %vm433, %v2414
    %v2419 = vrot.slane %v2396, 7
    %v2420 = vsel %vm428, %v2419, %v2395
    %2421 = vrot.lane.b32.xlu0 %v2420, 96
    %v2422 = vpop.permute.xlu0 %2421
    %2424 = vst.msk [vmem:[#allocation5] sm:$0x3] %vm433, %v2422
    %2425 = vrot.lane.b32.xlu0 %v2407, 32
    %v2426 = vpop.permute.xlu0 %2425
    %2427 = vrot.lane.b32.xlu0 %v2408, 32
    %v2428 = vpop.permute.xlu0 %2427
    %2431 = vst.msk [vmem:[#allocation16] sm:$0x1] %vm449, %v2426
    %2432 = vst.msk [vmem:[#allocation16 + $0x8] sm:$0x1] %vm449, %v2428
    %v2433 = vld [vmem:[#allocation3] sm:$0x3]
    %2434 = vst.msk [vmem:[#allocation18] sm:$0x3] %vm433, %v2433
    %v2435 = vld [vmem:[#allocation5] sm:$0x3]
    %2436 = vst.msk [vmem:[#allocation19] sm:$0x3] %vm433, %v2435
    // Predicated region
    $region58: #{tpu_custom_call.1} parent=1 // pred_check
      _
    $region59: #{tpu_custom_call.1} parent=1 // pred_check_branch
      %2438 = sbr.rel (0) target = $region61
    $region60: #{tpu_custom_call.1} parent=1 // pred_region
      %s2440 = ssub.s32 256, 256
      %2441 = vsyncadd [#allocation8], %s2440
      %s2442 = sshll.u32 [#allocation15], 4
      %s2443 = int_to_ptr.vmem [resolvable:$true] %s2442
      %2448 = dma.vmem_to_hbm [thread:$0]  %s2443, 256, %s8, [#allocation8], 128, 128, 8
    $region61: #{tpu_custom_call.1} parent=1 // pred_fallthru
      _
    // Predicated region
    $region62: #{tpu_custom_call.1} parent=1 // pred_check
      _
    $region63: #{tpu_custom_call.1} parent=1 // pred_check_branch
      %2450 = sbr.rel (0) target = $region65
    $region64: #{tpu_custom_call.1} parent=1 // pred_region
      %s2451 = ssub.s32 0, 0
      %s2453 = ssub.s32 256, 256
      %2454 = vsyncadd [#allocation17], %s2453
      %s2455 = smul.addr %s2451, 128
      %s2456 = scalar_lea.hbm %s9, %s2455
      %s2457 = sshll.u32 [#allocation16], 4
      %s2458 = int_to_ptr.vmem [resolvable:$true] %s2457
      %2463 = dma.vmem_to_hbm [thread:$0]  %s2458, 256, %s2456, [#allocation17], 128, 128, 8
    $region65: #{tpu_custom_call.1} parent=1 // pred_fallthru
      _
    // Predicated region
    $region66: #{tpu_custom_call.1} parent=1 // pred_check
      _
    $region67: #{tpu_custom_call.1} parent=1 // pred_check_branch
      %2465 = sbr.rel (0) target = $region69
    $region68: #{tpu_custom_call.1} parent=1 // pred_region
      %s2467 = ssub.s32 32, 32
      %2468 = vsyncadd [#allocation17], %s2467
      %s2470 = sshll.u32 [#allocation18], 4
      %s2471 = int_to_ptr.vmem [resolvable:$true] %s2470
      %2473 = dma.vmem_to_hbm [thread:$0]  %s2471, 32, %s10, [#allocation17]
    $region69: #{tpu_custom_call.1} parent=1 // pred_fallthru
      _
    // Predicated region
    $region70: #{tpu_custom_call.1} parent=1 // pred_check
      _
    $region71: #{tpu_custom_call.1} parent=1 // pred_check_branch
      %2475 = sbr.rel (0) target = $region73
    $region72: #{tpu_custom_call.1} parent=1 // pred_region
      %s2477 = ssub.s32 32, 32
      %2478 = vsyncadd [#allocation20], %s2477
      %s2480 = sshll.u32 [#allocation19], 4
      %s2481 = int_to_ptr.vmem [resolvable:$true] %s2480
      %2483 = dma.vmem_to_hbm [thread:$0]  %s2481, 32, %s11, [#allocation20]
    $region73: #{tpu_custom_call.1} parent=1 // pred_fallthru
      _
    // Predicated region
    $region74: #{tpu_custom_call.1} parent=1 // pred_check
      _
    $region75: #{tpu_custom_call.1} parent=1 // pred_check_branch
      %2485 = sbr.rel (0) target = $region77
    $region76: #{tpu_custom_call.1} parent=1 // pred_region
      %2486 = dma.done [#allocation8], 256
    $region77: #{tpu_custom_call.1} parent=1 // pred_fallthru
      _
    // Predicated region
    $region78: #{tpu_custom_call.1} parent=1 // pred_check
      _
    $region79: #{tpu_custom_call.1} parent=1 // pred_check_branch
      %2488 = sbr.rel (0) target = $region81
    $region80: #{tpu_custom_call.1} parent=1 // pred_region
      %2489 = dma.done [#allocation17], 256
    $region81: #{tpu_custom_call.1} parent=1 // pred_fallthru
      _
    // Predicated region
    $region82: #{tpu_custom_call.1} parent=1 // pred_check
      _
    $region83: #{tpu_custom_call.1} parent=1 // pred_check_branch
      %2491 = sbr.rel (0) target = $region85
    $region84: #{tpu_custom_call.1} parent=1 // pred_region
      %2492 = dma.done [#allocation17], 32
    $region85: #{tpu_custom_call.1} parent=1 // pred_fallthru
      _
    // Predicated region
    $region86: #{tpu_custom_call.1} parent=1 // pred_check
      _
    $region87: #{tpu_custom_call.1} parent=1 // pred_check_branch
      %2494 = sbr.rel (0) target = $region89
    $region88: #{tpu_custom_call.1} parent=1 // pred_region
      %2495 = dma.done [#allocation20], 32
    $region89: #{tpu_custom_call.1} parent=1 // pred_fallthru
      _
    %2496 = vsyncpa [#allocation7], 1
    %2497 = vsyncpa [#allocation10], 1
    %2498 = vsyncpa [#allocation13], 1
    %2499 = vsyncpa [#allocation8], 1
    %2500 = vsyncpa [#allocation17], 1
    %2501 = vsyncpa [#allocation20], 1

</llo_original>
